<compile_context>
chip_gen: v7x
topology: tpu7x:2x2x1
jax: 0.10.0
libtpu: 0.0.40
codegen_flags: <defaults>
</compile_context>

<pallas_src>
import math
import jax
import jax.numpy as jnp
from jax import lax
from jax.experimental import pallas as pl
from jax.experimental.pallas import tpu as pltpu

SEQ_LEN = 64
D_MODEL = 64
K_DIM = 16
VOCAB = 8192
NUM_LAYERS = 2
VOCAB_TILE = 2048

# pre_proj is nn.Identity in the reference because d_model == seq_len; the kernels below
# assume that (the q/k/v projections contract the feature axis of x directly).
assert SEQ_LEN == D_MODEL
assert VOCAB % VOCAB_TILE == 0


# ----------------------------- parameter setup (plain JAX glue) -----------------------------

def get_hankel(seq_len: int) -> jnp.ndarray:
    entries = jnp.arange(1, seq_len + 1, dtype=jnp.float32)
    i_plus_j = entries[:, None] + entries[None, :]
    return 2.0 / (i_plus_j ** 3 - i_plus_j)


def get_spectral_filters(seq_len: int, k: int) -> jnp.ndarray:
    # TODO(synk): eigh has no in-kernel Pallas equivalent; computed once at init in plain JAX.
    Z = get_hankel(seq_len)
    sigma, phi = jnp.linalg.eigh(Z)          # ascending eigenvalues, like torch.linalg.eigh
    sigma_k = jnp.clip(sigma[-k:], 1e-9, None)
    phi_k = phi[:, -k:]
    return phi_k * sigma_k ** 0.25


def _init_linear(key, fan_in, fan_out, dtype):
    kw, kb = jax.random.split(key)
    bound = 1.0 / math.sqrt(fan_in)
    w = jax.random.uniform(kw, (fan_in, fan_out), jnp.float32, -bound, bound)
    b = jax.random.uniform(kb, (1, fan_out), jnp.float32, -bound, bound)
    return w.astype(dtype), b.astype(dtype)


def init_params(key):
    keys = jax.random.split(key, 2 + 2 * NUM_LAYERS)
    emb = jax.random.normal(keys[0], (VOCAB, D_MODEL), jnp.float32)

    phi_bf16 = get_spectral_filters(SEQ_LEN, K_DIM).astype(jnp.bfloat16)
    L_tril = jnp.tril(get_hankel(SEQ_LEN)).astype(jnp.bfloat16)   # torch param dtype

    layer_params = []
    for i in range(NUM_LAYERS):
        wq, bq = _init_linear(keys[1 + 2 * i], SEQ_LEN, K_DIM, jnp.bfloat16)     # q_proj
        wo, bo = _init_linear(keys[2 + 2 * i], K_DIM, D_MODEL, jnp.bfloat16)     # o_proj
        gamma_rms = jnp.ones((1, D_MODEL), jnp.float32)                          # RMSNorm weight
        # K and V LearnableSpectralFilters both initialize to the same spectral filters.
        layer_params.append((wq, bq, phi_bf16, phi_bf16, L_tril, wo, bo, gamma_rms))

    w_out, b_out = _init_linear(keys[-1], D_MODEL, VOCAB, jnp.float32)           # out_proj
    gamma_ln = jnp.ones((1, D_MODEL), jnp.float32)
    beta_ln = jnp.zeros((1, D_MODEL), jnp.float32)
    head_params = (gamma_ln, beta_ln, w_out, b_out)
    return emb, layer_params, head_params


def prepare_params(layer_params, head_params):
    """Stack per-layer weights on a leading axis and pre-convert dtypes for the kernels."""
    wqkv, bqkv, Ls, wos, bos, gs = [], [], [], [], [], []
    zeros_kv = jnp.zeros((1, 2 * K_DIM), jnp.float32)
    for (wq, bq, kf, vf, L, wo, bo, g) in layer_params:
        wqkv.append(jnp.concatenate([wq, kf, vf], axis=-1))                      # (D, 3K) bf16
        bqkv.append(jnp.concatenate([bq.astype(jnp.float32), zeros_kv], -1))     # (1, 3K) f32
        Ls.append(L.astype(jnp.float32))                                         # (T, T)  f32
        wos.append(wo.astype(jnp.float32))                                       # (K, D)  f32
        bos.append(bo.astype(jnp.float32))                                       # (1, D)  f32
        gs.append(g)                                                             # (1, D)  f32
    stacked = (jnp.stack(wqkv), jnp.stack(bqkv), jnp.stack(Ls),
               jnp.stack(wos), jnp.stack(bos), jnp.stack(gs))
    gamma_ln, beta_ln, w_out, b_out = head_params
    return stacked, (gamma_ln, beta_ln), w_out.astype(jnp.bfloat16), b_out


# -------------------- kernel 1: fused 2x SpectralAttention + final LayerNorm --------------------

def fused_layers_kernel(x_ref, wqkv_ref, bqkv_ref, l_ref, wo_ref, bo_ref, grms_ref,
                        gln_ref, bln_ref, o_ref):
    eps_rms = jnp.float32(jnp.finfo(jnp.bfloat16).eps)   # torch RMSNorm eps for bf16 input
    cur = x_ref[0]                                        # (T, D) bf16 (pre_proj = Identity)

    for l in range(NUM_LAYERS):
        # single MXU push for q/k/v: (T, D) @ (D, 3K) -> (T, 3K) f32
        qkv = (jnp.dot(cur, wqkv_ref[l], preferred_element_type=jnp.float32)
               + bqkv_ref[l])
        q = qkv[:, :K_DIM]
        k_ = qkv[:, K_DIM:2 * K_DIM]
        v_ = qkv[:, 2 * K_DIM:]

        # Reference einsum chain collapses to  Y = (L * (Q @ V^T)) @ K_
        a = lax.dot_general(q, v_, (((1,), (1,)), ((), ())),
                            preferred_element_type=jnp.float32)     # (T, T)
        s = l_ref[l] * a                                            # causal Hankel weighting
        y = jnp.dot(s, k_, preferred_element_type=jnp.float32)      # (T, K)

        o = (jnp.dot(y, wo_ref[l], preferred_element_type=jnp.float32)
             + bo_ref[l])                                           # (T, D) f32

        # RMSNorm (weight ones at init)
        ms = jnp.mean(o * o, axis=-1, keepdims=True)
        on = o * lax.rsqrt(ms + eps_rms) * grms_ref[l]
        cur = on.astype(jnp.bfloat16)                               # layer output dtype = bf16

    # Final LayerNorm (hoisted here so the head kernel never recomputes it per vocab tile).
    xf = cur.astype(jnp.float32)
    mu = jnp.mean(xf, axis=-1, keepdims=True)
    var = jnp.mean((xf - mu) * (xf - mu), axis=-1, keepdims=True)
    xn = (xf - mu) * lax.rsqrt(var + 1e-5) * gln_ref[...] + bln_ref[...]
    o_ref[...] = xn                                                 # (T, D) f32


def fused_spectral_layers(x, stacked, head_ln):
    B, T, D = x.shape
    wqkv, bqkv, Ls, wos, bos, gs = stacked
    gln, bln = head_ln
    const3 = lambda b: (0, 0, 0)
    const2 = lambda b: (0, 0)
    return pl.pallas_call(
        fused_layers_kernel,
        out_shape=jax.ShapeDtypeStruct((B * T, D), jnp.float32),
        grid_spec=pltpu.PrefetchScalarGridSpec(
            num_scalar_prefetch=0,
            grid=(B,),
            in_specs=[
                pl.BlockSpec((1, T, D), lambda b: (b, 0, 0)),               # x
                pl.BlockSpec((NUM_LAYERS, D, 3 * K_DIM), const3),           # [Wq | Kf | Vf]
                pl.BlockSpec((NUM_LAYERS, 1, 3 * K_DIM), const3),           # [bq | 0 | 0]
                pl.BlockSpec((NUM_LAYERS, T, T), const3),                   # L (tril Hankel)
                pl.BlockSpec((NUM_LAYERS, K_DIM, D), const3),               # Wo
                pl.BlockSpec((NUM_LAYERS, 1, D), const3),                   # bo
                pl.BlockSpec((NUM_LAYERS, 1, D), const3),                   # RMSNorm weight
                pl.BlockSpec((1, D), const2),                               # LN gamma
                pl.BlockSpec((1, D), const2),                               # LN beta
            ],
            out_specs=pl.BlockSpec((T, D), lambda b: (b, 0)),               # (B*T, D)
        ),
        compiler_params=pltpu.CompilerParams(
            dimension_semantics=("parallel",)),
    )(x, wqkv, bqkv, Ls, wos, bos, gs, gln, bln)


# ----------------------------- kernel 2: output projection to vocab -----------------------------

def head_kernel(x_ref, w_ref, b_ref, o_ref):
    x = x_ref[...].astype(jnp.bfloat16)                              # (B*T, D)
    o_ref[...] = (jnp.dot(x, w_ref[...], preferred_element_type=jnp.float32)
                  + b_ref[...])


def spectron_head(xn, w_out_bf16, b_out):
    N, D = xn.shape                                                  # N = B*T
    V = w_out_bf16.shape[1]
    nv = V // VOCAB_TILE
    bytes_accessed = (N * D * 4                # xn (fetched once, budget conservatively)
                      + D * V * 2              # bf16 W_out stream
                      + V * 4                  # bias
                      + N * V * 4)             # fp32 logits writeback
    ce = pl.CostEstimate(flops=2 * N * D * V, transcendentals=0,
                         bytes_accessed=bytes_accessed)
    return pl.pallas_call(
        head_kernel,
        out_shape=jax.ShapeDtypeStruct((N, V), jnp.float32),
        grid_spec=pltpu.PrefetchScalarGridSpec(
            num_scalar_prefetch=0,
            grid=(nv,),
            in_specs=[
                pl.BlockSpec((N, D), lambda v: (0, 0)),              # LayerNorm'd activations
                pl.BlockSpec((D, VOCAB_TILE), lambda v: (0, v)),     # W_out tile (bf16)
                pl.BlockSpec((1, VOCAB_TILE), lambda v: (0, v)),     # b_out tile (f32)
            ],
            out_specs=pl.BlockSpec((N, VOCAB_TILE), lambda v: (0, v)),
        ),
        compiler_params=pltpu.CompilerParams(
            dimension_semantics=("parallel",)),
        cost_estimate=ce,
    )(xn, w_out_bf16, b_out)


# ----------------------------- full model forward -----------------------------

def spectron_forward(tokens, emb, stacked, head_ln, w_out_bf16, b_out):
    # dropout = 0.0 -> identity; embedding gather is glue in plain JAX
    B, T = tokens.shape
    x = emb[tokens].astype(jnp.bfloat16)                  # (B, T, D) bf16, like the torch layers
    xn = fused_spectral_layers(x, stacked, head_ln)       # (B*T, D) f32, LayerNorm already applied
    logits = spectron_head(xn, w_out_bf16, b_out)         # (B*T, vocab) f32
    return logits.reshape(B, T, VOCAB)


if __name__ == "__main__":
    key = jax.random.PRNGKey(0)
    tok_key, param_key = jax.random.split(key)

    B = 2
    tokens = jax.random.randint(tok_key, (B, SEQ_LEN), 0, VOCAB, dtype=jnp.int32)

    emb, layer_params, head_params = init_params(param_key)
    stacked, head_ln, w_out_bf16, b_out = prepare_params(layer_params, head_params)

    fwd = jax.jit(lambda t: spectron_forward(t, emb, stacked, head_ln, w_out_bf16, b_out))
    logits = fwd(tokens)
    jax.block_until_ready(logits)

    assert logits.shape == (B, SEQ_LEN, VOCAB), logits.shape
    assert logits.dtype == jnp.float32
    assert bool(jnp.all(jnp.isfinite(logits)))
    print("KERNEL_OK")
</pallas_src>

<mosaic_0001>
module attributes {stable_mosaic.version = 11 : i64} {
  func.func @fused_layers_kernel(%arg0: i32, %arg1: memref<1x64x64xbf16, #tpu.memory_space<vmem>>, %arg2: memref<2x64x48xbf16, #tpu.memory_space<vmem>>, %arg3: memref<2x1x48xf32, #tpu.memory_space<vmem>>, %arg4: memref<2x64x64xf32, #tpu.memory_space<vmem>>, %arg5: memref<2x16x64xf32, #tpu.memory_space<vmem>>, %arg6: memref<2x1x64xf32, #tpu.memory_space<vmem>>, %arg7: memref<2x1x64xf32, #tpu.memory_space<vmem>>, %arg8: memref<1x64xf32, #tpu.memory_space<vmem>>, %arg9: memref<1x64xf32, #tpu.memory_space<vmem>>, %arg10: memref<64x64xf32, #tpu.memory_space<vmem>>) attributes {dimension_semantics = [#tpu.dimension_semantics<parallel>], iteration_bounds = array<i64: 2>, scalar_prefetch = 0 : i64, scratch_operands = 0 : i64, tpu.core_type = #tpu.core_type<tc>, window_params = [{transform_indices = @transform_0, window_bounds = array<i64: 1, 64, 64>}, {pipeline_mode = #tpu.pipeline_mode<synchronous>, transform_indices = @transform_1, window_bounds = array<i64: 2, 64, 48>}, {pipeline_mode = #tpu.pipeline_mode<synchronous>, transform_indices = @transform_2, window_bounds = array<i64: 2, 1, 48>}, {pipeline_mode = #tpu.pipeline_mode<synchronous>, transform_indices = @transform_3, window_bounds = array<i64: 2, 64, 64>}, {pipeline_mode = #tpu.pipeline_mode<synchronous>, transform_indices = @transform_4, window_bounds = array<i64: 2, 16, 64>}, {pipeline_mode = #tpu.pipeline_mode<synchronous>, transform_indices = @transform_5, window_bounds = array<i64: 2, 1, 64>}, {pipeline_mode = #tpu.pipeline_mode<synchronous>, transform_indices = @transform_6, window_bounds = array<i64: 2, 1, 64>}, {pipeline_mode = #tpu.pipeline_mode<synchronous>, transform_indices = @transform_7, window_bounds = array<i64: 1, 64>}, {pipeline_mode = #tpu.pipeline_mode<synchronous>, transform_indices = @transform_8, window_bounds = array<i64: 1, 64>}, {transform_indices = @transform_9, window_bounds = array<i64: 64, 64>}]} {
    %c0 = arith.constant 0 : index
    %c0_0 = arith.constant 0 : index
    %c0_1 = arith.constant 0 : index
    %0 = vector.load %arg1[%c0, %c0_0, %c0_1] : memref<1x64x64xbf16, #tpu.memory_space<vmem>>, vector<1x64x64xbf16>
    %1 = vector.shape_cast %0 : vector<1x64x64xbf16> to vector<64x64xbf16>
    %c0_2 = arith.constant 0 : index
    %c0_3 = arith.constant 0 : index
    %c0_4 = arith.constant 0 : index
    %2 = vector.load %arg2[%c0_2, %c0_3, %c0_4] : memref<2x64x48xbf16, #tpu.memory_space<vmem>>, vector<1x64x48xbf16>
    %3 = vector.shape_cast %2 : vector<1x64x48xbf16> to vector<64x48xbf16>
    %cst = arith.constant dense<0.000000e+00> : vector<64x48xf32>
    %4 = tpu.matmul %1, %3, %cst {dimension_numbers = #tpu.dot_dimension_numbers<[1], [0], [0], [1], [0, 0, 1, 1], [], []>} : vector<64x64xbf16>, vector<64x48xbf16>, vector<64x48xf32> -> vector<64x48xf32>
    %c0_5 = arith.constant 0 : index
    %c0_6 = arith.constant 0 : index
    %c0_7 = arith.constant 0 : index
    %5 = vector.load %arg3[%c0_5, %c0_6, %c0_7] : memref<2x1x48xf32, #tpu.memory_space<vmem>>, vector<1x1x48xf32>
    %6 = vector.shape_cast %5 : vector<1x1x48xf32> to vector<1x48xf32>
    %7 = vector.broadcast %6 : vector<1x48xf32> to vector<64x48xf32>
    %8 = arith.addf %4, %7 : vector<64x48xf32>
    %9 = vector.extract_strided_slice %8 {offsets = [0, 0], sizes = [64, 16], strides = [1, 1]} : vector<64x48xf32> to vector<64x16xf32>
    %10 = vector.extract_strided_slice %8 {offsets = [0, 16], sizes = [64, 16], strides = [1, 1]} : vector<64x48xf32> to vector<64x16xf32>
    %11 = vector.extract_strided_slice %8 {offsets = [0, 32], sizes = [64, 16], strides = [1, 1]} : vector<64x48xf32> to vector<64x16xf32>
    %cst_8 = arith.constant dense<0.000000e+00> : vector<64x64xf32>
    %12 = tpu.matmul %9, %11, %cst_8 {dimension_numbers = #tpu.dot_dimension_numbers<[1], [1], [0], [0], [0, 0, 1, 0], [], []>} : vector<64x16xf32>, vector<64x16xf32>, vector<64x64xf32> -> vector<64x64xf32>
    %c0_9 = arith.constant 0 : index
    %c0_10 = arith.constant 0 : index
    %c0_11 = arith.constant 0 : index
    %13 = vector.load %arg4[%c0_9, %c0_10, %c0_11] : memref<2x64x64xf32, #tpu.memory_space<vmem>>, vector<1x64x64xf32>
    %14 = vector.shape_cast %13 : vector<1x64x64xf32> to vector<64x64xf32>
    %15 = arith.mulf %14, %12 : vector<64x64xf32>
    %cst_12 = arith.constant dense<0.000000e+00> : vector<64x16xf32>
    %16 = tpu.matmul %15, %10, %cst_12 {dimension_numbers = #tpu.dot_dimension_numbers<[1], [0], [0], [1], [0, 0, 1, 1], [], []>} : vector<64x64xf32>, vector<64x16xf32>, vector<64x16xf32> -> vector<64x16xf32>
    %c0_13 = arith.constant 0 : index
    %c0_14 = arith.constant 0 : index
    %c0_15 = arith.constant 0 : index
    %17 = vector.load %arg5[%c0_13, %c0_14, %c0_15] : memref<2x16x64xf32, #tpu.memory_space<vmem>>, vector<1x16x64xf32>
    %18 = vector.shape_cast %17 : vector<1x16x64xf32> to vector<16x64xf32>
    %cst_16 = arith.constant dense<0.000000e+00> : vector<64x64xf32>
    %19 = tpu.matmul %16, %18, %cst_16 {dimension_numbers = #tpu.dot_dimension_numbers<[1], [0], [0], [1], [0, 0, 1, 1], [], []>} : vector<64x16xf32>, vector<16x64xf32>, vector<64x64xf32> -> vector<64x64xf32>
    %c0_17 = arith.constant 0 : index
    %c0_18 = arith.constant 0 : index
    %c0_19 = arith.constant 0 : index
    %20 = vector.load %arg6[%c0_17, %c0_18, %c0_19] : memref<2x1x64xf32, #tpu.memory_space<vmem>>, vector<1x1x64xf32>
    %21 = vector.shape_cast %20 : vector<1x1x64xf32> to vector<1x64xf32>
    %22 = vector.broadcast %21 : vector<1x64xf32> to vector<64x64xf32>
    %23 = arith.addf %19, %22 : vector<64x64xf32>
    %24 = arith.mulf %23, %23 : vector<64x64xf32>
    %cst_20 = arith.constant dense<0.000000e+00> : vector<64xf32>
    %25 = vector.multi_reduction <add>, %24, %cst_20 [1] : vector<64x64xf32> to vector<64xf32>
    %26 = vector.shape_cast %25 : vector<64xf32> to vector<64x1xf32>
    %cst_21 = arith.constant 6.400000e+01 : f32
    %27 = vector.broadcast %cst_21 : f32 to vector<64x1xf32>
    %28 = arith.divf %26, %27 : vector<64x1xf32>
    %cst_22 = arith.constant 7.812500e-03 : f32
    %29 = vector.broadcast %cst_22 : f32 to vector<64x1xf32>
    %30 = arith.addf %28, %29 : vector<64x1xf32>
    %31 = math.rsqrt %30 : vector<64x1xf32>
    %32 = vector.broadcast %31 : vector<64x1xf32> to vector<64x64xf32>
    %33 = arith.mulf %23, %32 : vector<64x64xf32>
    %c0_23 = arith.constant 0 : index
    %c0_24 = arith.constant 0 : index
    %c0_25 = arith.constant 0 : index
    %34 = vector.load %arg7[%c0_23, %c0_24, %c0_25] : memref<2x1x64xf32, #tpu.memory_space<vmem>>, vector<1x1x64xf32>
    %35 = vector.shape_cast %34 : vector<1x1x64xf32> to vector<1x64xf32>
    %36 = vector.broadcast %35 : vector<1x64xf32> to vector<64x64xf32>
    %37 = arith.mulf %33, %36 : vector<64x64xf32>
    %38 = arith.truncf %37 : vector<64x64xf32> to vector<64x64xbf16>
    %c1 = arith.constant 1 : index
    %c0_26 = arith.constant 0 : index
    %c0_27 = arith.constant 0 : index
    %39 = vector.load %arg2[%c1, %c0_26, %c0_27] : memref<2x64x48xbf16, #tpu.memory_space<vmem>>, vector<1x64x48xbf16>
    %40 = vector.shape_cast %39 : vector<1x64x48xbf16> to vector<64x48xbf16>
    %cst_28 = arith.constant dense<0.000000e+00> : vector<64x48xf32>
    %41 = tpu.matmul %38, %40, %cst_28 {dimension_numbers = #tpu.dot_dimension_numbers<[1], [0], [0], [1], [0, 0, 1, 1], [], []>} : vector<64x64xbf16>, vector<64x48xbf16>, vector<64x48xf32> -> vector<64x48xf32>
    %c1_29 = arith.constant 1 : index
    %c0_30 = arith.constant 0 : index
    %c0_31 = arith.constant 0 : index
    %42 = vector.load %arg3[%c1_29, %c0_30, %c0_31] : memref<2x1x48xf32, #tpu.memory_space<vmem>>, vector<1x1x48xf32>
    %43 = vector.shape_cast %42 : vector<1x1x48xf32> to vector<1x48xf32>
    %44 = vector.broadcast %43 : vector<1x48xf32> to vector<64x48xf32>
    %45 = arith.addf %41, %44 : vector<64x48xf32>
    %46 = vector.extract_strided_slice %45 {offsets = [0, 0], sizes = [64, 16], strides = [1, 1]} : vector<64x48xf32> to vector<64x16xf32>
    %47 = vector.extract_strided_slice %45 {offsets = [0, 16], sizes = [64, 16], strides = [1, 1]} : vector<64x48xf32> to vector<64x16xf32>
    %48 = vector.extract_strided_slice %45 {offsets = [0, 32], sizes = [64, 16], strides = [1, 1]} : vector<64x48xf32> to vector<64x16xf32>
    %cst_32 = arith.constant dense<0.000000e+00> : vector<64x64xf32>
    %49 = tpu.matmul %46, %48, %cst_32 {dimension_numbers = #tpu.dot_dimension_numbers<[1], [1], [0], [0], [0, 0, 1, 0], [], []>} : vector<64x16xf32>, vector<64x16xf32>, vector<64x64xf32> -> vector<64x64xf32>
    %c1_33 = arith.constant 1 : index
    %c0_34 = arith.constant 0 : index
    %c0_35 = arith.constant 0 : index
    %50 = vector.load %arg4[%c1_33, %c0_34, %c0_35] : memref<2x64x64xf32, #tpu.memory_space<vmem>>, vector<1x64x64xf32>
    %51 = vector.shape_cast %50 : vector<1x64x64xf32> to vector<64x64xf32>
    %52 = arith.mulf %51, %49 : vector<64x64xf32>
    %cst_36 = arith.constant dense<0.000000e+00> : vector<64x16xf32>
    %53 = tpu.matmul %52, %47, %cst_36 {dimension_numbers = #tpu.dot_dimension_numbers<[1], [0], [0], [1], [0, 0, 1, 1], [], []>} : vector<64x64xf32>, vector<64x16xf32>, vector<64x16xf32> -> vector<64x16xf32>
    %c1_37 = arith.constant 1 : index
    %c0_38 = arith.constant 0 : index
    %c0_39 = arith.constant 0 : index
    %54 = vector.load %arg5[%c1_37, %c0_38, %c0_39] : memref<2x16x64xf32, #tpu.memory_space<vmem>>, vector<1x16x64xf32>
    %55 = vector.shape_cast %54 : vector<1x16x64xf32> to vector<16x64xf32>
    %cst_40 = arith.constant dense<0.000000e+00> : vector<64x64xf32>
    %56 = tpu.matmul %53, %55, %cst_40 {dimension_numbers = #tpu.dot_dimension_numbers<[1], [0], [0], [1], [0, 0, 1, 1], [], []>} : vector<64x16xf32>, vector<16x64xf32>, vector<64x64xf32> -> vector<64x64xf32>
    %c1_41 = arith.constant 1 : index
    %c0_42 = arith.constant 0 : index
    %c0_43 = arith.constant 0 : index
    %57 = vector.load %arg6[%c1_41, %c0_42, %c0_43] : memref<2x1x64xf32, #tpu.memory_space<vmem>>, vector<1x1x64xf32>
    %58 = vector.shape_cast %57 : vector<1x1x64xf32> to vector<1x64xf32>
    %59 = vector.broadcast %58 : vector<1x64xf32> to vector<64x64xf32>
    %60 = arith.addf %56, %59 : vector<64x64xf32>
    %61 = arith.mulf %60, %60 : vector<64x64xf32>
    %cst_44 = arith.constant dense<0.000000e+00> : vector<64xf32>
    %62 = vector.multi_reduction <add>, %61, %cst_44 [1] : vector<64x64xf32> to vector<64xf32>
    %63 = vector.shape_cast %62 : vector<64xf32> to vector<64x1xf32>
    %cst_45 = arith.constant 6.400000e+01 : f32
    %64 = vector.broadcast %cst_45 : f32 to vector<64x1xf32>
    %65 = arith.divf %63, %64 : vector<64x1xf32>
    %cst_46 = arith.constant 7.812500e-03 : f32
    %66 = vector.broadcast %cst_46 : f32 to vector<64x1xf32>
    %67 = arith.addf %65, %66 : vector<64x1xf32>
    %68 = math.rsqrt %67 : vector<64x1xf32>
    %69 = vector.broadcast %68 : vector<64x1xf32> to vector<64x64xf32>
    %70 = arith.mulf %60, %69 : vector<64x64xf32>
    %c1_47 = arith.constant 1 : index
    %c0_48 = arith.constant 0 : index
    %c0_49 = arith.constant 0 : index
    %71 = vector.load %arg7[%c1_47, %c0_48, %c0_49] : memref<2x1x64xf32, #tpu.memory_space<vmem>>, vector<1x1x64xf32>
    %72 = vector.shape_cast %71 : vector<1x1x64xf32> to vector<1x64xf32>
    %73 = vector.broadcast %72 : vector<1x64xf32> to vector<64x64xf32>
    %74 = arith.mulf %70, %73 : vector<64x64xf32>
    %75 = arith.truncf %74 : vector<64x64xf32> to vector<64x64xbf16>
    %76 = arith.extf %75 : vector<64x64xbf16> to vector<64x64xf32>
    %cst_50 = arith.constant dense<0.000000e+00> : vector<64xf32>
    %77 = vector.multi_reduction <add>, %76, %cst_50 [1] : vector<64x64xf32> to vector<64xf32>
    %78 = vector.shape_cast %77 : vector<64xf32> to vector<64x1xf32>
    %cst_51 = arith.constant 6.400000e+01 : f32
    %79 = vector.broadcast %cst_51 : f32 to vector<64x1xf32>
    %80 = arith.divf %78, %79 : vector<64x1xf32>
    %81 = vector.broadcast %80 : vector<64x1xf32> to vector<64x64xf32>
    %82 = arith.subf %76, %81 : vector<64x64xf32>
    %83 = vector.broadcast %80 : vector<64x1xf32> to vector<64x64xf32>
    %84 = arith.subf %76, %83 : vector<64x64xf32>
    %85 = arith.mulf %82, %84 : vector<64x64xf32>
    %cst_52 = arith.constant dense<0.000000e+00> : vector<64xf32>
    %86 = vector.multi_reduction <add>, %85, %cst_52 [1] : vector<64x64xf32> to vector<64xf32>
    %87 = vector.shape_cast %86 : vector<64xf32> to vector<64x1xf32>
    %cst_53 = arith.constant 6.400000e+01 : f32
    %88 = vector.broadcast %cst_53 : f32 to vector<64x1xf32>
    %89 = arith.divf %87, %88 : vector<64x1xf32>
    %90 = vector.broadcast %80 : vector<64x1xf32> to vector<64x64xf32>
    %91 = arith.subf %76, %90 : vector<64x64xf32>
    %cst_54 = arith.constant 9.99999974E-6 : f32
    %92 = vector.broadcast %cst_54 : f32 to vector<64x1xf32>
    %93 = arith.addf %89, %92 : vector<64x1xf32>
    %94 = math.rsqrt %93 : vector<64x1xf32>
    %95 = vector.broadcast %94 : vector<64x1xf32> to vector<64x64xf32>
    %96 = arith.mulf %91, %95 : vector<64x64xf32>
    %c0_55 = arith.constant 0 : index
    %c0_56 = arith.constant 0 : index
    %97 = vector.load %arg8[%c0_55, %c0_56] : memref<1x64xf32, #tpu.memory_space<vmem>>, vector<1x64xf32>
    %98 = vector.broadcast %97 : vector<1x64xf32> to vector<64x64xf32>
    %99 = arith.mulf %96, %98 : vector<64x64xf32>
    %c0_57 = arith.constant 0 : index
    %c0_58 = arith.constant 0 : index
    %100 = vector.load %arg9[%c0_57, %c0_58] : memref<1x64xf32, #tpu.memory_space<vmem>>, vector<1x64xf32>
    %101 = vector.broadcast %100 : vector<1x64xf32> to vector<64x64xf32>
    %102 = arith.addf %99, %101 : vector<64x64xf32>
    %c0_59 = arith.constant 0 : index
    %c0_60 = arith.constant 0 : index
    %103 = vector.load %arg10[%c0_59, %c0_60] : memref<64x64xf32, #tpu.memory_space<vmem>>, vector<64x64xf32>
    tpu.vector_store %arg10[%c0_59, %c0_60], %102 {strides = array<i32>} : memref<64x64xf32, #tpu.memory_space<vmem>>, vector<64x64xf32>,
    return
  }
  func.func @transform_0(%arg0: i32) -> (i32, i32, i32) {
    %c0_i32 = arith.constant 0 : i32
    %c0_i32_0 = arith.constant 0 : i32
    %c0_i32_1 = arith.constant 0 : i32
    return %arg0, %c0_i32, %c0_i32_0 : i32, i32, i32
  }
  func.func @transform_1(%arg0: i32) -> (i32, i32, i32) {
    %c0_i32 = arith.constant 0 : i32
    %c0_i32_0 = arith.constant 0 : i32
    %c0_i32_1 = arith.constant 0 : i32
    %c0_i32_2 = arith.constant 0 : i32
    return %c0_i32, %c0_i32_0, %c0_i32_1 : i32, i32, i32
  }
  func.func @transform_2(%arg0: i32) -> (i32, i32, i32) {
    %c0_i32 = arith.constant 0 : i32
    %c0_i32_0 = arith.constant 0 : i32
    %c0_i32_1 = arith.constant 0 : i32
    %c0_i32_2 = arith.constant 0 : i32
    return %c0_i32, %c0_i32_0, %c0_i32_1 : i32, i32, i32
  }
  func.func @transform_3(%arg0: i32) -> (i32, i32, i32) {
    %c0_i32 = arith.constant 0 : i32
    %c0_i32_0 = arith.constant 0 : i32
    %c0_i32_1 = arith.constant 0 : i32
    %c0_i32_2 = arith.constant 0 : i32
    return %c0_i32, %c0_i32_0, %c0_i32_1 : i32, i32, i32
  }
  func.func @transform_4(%arg0: i32) -> (i32, i32, i32) {
    %c0_i32 = arith.constant 0 : i32
    %c0_i32_0 = arith.constant 0 : i32
    %c0_i32_1 = arith.constant 0 : i32
    %c0_i32_2 = arith.constant 0 : i32
    return %c0_i32, %c0_i32_0, %c0_i32_1 : i32, i32, i32
  }
  func.func @transform_5(%arg0: i32) -> (i32, i32, i32) {
    %c0_i32 = arith.constant 0 : i32
    %c0_i32_0 = arith.constant 0 : i32
    %c0_i32_1 = arith.constant 0 : i32
    %c0_i32_2 = arith.constant 0 : i32
    return %c0_i32, %c0_i32_0, %c0_i32_1 : i32, i32, i32
  }
  func.func @transform_6(%arg0: i32) -> (i32, i32, i32) {
    %c0_i32 = arith.constant 0 : i32
    %c0_i32_0 = arith.constant 0 : i32
    %c0_i32_1 = arith.constant 0 : i32
    %c0_i32_2 = arith.constant 0 : i32
    return %c0_i32, %c0_i32_0, %c0_i32_1 : i32, i32, i32
  }
  func.func @transform_7(%arg0: i32) -> (i32, i32) {
    %c0_i32 = arith.constant 0 : i32
    %c0_i32_0 = arith.constant 0 : i32
    %c0_i32_1 = arith.constant 0 : i32
    return %c0_i32, %c0_i32_0 : i32, i32
  }
  func.func @transform_8(%arg0: i32) -> (i32, i32) {
    %c0_i32 = arith.constant 0 : i32
    %c0_i32_0 = arith.constant 0 : i32
    %c0_i32_1 = arith.constant 0 : i32
    return %c0_i32, %c0_i32_0 : i32, i32
  }
  func.func @transform_9(%arg0: i32) -> (i32, i32) {
    %c0_i32 = arith.constant 0 : i32
    %c0_i32_0 = arith.constant 0 : i32
    return %arg0, %c0_i32 : i32, i32
  }
}

module attributes {stable_mosaic.version = 11 : i64} {
  func.func @head_kernel(%arg0: i32, %arg1: memref<128x64xf32, #tpu.memory_space<vmem>>, %arg2: memref<64x2048xbf16, #tpu.memory_space<vmem>>, %arg3: memref<1x2048xf32, #tpu.memory_space<vmem>>, %arg4: memref<128x2048xf32, #tpu.memory_space<vmem>>) attributes {dimension_semantics = [#tpu.dimension_semantics<parallel>], iteration_bounds = array<i64: 4>, scalar_prefetch = 0 : i64, scratch_operands = 0 : i64, tpu.core_type = #tpu.core_type<tc>, window_params = [{pipeline_mode = #tpu.pipeline_mode<synchronous>, transform_indices = @transform_0, window_bounds = array<i64: 128, 64>}, {transform_indices = @transform_1, window_bounds = array<i64: 64, 2048>}, {transform_indices = @transform_2, window_bounds = array<i64: 1, 2048>}, {transform_indices = @transform_3, window_bounds = array<i64: 128, 2048>}]} {
    %c0 = arith.constant 0 : index
    %c0_0 = arith.constant 0 : index
    %0 = vector.load %arg1[%c0, %c0_0] : memref<128x64xf32, #tpu.memory_space<vmem>>, vector<128x64xf32>
    %1 = arith.truncf %0 : vector<128x64xf32> to vector<128x64xbf16>
    %c0_1 = arith.constant 0 : index
    %c0_2 = arith.constant 0 : index
    %2 = vector.load %arg2[%c0_1, %c0_2] : memref<64x2048xbf16, #tpu.memory_space<vmem>>, vector<64x2048xbf16>
    %cst = arith.constant dense<0.000000e+00> : vector<128x2048xf32>
    %3 = tpu.matmul %1, %2, %cst {dimension_numbers = #tpu.dot_dimension_numbers<[1], [0], [0], [1], [0, 0, 1, 1], [], []>} : vector<128x64xbf16>, vector<64x2048xbf16>, vector<128x2048xf32> -> vector<128x2048xf32>
    %c0_3 = arith.constant 0 : index
    %c0_4 = arith.constant 0 : index
    %4 = vector.load %arg3[%c0_3, %c0_4] : memref<1x2048xf32, #tpu.memory_space<vmem>>, vector<1x2048xf32>
    %5 = vector.broadcast %4 : vector<1x2048xf32> to vector<128x2048xf32>
    %6 = arith.addf %3, %5 : vector<128x2048xf32>
    %c0_5 = arith.constant 0 : index
    %c0_6 = arith.constant 0 : index
    %7 = vector.load %arg4[%c0_5, %c0_6] : memref<128x2048xf32, #tpu.memory_space<vmem>>, vector<128x2048xf32>
    tpu.vector_store %arg4[%c0_5, %c0_6], %6 {strides = array<i32>} : memref<128x2048xf32, #tpu.memory_space<vmem>>, vector<128x2048xf32>,
    return
  }
  func.func @transform_0(%arg0: i32) -> (i32, i32) {
    %c0_i32 = arith.constant 0 : i32
    %c0_i32_0 = arith.constant 0 : i32
    %c0_i32_1 = arith.constant 0 : i32
    return %c0_i32, %c0_i32_0 : i32, i32
  }
  func.func @transform_1(%arg0: i32) -> (i32, i32) {
    %c0_i32 = arith.constant 0 : i32
    %c0_i32_0 = arith.constant 0 : i32
    return %c0_i32, %arg0 : i32, i32
  }
  func.func @transform_2(%arg0: i32) -> (i32, i32) {
    %c0_i32 = arith.constant 0 : i32
    %c0_i32_0 = arith.constant 0 : i32
    return %c0_i32, %arg0 : i32, i32
  }
  func.func @transform_3(%arg0: i32) -> (i32, i32) {
    %c0_i32 = arith.constant 0 : i32
    %c0_i32_0 = arith.constant 0 : i32
    return %c0_i32, %arg0 : i32, i32
  }
}

</mosaic_0001>

<llo_original>
// kernel: _lambda_.2
$region0: #{_lambda_.2}
  #allocation0 [shape = 'u32[]', space=smem, size = 0x4, offset = 0x4, fixed_abs, tag = 'smem constant byte address 0x4 - core index']
  #allocation1 [shape = 'u32[144,128]{1,0:T(1,128)}', space=vmem, size = 0x12000, scoped, tag = 'internal scratch']
  %s0 = inlined_call_operand.vmem [shape: bf16[2,64,64], index: 0, kind: input, shape index: {}]
  %s1 = inlined_call_operand.hbm [shape: bf16[2,64,48], index: 1, kind: input, shape index: {}]
  %s2 = inlined_call_operand.hbm [shape: f32[2,1,48], index: 2, kind: input, shape index: {}]
  %s3 = inlined_call_operand.hbm [shape: f32[2,64,64], index: 3, kind: input, shape index: {}]
  %s4 = inlined_call_operand.hbm [shape: f32[2,16,64], index: 4, kind: input, shape index: {}]
  %s5 = inlined_call_operand.hbm [shape: f32[2,1,64], index: 5, kind: input, shape index: {}]
  %s6 = inlined_call_operand.vmem [shape: f32[2,1,64], index: 6, kind: input, shape index: {}]
  %s7 = inlined_call_operand.vmem [shape: f32[1,64], index: 7, kind: input, shape index: {}]
  %s8 = inlined_call_operand.vmem [shape: f32[1,64], index: 8, kind: input, shape index: {}]
  %s9 = inlined_call_operand.vmem [shape: f32[128,64], index: 9, kind: output, shape index: {}]
  %s10 = sld [smem:[#allocation0]]
  $region89: #{_lambda_.2} parent=0
    _
  %s12 = ssub.s32 1, %s10
  %s13 = scalar_select 0, %s12, %s10
  $region1: #{_lambda_.2} parent=0
    #allocation2 [shape = 'u8[32768]{0}', space=vmem, size = 0x8000, scoped, tag = 'input window, operand 1, single buffered']
    #allocation3 [shape = 's32[2]{0}', space=sflag, size = 0x8, scoped, tag = 'scoped memory for _lambda_.2']
    #allocation4 [shape = 'u8[1024]{0}', space=vmem, size = 0x400, scoped, tag = 'input window, operand 2, single buffered']
    #allocation5 [shape = 's32[1]{0}', space=sflag, size = 0x4, scoped, tag = 'scoped memory for _lambda_.2']
    #allocation6 [shape = 'u8[65536]{0}', space=vmem, size = 0x10000, scoped, tag = 'input window, operand 3, single buffered']
    #allocation7 [shape = 'u8[16384]{0}', space=vmem, size = 0x4000, scoped, tag = 'input window, operand 4, single buffered']
    #allocation8 [shape = 's32[1]{0}', space=sflag, size = 0x4, scoped, tag = 'scoped memory for _lambda_.2']
    #allocation9 [shape = 'u8[1024]{0}', space=vmem, size = 0x400, scoped, tag = 'input window, operand 5, single buffered']
    %14 = vsyncpa [#allocation3], 0
    %15 = vsyncpa [#allocation5], 0
    %16 = vsyncpa [#allocation8], 0
    loop: start=0, step=1, limit=4
    $region2: #{_lambda_.2} parent=1 // loop_pre_header
      _
    $region3: #{_lambda_.2} parent=1 // loop_header
      %s18 = sphi 0, %s22
      %p19 = scmp.ge.s32.totalorder %s18, 4
      %s28 = sphi 0, %s30
      %s31 = sphi 0, %s28
      %s32 = sphi 0, %s31
      %s48 = sphi 0, %s32
      %s52 = sphi 0, %s52
      %s54 = sphi 0, %s52
      %s55 = sphi 0, %s54
      %s69 = sphi 0, %s55
      %s73 = sphi 0, %s73
      %s75 = sphi 0, %s73
      %s76 = sphi 0, %s75
      %s90 = sphi 0, %s76
      %s94 = sphi 0, %s94
      %s96 = sphi 0, %s94
      %s97 = sphi 0, %s96
      %s111 = sphi 0, %s97
      %s115 = sphi 0, %s115
      %s117 = sphi 0, %s115
      %s118 = sphi 0, %s117
      %s132 = sphi 0, %s118
      %s136 = sphi 0, %s136
      %s138 = sphi 0, %s136
      %s139 = sphi 0, %s138
      %s153 = sphi 0, %s139
      %s157 = sphi 0, %s157
      %s159 = sphi 0, %s157
      %s160 = sphi 0, %s159
      %s174 = sphi 0, %s160
      %s178 = sphi 0, %s178
      %s180 = sphi 0, %s178
      %s181 = sphi 0, %s180
      %s195 = sphi 0, %s181
      %s199 = sphi 0, %s199
      %s201 = sphi 0, %s199
      %s202 = sphi 0, %s201
      %s216 = sphi 0, %s202
      %s222 = sphi 0, %s224
      %s225 = sphi 0, %s222
      %s226 = sphi 0, %s225
      %s242 = sphi 0, %s226
    $region4: #{_lambda_.2} parent=1 // loop_header_branch
      %21 = sbr.rel (%p19) target = $region8
    $region5: #{_lambda_.2} parent=1 // loop_body
      %s23 = ssub.s32 %s18, 1
      %s24 = ssub.s32 %s18, 2
      %s25 = sadd.s32 %s18, 1
      %s26 = ssub.s32 %s18, %s25
      %p27 = scmp.eq.s32.totalorder %s26, 0
      %s29 = sadd.s32 %s28, 1
      %s30 = scalar_select %p27, %s28, %s29
      %p33 = pneg %p27
      %p34 = scmp.eq.s32.totalorder %s18, 1
      %p35 = por %p33, %p34
      %p36 = scmp.ne.s32.totalorder %s28, %s31
      %p37 = scmp.eq.s32.totalorder %s18, 0
      %p38 = por %p36, %p37
      %p39 = scmp.ne.s32.totalorder %s28, %s31
      %p40 = scmp.eq.s32.totalorder %s23, 1
      %p41 = por %p39, %p40
      %p42 = scmp.ne.s32.totalorder %s31, %s32
      %p43 = scmp.eq.s32.totalorder %s23, 0
      %p44 = por %p42, %p43
      %p45 = scmp.ne.s32.totalorder %s31, %s32
      %p46 = scmp.eq.s32.totalorder %s24, 1
      %p47 = por %p45, %p46
      %p49 = scmp.ne.s32.totalorder %s32, %s48
      %p50 = scmp.eq.s32.totalorder %s24, 0
      %p51 = por %p49, %p50
      %s53 = sadd.s32 %s52, 1
      %p56 = scmp.eq.s32.totalorder %s18, 1
      %p57 = scmp.ne.s32.totalorder %s52, %s54
      %p58 = scmp.eq.s32.totalorder %s18, 0
      %p59 = por %p57, %p58
      %p60 = scmp.ne.s32.totalorder %s52, %s54
      %p61 = scmp.eq.s32.totalorder %s23, 1
      %p62 = por %p60, %p61
      %p63 = scmp.ne.s32.totalorder %s54, %s55
      %p64 = scmp.eq.s32.totalorder %s23, 0
      %p65 = por %p63, %p64
      %p66 = scmp.ne.s32.totalorder %s54, %s55
      %p67 = scmp.eq.s32.totalorder %s24, 1
      %p68 = por %p66, %p67
      %p70 = scmp.ne.s32.totalorder %s55, %s69
      %p71 = scmp.eq.s32.totalorder %s24, 0
      %p72 = por %p70, %p71
      %s74 = sadd.s32 %s73, 1
      %p77 = scmp.eq.s32.totalorder %s18, 1
      %p78 = scmp.ne.s32.totalorder %s73, %s75
      %p79 = scmp.eq.s32.totalorder %s18, 0
      %p80 = por %p78, %p79
      %p81 = scmp.ne.s32.totalorder %s73, %s75
      %p82 = scmp.eq.s32.totalorder %s23, 1
      %p83 = por %p81, %p82
      %p84 = scmp.ne.s32.totalorder %s75, %s76
      %p85 = scmp.eq.s32.totalorder %s23, 0
      %p86 = por %p84, %p85
      %p87 = scmp.ne.s32.totalorder %s75, %s76
      %p88 = scmp.eq.s32.totalorder %s24, 1
      %p89 = por %p87, %p88
      %p91 = scmp.ne.s32.totalorder %s76, %s90
      %p92 = scmp.eq.s32.totalorder %s24, 0
      %p93 = por %p91, %p92
      %s95 = sadd.s32 %s94, 1
      %p98 = scmp.eq.s32.totalorder %s18, 1
      %p99 = scmp.ne.s32.totalorder %s94, %s96
      %p100 = scmp.eq.s32.totalorder %s18, 0
      %p101 = por %p99, %p100
      %p102 = scmp.ne.s32.totalorder %s94, %s96
      %p103 = scmp.eq.s32.totalorder %s23, 1
      %p104 = por %p102, %p103
      %p105 = scmp.ne.s32.totalorder %s96, %s97
      %p106 = scmp.eq.s32.totalorder %s23, 0
      %p107 = por %p105, %p106
      %p108 = scmp.ne.s32.totalorder %s96, %s97
      %p109 = scmp.eq.s32.totalorder %s24, 1
      %p110 = por %p108, %p109
      %p112 = scmp.ne.s32.totalorder %s97, %s111
      %p113 = scmp.eq.s32.totalorder %s24, 0
      %p114 = por %p112, %p113
      %s116 = sadd.s32 %s115, 1
      %p119 = scmp.eq.s32.totalorder %s18, 1
      %p120 = scmp.ne.s32.totalorder %s115, %s117
      %p121 = scmp.eq.s32.totalorder %s18, 0
      %p122 = por %p120, %p121
      %p123 = scmp.ne.s32.totalorder %s115, %s117
      %p124 = scmp.eq.s32.totalorder %s23, 1
      %p125 = por %p123, %p124
      %p126 = scmp.ne.s32.totalorder %s117, %s118
      %p127 = scmp.eq.s32.totalorder %s23, 0
      %p128 = por %p126, %p127
      %p129 = scmp.ne.s32.totalorder %s117, %s118
      %p130 = scmp.eq.s32.totalorder %s24, 1
      %p131 = por %p129, %p130
      %p133 = scmp.ne.s32.totalorder %s118, %s132
      %p134 = scmp.eq.s32.totalorder %s24, 0
      %p135 = por %p133, %p134
      %s137 = sadd.s32 %s136, 1
      %p140 = scmp.eq.s32.totalorder %s18, 1
      %p141 = scmp.ne.s32.totalorder %s136, %s138
      %p142 = scmp.eq.s32.totalorder %s18, 0
      %p143 = por %p141, %p142
      %p144 = scmp.ne.s32.totalorder %s136, %s138
      %p145 = scmp.eq.s32.totalorder %s23, 1
      %p146 = por %p144, %p145
      %p147 = scmp.ne.s32.totalorder %s138, %s139
      %p148 = scmp.eq.s32.totalorder %s23, 0
      %p149 = por %p147, %p148
      %p150 = scmp.ne.s32.totalorder %s138, %s139
      %p151 = scmp.eq.s32.totalorder %s24, 1
      %p152 = por %p150, %p151
      %p154 = scmp.ne.s32.totalorder %s139, %s153
      %p155 = scmp.eq.s32.totalorder %s24, 0
      %p156 = por %p154, %p155
      %s158 = sadd.s32 %s157, 1
      %p161 = scmp.eq.s32.totalorder %s18, 1
      %p162 = scmp.ne.s32.totalorder %s157, %s159
      %p163 = scmp.eq.s32.totalorder %s18, 0
      %p164 = por %p162, %p163
      %p165 = scmp.ne.s32.totalorder %s157, %s159
      %p166 = scmp.eq.s32.totalorder %s23, 1
      %p167 = por %p165, %p166
      %p168 = scmp.ne.s32.totalorder %s159, %s160
      %p169 = scmp.eq.s32.totalorder %s23, 0
      %p170 = por %p168, %p169
      %p171 = scmp.ne.s32.totalorder %s159, %s160
      %p172 = scmp.eq.s32.totalorder %s24, 1
      %p173 = por %p171, %p172
      %p175 = scmp.ne.s32.totalorder %s160, %s174
      %p176 = scmp.eq.s32.totalorder %s24, 0
      %p177 = por %p175, %p176
      %s179 = sadd.s32 %s178, 1
      %p182 = scmp.eq.s32.totalorder %s18, 1
      %p183 = scmp.ne.s32.totalorder %s178, %s180
      %p184 = scmp.eq.s32.totalorder %s18, 0
      %p185 = por %p183, %p184
      %p186 = scmp.ne.s32.totalorder %s178, %s180
      %p187 = scmp.eq.s32.totalorder %s23, 1
      %p188 = por %p186, %p187
      %p189 = scmp.ne.s32.totalorder %s180, %s181
      %p190 = scmp.eq.s32.totalorder %s23, 0
      %p191 = por %p189, %p190
      %p192 = scmp.ne.s32.totalorder %s180, %s181
      %p193 = scmp.eq.s32.totalorder %s24, 1
      %p194 = por %p192, %p193
      %p196 = scmp.ne.s32.totalorder %s181, %s195
      %p197 = scmp.eq.s32.totalorder %s24, 0
      %p198 = por %p196, %p197
      %s200 = sadd.s32 %s199, 1
      %p203 = scmp.eq.s32.totalorder %s18, 1
      %p204 = scmp.ne.s32.totalorder %s199, %s201
      %p205 = scmp.eq.s32.totalorder %s18, 0
      %p206 = por %p204, %p205
      %p207 = scmp.ne.s32.totalorder %s199, %s201
      %p208 = scmp.eq.s32.totalorder %s23, 1
      %p209 = por %p207, %p208
      %p210 = scmp.ne.s32.totalorder %s201, %s202
      %p211 = scmp.eq.s32.totalorder %s23, 0
      %p212 = por %p210, %p211
      %p213 = scmp.ne.s32.totalorder %s201, %s202
      %p214 = scmp.eq.s32.totalorder %s24, 1
      %p215 = por %p213, %p214
      %p217 = scmp.ne.s32.totalorder %s202, %s216
      %p218 = scmp.eq.s32.totalorder %s24, 0
      %p219 = por %p217, %p218
      %s220 = ssub.s32 %s18, %s25
      %p221 = scmp.eq.s32.totalorder %s220, 0
      %s223 = sadd.s32 %s222, 1
      %s224 = scalar_select %p221, %s222, %s223
      %p227 = pneg %p221
      %p228 = scmp.eq.s32.totalorder %s18, 1
      %p229 = por %p227, %p228
      %p230 = scmp.ne.s32.totalorder %s222, %s225
      %p231 = scmp.eq.s32.totalorder %s18, 0
      %p232 = por %p230, %p231
      %p233 = scmp.ne.s32.totalorder %s222, %s225
      %p234 = scmp.eq.s32.totalorder %s23, 1
      %p235 = por %p233, %p234
      %p236 = scmp.ne.s32.totalorder %s225, %s226
      %p237 = scmp.eq.s32.totalorder %s23, 0
      %p238 = por %p236, %p237
      %p239 = scmp.ne.s32.totalorder %s225, %s226
      %p240 = scmp.eq.s32.totalorder %s24, 1
      %p241 = por %p239, %p240
      %p243 = scmp.ne.s32.totalorder %s226, %s242
      %p244 = scmp.eq.s32.totalorder %s24, 0
      %p245 = por %p243, %p244
      %p246 = scmp.le.s32.totalorder 1, %s18
      %p247 = scmp.lt.s32.totalorder %s18, 3
      %p248 = pnand %p246, %p247
      %p249 = pneg %p248
      // Predicated region
      $region9: #{_lambda_.2} parent=5 // pred_check
        _
      $region10: #{_lambda_.2} parent=5 // pred_check_branch
        %251 = sbr.rel (%p248) target = $region12
      $region11: #{_lambda_.2} parent=5 // pred_region
        %s252 = ssub.s32 %s18, 1
        // Predicated region
        $region13: #{_lambda_.2} parent=11 // pred_check
          %p253 = pneg %p65
        $region14: #{_lambda_.2} parent=11 // pred_check_branch
          %255 = sbr.rel (%p253) target = $region16
        $region15: #{_lambda_.2} parent=11 // pred_region
          %s257 = ssub.s32 1024, 1024
          %258 = vsyncadd [#allocation3], %s257
          %s259 = sshll.u32 [#allocation2], 4
          %s260 = int_to_ptr.vmem [resolvable:$true] %s259
          %265 = dma.hbm_to_vmem [thread:$0]  %s1, 1024, %s260, [#allocation3], 64, 64, 4
        $region16: #{_lambda_.2} parent=11 // pred_fallthru
          _
        // Predicated region
        $region17: #{_lambda_.2} parent=11 // pred_check
          %p266 = pneg %p86
        $region18: #{_lambda_.2} parent=11 // pred_check_branch
          %268 = sbr.rel (%p266) target = $region20
        $region19: #{_lambda_.2} parent=11 // pred_region
          %s270 = ssub.s32 32, 32
          %271 = vsyncadd [#allocation5], %s270
          %s272 = sshll.u32 [#allocation4], 4
          %s273 = int_to_ptr.vmem [resolvable:$true] %s272
          %278 = dma.hbm_to_vmem [thread:$0]  %s2, 32, %s273, [#allocation5], 16, 16, 1
        $region20: #{_lambda_.2} parent=11 // pred_fallthru
          _
        // Predicated region
        $region21: #{_lambda_.2} parent=11 // pred_check
          %p279 = pneg %p107
        $region22: #{_lambda_.2} parent=11 // pred_check_branch
          %281 = sbr.rel (%p279) target = $region24
        $region23: #{_lambda_.2} parent=11 // pred_region
          %s283 = ssub.s32 2048, 2048
          %284 = vsyncadd [#allocation5], %s283
          %s285 = sshll.u32 [#allocation6], 4
          %s286 = int_to_ptr.vmem [resolvable:$true] %s285
          %291 = dma.hbm_to_vmem [thread:$0]  %s3, 2048, %s286, [#allocation5], 128, 128, 8
        $region24: #{_lambda_.2} parent=11 // pred_fallthru
          _
        // Predicated region
        $region25: #{_lambda_.2} parent=11 // pred_check
          %p292 = pneg %p128
        $region26: #{_lambda_.2} parent=11 // pred_check_branch
          %294 = sbr.rel (%p292) target = $region28
        $region27: #{_lambda_.2} parent=11 // pred_region
          %s296 = ssub.s32 512, 512
          %297 = vsyncadd [#allocation8], %s296
          %s298 = sshll.u32 [#allocation7], 4
          %s299 = int_to_ptr.vmem [resolvable:$true] %s298
          %304 = dma.hbm_to_vmem [thread:$0]  %s4, 512, %s299, [#allocation8], 128, 128, 8
        $region28: #{_lambda_.2} parent=11 // pred_fallthru
          _
        // Predicated region
        $region29: #{_lambda_.2} parent=11 // pred_check
          %p305 = pneg %p149
        $region30: #{_lambda_.2} parent=11 // pred_check_branch
          %307 = sbr.rel (%p305) target = $region32
        $region31: #{_lambda_.2} parent=11 // pred_region
          %s309 = ssub.s32 32, 32
          %310 = vsyncadd [#allocation8], %s309
          %s311 = sshll.u32 [#allocation9], 4
          %s312 = int_to_ptr.vmem [resolvable:$true] %s311
          %317 = dma.hbm_to_vmem [thread:$0]  %s5, 32, %s312, [#allocation8], 16, 16, 1
        $region32: #{_lambda_.2} parent=11 // pred_fallthru
          _
        // Predicated region
        $region33: #{_lambda_.2} parent=11 // pred_check
          %p318 = pneg %p170
        $region34: #{_lambda_.2} parent=11 // pred_check_branch
          %320 = sbr.rel (%p318) target = $region36
        $region35: #{_lambda_.2} parent=11 // pred_region
          _
        $region36: #{_lambda_.2} parent=11 // pred_fallthru
          _
        // Predicated region
        $region37: #{_lambda_.2} parent=11 // pred_check
          %p321 = pneg %p191
        $region38: #{_lambda_.2} parent=11 // pred_check_branch
          %323 = sbr.rel (%p321) target = $region40
        $region39: #{_lambda_.2} parent=11 // pred_region
          _
        $region40: #{_lambda_.2} parent=11 // pred_fallthru
          _
        // Predicated region
        $region41: #{_lambda_.2} parent=11 // pred_check
          %p324 = pneg %p212
        $region42: #{_lambda_.2} parent=11 // pred_check_branch
          %326 = sbr.rel (%p324) target = $region44
        $region43: #{_lambda_.2} parent=11 // pred_region
          _
        $region44: #{_lambda_.2} parent=11 // pred_fallthru
          _
      $region12: #{_lambda_.2} parent=5 // pred_fallthru
        _
      %p327 = scmp.lt.s32.totalorder %s18, 2
      // Predicated region
      $region45: #{_lambda_.2} parent=5 // pred_check
        %p328 = pneg %p327
      $region46: #{_lambda_.2} parent=5 // pred_check_branch
        %330 = sbr.rel (%p328) target = $region48
      $region47: #{_lambda_.2} parent=5 // pred_region
        // Predicated region
        $region49: #{_lambda_.2} parent=47 // pred_check
          %p331 = pneg %p38
        $region50: #{_lambda_.2} parent=47 // pred_check_branch
          %333 = sbr.rel (%p331) target = $region52
        $region51: #{_lambda_.2} parent=47 // pred_region
          %p334 = scmp.lt.s32.totalorder %s18, 1
          %s335 = scalar_select %p334, %s18, 1
          %s336 = smul.addr %s335, 8
          %s337 = smul.addr %s336, 4
          %s338 = scalar_lea.vmem %s0, %s337
        $region52: #{_lambda_.2} parent=47 // pred_fallthru
          _
      $region48: #{_lambda_.2} parent=5 // pred_fallthru
        _
      %p339 = scmp.le.s32.totalorder 1, %s18
      %p340 = scmp.lt.s32.totalorder %s18, 3
      %p341 = pnand %p339, %p340
      %p342 = pneg %p341
      // Predicated region
      $region53: #{_lambda_.2} parent=5 // pred_check
        _
      $region54: #{_lambda_.2} parent=5 // pred_check_branch
        %344 = sbr.rel (%p341) target = $region56
      $region55: #{_lambda_.2} parent=5 // pred_region
        %s345 = ssub.s32 %s18, 1
        // Predicated region
        $region57: #{_lambda_.2} parent=55 // pred_check
          %p346 = pneg %p65
        $region58: #{_lambda_.2} parent=55 // pred_check_branch
          %348 = sbr.rel (%p346) target = $region60
        $region59: #{_lambda_.2} parent=55 // pred_region
          %349 = dma.done [#allocation3], 1024
        $region60: #{_lambda_.2} parent=55 // pred_fallthru
          _
        // Predicated region
        $region61: #{_lambda_.2} parent=55 // pred_check
          %p350 = pneg %p86
        $region62: #{_lambda_.2} parent=55 // pred_check_branch
          %352 = sbr.rel (%p350) target = $region64
        $region63: #{_lambda_.2} parent=55 // pred_region
          %353 = dma.done [#allocation5], 32
        $region64: #{_lambda_.2} parent=55 // pred_fallthru
          _
        // Predicated region
        $region65: #{_lambda_.2} parent=55 // pred_check
          %p354 = pneg %p107
        $region66: #{_lambda_.2} parent=55 // pred_check_branch
          %356 = sbr.rel (%p354) target = $region68
        $region67: #{_lambda_.2} parent=55 // pred_region
          %357 = dma.done [#allocation5], 2048
        $region68: #{_lambda_.2} parent=55 // pred_fallthru
          _
        // Predicated region
        $region69: #{_lambda_.2} parent=55 // pred_check
          %p358 = pneg %p128
        $region70: #{_lambda_.2} parent=55 // pred_check_branch
          %360 = sbr.rel (%p358) target = $region72
        $region71: #{_lambda_.2} parent=55 // pred_region
          %361 = dma.done [#allocation8], 512
        $region72: #{_lambda_.2} parent=55 // pred_fallthru
          _
        // Predicated region
        $region73: #{_lambda_.2} parent=55 // pred_check
          %p362 = pneg %p149
        $region74: #{_lambda_.2} parent=55 // pred_check_branch
          %364 = sbr.rel (%p362) target = $region76
        $region75: #{_lambda_.2} parent=55 // pred_region
          %365 = dma.done [#allocation8], 32
        $region76: #{_lambda_.2} parent=55 // pred_fallthru
          _
        %p366 = scmp.lt.s32.totalorder %s23, 1
        %s367 = scalar_select %p366, %s23, 1
        %s368 = smul.addr %s367, 8
        %s369 = smul.addr %s368, 4
        %s370 = scalar_lea.vmem %s0, %s369
        %p371 = pneg %p44
        %p372 = pneg %p41
        %p373 = pneg %p65
        %p374 = pneg %p62
        %p375 = pneg %p86
        %p376 = pneg %p83
        %p377 = pneg %p107
        %p378 = pneg %p104
        %p379 = pneg %p128
        %p380 = pneg %p125
        %p381 = pneg %p149
        %p382 = pneg %p146
        %p383 = pneg %p170
        %p384 = pneg %p167
        %p385 = pneg %p191
        %p386 = pneg %p188
        %p387 = pneg %p212
        %p388 = pneg %p209
        %p389 = pneg %p238
        %p390 = pneg %p235
        %s391 = smul.u32 8, %s23
        %p392 = scmp.lt.s32.totalorder %s391, 15
        %s393 = scalar_select %p392, %s391, 15
        %s394 = smul.addr %s393, 8
        %s395 = scalar_lea.vmem %s9, %s394
        %p396 = scmp.lt.s32.totalorder %s23, 1
        %s397 = scalar_select %p396, %s23, 1
        %s398 = smul.addr %s397, 8
        %s399 = smul.addr %s398, 4
        %s400 = scalar_lea.vmem %s0, %s399
        %s401 = smul.u32 8, %s23
        %p402 = scmp.lt.s32.totalorder %s401, 15
        %s403 = scalar_select %p402, %s401, 15
        %s404 = smul.addr %s403, 8
        %s405 = scalar_lea.vmem %s9, %s404
        %s406 = smul.u32 8, %s23
        %v408 = vld [vmem:[%s400] sm:$0xf]
        %v409 = vld [vmem:[%s400 + $0x4] sm:$0xf]
        %v410 = vld [vmem:[%s400 + $0x8] sm:$0xf]
        %v411 = vld [vmem:[%s400 + $0xc] sm:$0xf]
        %v412 = vld [vmem:[%s400 + $0x10] sm:$0xf]
        %v413 = vld [vmem:[%s400 + $0x14] sm:$0xf]
        %v414 = vld [vmem:[%s400 + $0x18] sm:$0xf]
        %v415 = vld [vmem:[%s400 + $0x1c] sm:$0xf]
        %v416 = vld [vmem:[#allocation2] sm:$0xf]
        %v417 = vld [vmem:[#allocation2 + $0x4] sm:$0xf]
        %v418 = vld [vmem:[#allocation2 + $0x8] sm:$0xf]
        %v419 = vld [vmem:[#allocation2 + $0xc] sm:$0xf]
        %v420 = vld [vmem:[#allocation2 + $0x10] sm:$0xf]
        %v421 = vld [vmem:[#allocation2 + $0x14] sm:$0xf]
        %v422 = vld [vmem:[#allocation2 + $0x18] sm:$0xf]
        %v423 = vld [vmem:[#allocation2 + $0x1c] sm:$0xf]
        %v424 = vld [vmem:[#allocation4] sm:$0x1]
        %v426 = vlaneseq
        %v427 = vshrl.u32 %v426, 7
        %v428 = vsub.s32 0, %v427
        %v429 = vrot.slane %v424, %v428
        %v439 = vunpack.c.l.b16 %v408
        %v440 = vunpack.c.l.b16 %v409
        %v441 = vunpack.c.l.b16 %v410
        %v442 = vunpack.c.l.b16 %v411
        %v443 = vunpack.c.l.b16 %v412
        %v444 = vunpack.c.l.b16 %v413
        %v445 = vunpack.c.l.b16 %v414
        %v446 = vunpack.c.l.b16 %v415
        %v447 = vpack.c.b16 %v440, %v439
        %v448 = vpack.c.b16 %v442, %v441
        %v449 = vpack.c.b16 %v444, %v443
        %v450 = vpack.c.b16 %v446, %v445
        %v459 = vunpack.c.l.b16 %v416
        %v460 = vunpack.c.l.b16 %v417
        %v461 = vunpack.c.l.b16 %v418
        %v462 = vunpack.c.l.b16 %v419
        %v463 = vunpack.c.l.b16 %v420
        %v464 = vunpack.c.l.b16 %v421
        %v465 = vunpack.c.l.b16 %v422
        %v466 = vunpack.c.l.b16 %v423
        %v467 = vpack.c.b16 %v460, %v459
        %v468 = vpack.c.b16 %v462, %v461
        %v469 = vpack.c.b16 %v464, %v463
        %v470 = vpack.c.b16 %v466, %v465
        %vm475 = vcmask 523264
        %v477 = vsel %vm475, %v447, 0
        %v480 = vsel %vm475, %v448, 0
        %v483 = vsel %vm475, %v449, 0
        %v486 = vsel %vm475, %v450, 0
        %488 = vmatprep.subr.bf16.mxu0 0
        %489 = vmatpush1.bf16.msra.mxu0 %v467
        %490 = vmatprep.subr.bf16.mxu0 0
        %491 = vmatpush1.bf16.msra.mxu0 %v468
        %492 = vmatprep.subr.bf16.mxu0 0
        %493 = vmatpush1.bf16.msra.mxu0 %v469
        %494 = vmatprep.subr.bf16.mxu0 0
        %495 = vmatpush1.bf16.msra.mxu0 %v470
        %496 = vmatprep.subr.bf16.mxu0 0
        %497 = vmatpush1.bf16.msra.mxu0 0
        %498 = vmatprep.subr.bf16.mxu0 0
        %499 = vmatpush1.bf16.msra.mxu0 0
        %500 = vmatprep.subr.bf16.mxu0 0
        %501 = vmatpush1.bf16.msra.mxu0 0
        %502 = vmatprep.subr.bf16.mxu0 0
        %503 = vmatpush1.bf16.msra.mxu0 0
        %504 = vmatprep.subr.bf16.mxu0 0
        %505 = vmatpush1.bf16.msra.mxu0 0
        %506 = vmatprep.subr.bf16.mxu0 0
        %507 = vmatpush1.bf16.msra.mxu0 0
        %508 = vmatprep.subr.bf16.mxu0 0
        %509 = vmatpush1.bf16.msra.mxu0 0
        %510 = vmatprep.subr.bf16.mxu0 0
        %511 = vmatpush1.bf16.msra.mxu0 0
        %512 = vmatprep.subr.bf16.mxu0 0
        %513 = vmatpush1.bf16.msra.mxu0 0
        %514 = vmatprep.subr.bf16.mxu0 0
        %515 = vmatpush1.bf16.msra.mxu0 0
        %516 = vmatprep.subr.bf16.mxu0 0
        %517 = vmatpush1.bf16.msra.mxu0 0
        %518 = vmatprep.subr.bf16.mxu0 0
        %519 = vmatpush1.bf16.msra.mxu0 0
        %520 = vmatprep.mubr.bf16.mxu0 0
        %521 = vmatmul.mubr.bf16.gmra.mrb[0].mxu0 %v477
        %v522 = vpop.f32.mrb[0].mxu0
        %v523 = vadd.f32 %v429, %v522
        %v524 = vpop.f32.mrb[0].mxu0
        %v525 = vpop.f32.mrb[0].mxu0
        %v526 = vadd.f32 %v429, %v525
        %v527 = vpop.f32.mrb[0].mxu0
        %528 = vmatprep.mubr.bf16.mxu0 0
        %529 = vmatmul.mubr.bf16.gmra.mrb[0].mxu0 %v480
        %v530 = vpop.f32.mrb[0].mxu0
        %v531 = vadd.f32 %v429, %v530
        %v532 = vpop.f32.mrb[0].mxu0
        %v533 = vpop.f32.mrb[0].mxu0
        %v534 = vadd.f32 %v429, %v533
        %v535 = vpop.f32.mrb[0].mxu0
        %536 = vmatprep.mubr.bf16.mxu0 0
        %537 = vmatmul.mubr.bf16.gmra.mrb[0].mxu0 %v483
        %v538 = vpop.f32.mrb[0].mxu0
        %v539 = vadd.f32 %v429, %v538
        %v540 = vpop.f32.mrb[0].mxu0
        %v541 = vpop.f32.mrb[0].mxu0
        %v542 = vadd.f32 %v429, %v541
        %v543 = vpop.f32.mrb[0].mxu0
        %544 = vmatprep.mubr.bf16.mxu0 0
        %545 = vmatmul.mubr.bf16.gmra.mrb[0].mxu0 %v486
        %v546 = vpop.f32.mrb[0].mxu0
        %v547 = vadd.f32 %v429, %v546
        %v548 = vpop.f32.mrb[0].mxu0
        %v549 = vpop.f32.mrb[0].mxu0
        %v550 = vadd.f32 %v429, %v549
        %v551 = vpop.f32.mrb[0].mxu0
        %552 = vdwg.mxu0
        %561 = vrot.lane.b32.xlu0 %v523, 96
        %v562 = vpop.permute.xlu0 %561
        %563 = vrot.lane.b32.xlu0 %v526, 96
        %v564 = vpop.permute.xlu0 %563
        %565 = vrot.lane.b32.xlu0 %v531, 96
        %v566 = vpop.permute.xlu0 %565
        %567 = vrot.lane.b32.xlu0 %v534, 96
        %v568 = vpop.permute.xlu0 %567
        %569 = vrot.lane.b32.xlu0 %v539, 96
        %v570 = vpop.permute.xlu0 %569
        %571 = vrot.lane.b32.xlu0 %v542, 96
        %v572 = vpop.permute.xlu0 %571
        %573 = vrot.lane.b32.xlu0 %v547, 96
        %v574 = vpop.permute.xlu0 %573
        %575 = vrot.lane.b32.xlu0 %v550, 96
        %v576 = vpop.permute.xlu0 %575
        %vm577 = vcmask 130048
        %v578 = vsel %vm577, %v523, 0
        %v580 = vsel %vm577, %v526, 0
        %v582 = vsel %vm577, %v531, 0
        %v584 = vsel %vm577, %v534, 0
        %v586 = vsel %vm577, %v539, 0
        %v588 = vsel %vm577, %v542, 0
        %v590 = vsel %vm577, %v547, 0
        %v592 = vsel %vm577, %v550, 0
        %v594 = vsel %vm577, %v562, 0
        %v596 = vsel %vm577, %v564, 0
        %v598 = vsel %vm577, %v566, 0
        %v600 = vsel %vm577, %v568, 0
        %v602 = vsel %vm577, %v570, 0
        %v604 = vsel %vm577, %v572, 0
        %v606 = vsel %vm577, %v574, 0
        %v608 = vsel %vm577, %v576, 0
        %610 = vmatprep.subr.mxu0 0.0
        %611 = vmatpush1.xpose.msra.mxu0 %v594
        %612 = vmatprep.subr.mxu0 0.0
        %613 = vmatpush1.xpose.msra.mxu0 %v596
        %614 = vmatprep.subr.mxu0 0.0
        %615 = vmatpush1.xpose.msra.mxu0 %v598
        %616 = vmatprep.subr.mxu0 0.0
        %617 = vmatpush1.xpose.msra.mxu0 %v600
        %618 = vmatprep.subr.mxu0 0.0
        %619 = vmatpush1.xpose.msra.mxu0 %v602
        %620 = vmatprep.subr.mxu0 0.0
        %621 = vmatpush1.xpose.msra.mxu0 %v604
        %622 = vmatprep.subr.mxu0 0.0
        %623 = vmatpush1.xpose.msra.mxu0 %v606
        %624 = vmatprep.subr.mxu0 0.0
        %625 = vmatpush1.xpose.msra.mxu0 %v608
        %626 = vmatprep.subr.mxu0 0.0
        %627 = vmatpush1.xpose.msra.mxu0 0.0
        %628 = vmatprep.subr.mxu0 0.0
        %629 = vmatpush1.xpose.msra.mxu0 0.0
        %630 = vmatprep.subr.mxu0 0.0
        %631 = vmatpush1.xpose.msra.mxu0 0.0
        %632 = vmatprep.subr.mxu0 0.0
        %633 = vmatpush1.xpose.msra.mxu0 0.0
        %634 = vmatprep.subr.mxu0 0.0
        %635 = vmatpush1.xpose.msra.mxu0 0.0
        %636 = vmatprep.subr.mxu0 0.0
        %637 = vmatpush1.xpose.msra.mxu0 0.0
        %638 = vmatprep.subr.mxu0 0.0
        %639 = vmatpush1.xpose.msra.mxu0 0.0
        %640 = vmatprep.subr.mxu0 0.0
        %641 = vmatpush1.xpose.msra.mxu0 0.0
        %642 = vmatprep.subr.mxu0 0.0
        %643 = vmatpush1.xpose.msra.mxu0 0.0
        %644 = vmatprep.subr.mxu0 0.0
        %645 = vmatpush1.xpose.msra.mxu0 0.0
        %646 = vmatprep.subr.mxu0 0.0
        %647 = vmatpush1.xpose.msra.mxu0 0.0
        %648 = vmatprep.subr.mxu0 0.0
        %649 = vmatpush1.xpose.msra.mxu0 0.0
        %650 = vmatprep.subr.mxu0 0.0
        %651 = vmatpush1.xpose.msra.mxu0 0.0
        %652 = vmatprep.subr.mxu0 0.0
        %653 = vmatpush1.xpose.msra.mxu0 0.0
        %654 = vmatprep.subr.mxu0 0.0
        %655 = vmatpush1.xpose.msra.mxu0 0.0
        %656 = vmatprep.subr.mxu0 0.0
        %657 = vmatpush1.xpose.msra.mxu0 0.0
        %658 = vmatprep.subr.mxu0 0.0
        %659 = vmatpush1.xpose.msra.mxu0 0.0
        %660 = vmatprep.subr.mxu0 0.0
        %661 = vmatpush1.xpose.msra.mxu0 0.0
        %662 = vmatprep.subr.mxu0 0.0
        %663 = vmatpush1.xpose.msra.mxu0 0.0
        %664 = vmatprep.subr.mxu0 0.0
        %665 = vmatpush1.xpose.msra.mxu0 0.0
        %666 = vmatprep.subr.mxu0 0.0
        %667 = vmatpush1.xpose.msra.mxu0 0.0
        %668 = vmatprep.subr.mxu0 0.0
        %669 = vmatpush1.xpose.msra.mxu0 0.0
        %670 = vmatprep.subr.mxu0 0.0
        %671 = vmatpush1.xpose.msra.mxu0 0.0
        %672 = vmatprep.subr.mxu0 0.0
        %673 = vmatpush1.xpose.msra.mxu0 0.0
        %674 = vmatprep.mubr.f32.mxu0 0.0
        %675 = vmatmul.mubr.f32.gmra.mrb[0].mxu0 %v578
        %v676 = vpop.f32.mrb[0].mxu0
        %v677 = vadd.f32 0.0, %v676
        %v678 = vpop.f32.mrb[0].mxu0
        %679 = vmatprep.mubr.f32.mxu0 0.0
        %680 = vmatmul.mubr.f32.gmra.mrb[0].mxu0 %v580
        %v681 = vpop.f32.mrb[0].mxu0
        %v682 = vadd.f32 0.0, %v681
        %v683 = vpop.f32.mrb[0].mxu0
        %684 = vmatprep.mubr.f32.mxu0 0.0
        %685 = vmatmul.mubr.f32.gmra.mrb[0].mxu0 %v582
        %v686 = vpop.f32.mrb[0].mxu0
        %v687 = vadd.f32 0.0, %v686
        %v688 = vpop.f32.mrb[0].mxu0
        %689 = vmatprep.mubr.f32.mxu0 0.0
        %690 = vmatmul.mubr.f32.gmra.mrb[0].mxu0 %v584
        %v691 = vpop.f32.mrb[0].mxu0
        %v692 = vadd.f32 0.0, %v691
        %v693 = vpop.f32.mrb[0].mxu0
        %694 = vmatprep.mubr.f32.mxu0 0.0
        %695 = vmatmul.mubr.f32.gmra.mrb[0].mxu0 %v586
        %v696 = vpop.f32.mrb[0].mxu0
        %v697 = vadd.f32 0.0, %v696
        %v698 = vpop.f32.mrb[0].mxu0
        %699 = vmatprep.mubr.f32.mxu0 0.0
        %700 = vmatmul.mubr.f32.gmra.mrb[0].mxu0 %v588
        %v701 = vpop.f32.mrb[0].mxu0
        %v702 = vadd.f32 0.0, %v701
        %v703 = vpop.f32.mrb[0].mxu0
        %704 = vmatprep.mubr.f32.mxu0 0.0
        %705 = vmatmul.mubr.f32.gmra.mrb[0].mxu0 %v590
        %v706 = vpop.f32.mrb[0].mxu0
        %v707 = vadd.f32 0.0, %v706
        %v708 = vpop.f32.mrb[0].mxu0
        %709 = vmatprep.mubr.f32.mxu0 0.0
        %710 = vmatmul.mubr.f32.gmra.mrb[0].mxu0 %v592
        %v711 = vpop.f32.mrb[0].mxu0
        %v712 = vadd.f32 0.0, %v711
        %v713 = vpop.f32.mrb[0].mxu0
        %714 = vdwg.mxu0
        %v715 = vld [vmem:[#allocation6] sm:$0xff]
        %v716 = vld [vmem:[#allocation6 + $0x8] sm:$0xff]
        %v717 = vld [vmem:[#allocation6 + $0x10] sm:$0xff]
        %v718 = vld [vmem:[#allocation6 + $0x18] sm:$0xff]
        %v719 = vld [vmem:[#allocation6 + $0x20] sm:$0xff]
        %v720 = vld [vmem:[#allocation6 + $0x28] sm:$0xff]
        %v721 = vld [vmem:[#allocation6 + $0x30] sm:$0xff]
        %v722 = vld [vmem:[#allocation6 + $0x38] sm:$0xff]
        %v723 = vmul.f32 %v715, %v677
        %v724 = vmul.f32 %v716, %v682
        %v725 = vmul.f32 %v717, %v687
        %v726 = vmul.f32 %v718, %v692
        %v727 = vmul.f32 %v719, %v697
        %v728 = vmul.f32 %v720, %v702
        %v729 = vmul.f32 %v721, %v707
        %v730 = vmul.f32 %v722, %v712
        %731 = vrot.lane.b32.xlu0 %v523, 112
        %v732 = vpop.permute.xlu0 %731
        %733 = vrot.lane.b32.xlu0 %v526, 112
        %v734 = vpop.permute.xlu0 %733
        %735 = vrot.lane.b32.xlu0 %v531, 112
        %v736 = vpop.permute.xlu0 %735
        %737 = vrot.lane.b32.xlu0 %v534, 112
        %v738 = vpop.permute.xlu0 %737
        %739 = vrot.lane.b32.xlu0 %v539, 112
        %v740 = vpop.permute.xlu0 %739
        %741 = vrot.lane.b32.xlu0 %v542, 112
        %v742 = vpop.permute.xlu0 %741
        %743 = vrot.lane.b32.xlu0 %v547, 112
        %v744 = vpop.permute.xlu0 %743
        %745 = vrot.lane.b32.xlu0 %v550, 112
        %v746 = vpop.permute.xlu0 %745
        %v756 = vsel %vm475, %v723, 0
        %v759 = vsel %vm475, %v724, 0
        %v762 = vsel %vm475, %v725, 0
        %v765 = vsel %vm475, %v726, 0
        %v768 = vsel %vm475, %v727, 0
        %v771 = vsel %vm475, %v728, 0
        %v774 = vsel %vm475, %v729, 0
        %v777 = vsel %vm475, %v730, 0
        %779 = vmatprep.subr.mxu0 0.0
        %780 = vmatpush1.msra.mxu0 %v732
        %781 = vmatprep.subr.mxu0 0.0
        %782 = vmatpush1.msra.mxu0 %v734
        %783 = vmatprep.subr.mxu0 0.0
        %784 = vmatpush1.msra.mxu0 %v736
        %785 = vmatprep.subr.mxu0 0.0
        %786 = vmatpush1.msra.mxu0 %v738
        %787 = vmatprep.subr.mxu0 0.0
        %788 = vmatpush1.msra.mxu0 %v740
        %789 = vmatprep.subr.mxu0 0.0
        %790 = vmatpush1.msra.mxu0 %v742
        %791 = vmatprep.subr.mxu0 0.0
        %792 = vmatpush1.msra.mxu0 %v744
        %793 = vmatprep.subr.mxu0 0.0
        %794 = vmatpush1.msra.mxu0 %v746
        %795 = vmatprep.subr.mxu0 0.0
        %796 = vmatpush1.msra.mxu0 0.0
        %797 = vmatprep.subr.mxu0 0.0
        %798 = vmatpush1.msra.mxu0 0.0
        %799 = vmatprep.subr.mxu0 0.0
        %800 = vmatpush1.msra.mxu0 0.0
        %801 = vmatprep.subr.mxu0 0.0
        %802 = vmatpush1.msra.mxu0 0.0
        %803 = vmatprep.subr.mxu0 0.0
        %804 = vmatpush1.msra.mxu0 0.0
        %805 = vmatprep.subr.mxu0 0.0
        %806 = vmatpush1.msra.mxu0 0.0
        %807 = vmatprep.subr.mxu0 0.0
        %808 = vmatpush1.msra.mxu0 0.0
        %809 = vmatprep.subr.mxu0 0.0
        %810 = vmatpush1.msra.mxu0 0.0
        %811 = vmatprep.subr.mxu0 0.0
        %812 = vmatpush1.msra.mxu0 0.0
        %813 = vmatprep.subr.mxu0 0.0
        %814 = vmatpush1.msra.mxu0 0.0
        %815 = vmatprep.subr.mxu0 0.0
        %816 = vmatpush1.msra.mxu0 0.0
        %817 = vmatprep.subr.mxu0 0.0
        %818 = vmatpush1.msra.mxu0 0.0
        %819 = vmatprep.subr.mxu0 0.0
        %820 = vmatpush1.msra.mxu0 0.0
        %821 = vmatprep.subr.mxu0 0.0
        %822 = vmatpush1.msra.mxu0 0.0
        %823 = vmatprep.subr.mxu0 0.0
        %824 = vmatpush1.msra.mxu0 0.0
        %825 = vmatprep.subr.mxu0 0.0
        %826 = vmatpush1.msra.mxu0 0.0
        %827 = vmatprep.subr.mxu0 0.0
        %828 = vmatpush1.msra.mxu0 0.0
        %829 = vmatprep.subr.mxu0 0.0
        %830 = vmatpush1.msra.mxu0 0.0
        %831 = vmatprep.subr.mxu0 0.0
        %832 = vmatpush1.msra.mxu0 0.0
        %833 = vmatprep.subr.mxu0 0.0
        %834 = vmatpush1.msra.mxu0 0.0
        %835 = vmatprep.subr.mxu0 0.0
        %836 = vmatpush1.msra.mxu0 0.0
        %837 = vmatprep.subr.mxu0 0.0
        %838 = vmatpush1.msra.mxu0 0.0
        %839 = vmatprep.subr.mxu0 0.0
        %840 = vmatpush1.msra.mxu0 0.0
        %841 = vmatprep.subr.mxu0 0.0
        %842 = vmatpush1.msra.mxu0 0.0
        %843 = vmatprep.mubr.f32.mxu0 0.0
        %844 = vmatmul.mubr.f32.gmra.mrb[0].mxu0 %v756
        %v845 = vpop.f32.mrb[0].mxu0
        %v846 = vadd.f32 0.0, %v845
        %v847 = vpop.f32.mrb[0].mxu0
        %848 = vmatprep.mubr.f32.mxu0 0.0
        %849 = vmatmul.mubr.f32.gmra.mrb[0].mxu0 %v759
        %v850 = vpop.f32.mrb[0].mxu0
        %v851 = vadd.f32 0.0, %v850
        %v852 = vpop.f32.mrb[0].mxu0
        %853 = vmatprep.mubr.f32.mxu0 0.0
        %854 = vmatmul.mubr.f32.gmra.mrb[0].mxu0 %v762
        %v855 = vpop.f32.mrb[0].mxu0
        %v856 = vadd.f32 0.0, %v855
        %v857 = vpop.f32.mrb[0].mxu0
        %858 = vmatprep.mubr.f32.mxu0 0.0
        %859 = vmatmul.mubr.f32.gmra.mrb[0].mxu0 %v765
        %v860 = vpop.f32.mrb[0].mxu0
        %v861 = vadd.f32 0.0, %v860
        %v862 = vpop.f32.mrb[0].mxu0
        %863 = vmatprep.mubr.f32.mxu0 0.0
        %864 = vmatmul.mubr.f32.gmra.mrb[0].mxu0 %v768
        %v865 = vpop.f32.mrb[0].mxu0
        %v866 = vadd.f32 0.0, %v865
        %v867 = vpop.f32.mrb[0].mxu0
        %868 = vmatprep.mubr.f32.mxu0 0.0
        %869 = vmatmul.mubr.f32.gmra.mrb[0].mxu0 %v771
        %v870 = vpop.f32.mrb[0].mxu0
        %v871 = vadd.f32 0.0, %v870
        %v872 = vpop.f32.mrb[0].mxu0
        %873 = vmatprep.mubr.f32.mxu0 0.0
        %874 = vmatmul.mubr.f32.gmra.mrb[0].mxu0 %v774
        %v875 = vpop.f32.mrb[0].mxu0
        %v876 = vadd.f32 0.0, %v875
        %v877 = vpop.f32.mrb[0].mxu0
        %878 = vmatprep.mubr.f32.mxu0 0.0
        %879 = vmatmul.mubr.f32.gmra.mrb[0].mxu0 %v777
        %v880 = vpop.f32.mrb[0].mxu0
        %v881 = vadd.f32 0.0, %v880
        %v882 = vpop.f32.mrb[0].mxu0
        %883 = vdwg.mxu0
        %v884 = vld [vmem:[#allocation7] sm:$0xff]
        %v885 = vld [vmem:[#allocation7 + $0x8] sm:$0xff]
        %v886 = vld [vmem:[#allocation9] sm:$0x1]
        %v888 = vlaneseq
        %v889 = vshrl.u32 %v888, 7
        %v890 = vsub.s32 0, %v889
        %v891 = vrot.slane %v886, %v890
        %v894 = vsel %vm577, %v846, 0
        %v897 = vsel %vm577, %v851, 0
        %v900 = vsel %vm577, %v856, 0
        %v903 = vsel %vm577, %v861, 0
        %v906 = vsel %vm577, %v866, 0
        %v909 = vsel %vm577, %v871, 0
        %v912 = vsel %vm577, %v876, 0
        %v915 = vsel %vm577, %v881, 0
        %917 = vmatprep.subr.mxu0 0.0
        %918 = vmatpush1.msra.mxu0 %v884
        %919 = vmatprep.subr.mxu0 0.0
        %920 = vmatpush1.msra.mxu0 %v885
        %921 = vmatprep.subr.mxu0 0.0
        %922 = vmatpush1.msra.mxu0 0.0
        %923 = vmatprep.subr.mxu0 0.0
        %924 = vmatpush1.msra.mxu0 0.0
        %925 = vmatprep.subr.mxu0 0.0
        %926 = vmatpush1.msra.mxu0 0.0
        %927 = vmatprep.subr.mxu0 0.0
        %928 = vmatpush1.msra.mxu0 0.0
        %929 = vmatprep.subr.mxu0 0.0
        %930 = vmatpush1.msra.mxu0 0.0
        %931 = vmatprep.subr.mxu0 0.0
        %932 = vmatpush1.msra.mxu0 0.0
        %933 = vmatprep.subr.mxu0 0.0
        %934 = vmatpush1.msra.mxu0 0.0
        %935 = vmatprep.subr.mxu0 0.0
        %936 = vmatpush1.msra.mxu0 0.0
        %937 = vmatprep.subr.mxu0 0.0
        %938 = vmatpush1.msra.mxu0 0.0
        %939 = vmatprep.subr.mxu0 0.0
        %940 = vmatpush1.msra.mxu0 0.0
        %941 = vmatprep.subr.mxu0 0.0
        %942 = vmatpush1.msra.mxu0 0.0
        %943 = vmatprep.subr.mxu0 0.0
        %944 = vmatpush1.msra.mxu0 0.0
        %945 = vmatprep.subr.mxu0 0.0
        %946 = vmatpush1.msra.mxu0 0.0
        %947 = vmatprep.subr.mxu0 0.0
        %948 = vmatpush1.msra.mxu0 0.0
        %949 = vmatprep.subr.mxu0 0.0
        %950 = vmatpush1.msra.mxu0 0.0
        %951 = vmatprep.subr.mxu0 0.0
        %952 = vmatpush1.msra.mxu0 0.0
        %953 = vmatprep.subr.mxu0 0.0
        %954 = vmatpush1.msra.mxu0 0.0
        %955 = vmatprep.subr.mxu0 0.0
        %956 = vmatpush1.msra.mxu0 0.0
        %957 = vmatprep.subr.mxu0 0.0
        %958 = vmatpush1.msra.mxu0 0.0
        %959 = vmatprep.subr.mxu0 0.0
        %960 = vmatpush1.msra.mxu0 0.0
        %961 = vmatprep.subr.mxu0 0.0
        %962 = vmatpush1.msra.mxu0 0.0
        %963 = vmatprep.subr.mxu0 0.0
        %964 = vmatpush1.msra.mxu0 0.0
        %965 = vmatprep.subr.mxu0 0.0
        %966 = vmatpush1.msra.mxu0 0.0
        %967 = vmatprep.subr.mxu0 0.0
        %968 = vmatpush1.msra.mxu0 0.0
        %969 = vmatprep.subr.mxu0 0.0
        %970 = vmatpush1.msra.mxu0 0.0
        %971 = vmatprep.subr.mxu0 0.0
        %972 = vmatpush1.msra.mxu0 0.0
        %973 = vmatprep.subr.mxu0 0.0
        %974 = vmatpush1.msra.mxu0 0.0
        %975 = vmatprep.subr.mxu0 0.0
        %976 = vmatpush1.msra.mxu0 0.0
        %977 = vmatprep.subr.mxu0 0.0
        %978 = vmatpush1.msra.mxu0 0.0
        %979 = vmatprep.subr.mxu0 0.0
        %980 = vmatpush1.msra.mxu0 0.0
        %981 = vmatprep.mubr.f32.mxu0 0.0
        %982 = vmatmul.mubr.f32.gmra.mrb[0].mxu0 %v894
        %v983 = vpop.f32.mrb[0].mxu0
        %v984 = vadd.f32 %v891, %v983
        %v985 = vpop.f32.mrb[0].mxu0
        %986 = vmatprep.mubr.f32.mxu0 0.0
        %987 = vmatmul.mubr.f32.gmra.mrb[0].mxu0 %v897
        %v988 = vpop.f32.mrb[0].mxu0
        %v989 = vadd.f32 %v891, %v988
        %v990 = vpop.f32.mrb[0].mxu0
        %991 = vmatprep.mubr.f32.mxu0 0.0
        %992 = vmatmul.mubr.f32.gmra.mrb[0].mxu0 %v900
        %v993 = vpop.f32.mrb[0].mxu0
        %v994 = vadd.f32 %v891, %v993
        %v995 = vpop.f32.mrb[0].mxu0
        %996 = vmatprep.mubr.f32.mxu0 0.0
        %997 = vmatmul.mubr.f32.gmra.mrb[0].mxu0 %v903
        %v998 = vpop.f32.mrb[0].mxu0
        %v999 = vadd.f32 %v891, %v998
        %v1000 = vpop.f32.mrb[0].mxu0
        %1001 = vmatprep.mubr.f32.mxu0 0.0
        %1002 = vmatmul.mubr.f32.gmra.mrb[0].mxu0 %v906
        %v1003 = vpop.f32.mrb[0].mxu0
        %v1004 = vadd.f32 %v891, %v1003
        %v1005 = vpop.f32.mrb[0].mxu0
        %1006 = vmatprep.mubr.f32.mxu0 0.0
        %1007 = vmatmul.mubr.f32.gmra.mrb[0].mxu0 %v909
        %v1008 = vpop.f32.mrb[0].mxu0
        %v1009 = vadd.f32 %v891, %v1008
        %v1010 = vpop.f32.mrb[0].mxu0
        %1011 = vmatprep.mubr.f32.mxu0 0.0
        %1012 = vmatmul.mubr.f32.gmra.mrb[0].mxu0 %v912
        %v1013 = vpop.f32.mrb[0].mxu0
        %v1014 = vadd.f32 %v891, %v1013
        %v1015 = vpop.f32.mrb[0].mxu0
        %1016 = vmatprep.mubr.f32.mxu0 0.0
        %1017 = vmatmul.mubr.f32.gmra.mrb[0].mxu0 %v915
        %v1018 = vpop.f32.mrb[0].mxu0
        %v1019 = vadd.f32 %v891, %v1018
        %v1020 = vpop.f32.mrb[0].mxu0
        %1021 = vdwg.mxu0
        %v1022 = vmul.f32 %v984, %v984
        %v1023 = vmul.f32 %v989, %v989
        %v1024 = vmul.f32 %v994, %v994
        %v1025 = vmul.f32 %v999, %v999
        %v1026 = vmul.f32 %v1004, %v1004
        %v1027 = vmul.f32 %v1009, %v1009
        %v1028 = vmul.f32 %v1014, %v1014
        %v1029 = vmul.f32 %v1019, %v1019
        %v1030 = vsel %vm475, %v1022, 0.0
        %1031 = vadd.xlane.f32.xlu0 %v1030
        %v1032 = vpop.xlane.xlu0 %1031
        %v1033 = vsel %vm475, %v1023, 0.0
        %1034 = vadd.xlane.f32.xlu0 %v1033
        %v1035 = vpop.xlane.xlu0 %1034
        %v1036 = vsel %vm475, %v1024, 0.0
        %1037 = vadd.xlane.f32.xlu0 %v1036
        %v1038 = vpop.xlane.xlu0 %1037
        %v1039 = vsel %vm475, %v1025, 0.0
        %1040 = vadd.xlane.f32.xlu0 %v1039
        %v1041 = vpop.xlane.xlu0 %1040
        %v1042 = vsel %vm475, %v1026, 0.0
        %1043 = vadd.xlane.f32.xlu0 %v1042
        %v1044 = vpop.xlane.xlu0 %1043
        %v1045 = vsel %vm475, %v1027, 0.0
        %1046 = vadd.xlane.f32.xlu0 %v1045
        %v1047 = vpop.xlane.xlu0 %1046
        %v1048 = vsel %vm475, %v1028, 0.0
        %1049 = vadd.xlane.f32.xlu0 %v1048
        %v1050 = vpop.xlane.xlu0 %1049
        %v1051 = vsel %vm475, %v1029, 0.0
        %1052 = vadd.xlane.f32.xlu0 %v1051
        %v1053 = vpop.xlane.xlu0 %1052
        %v1054 = vrcp.pop 64.0
        %v1055 = vmul.f32 %v1032, %v1054
        %v1056 = vmul.f32 %v1035, %v1054
        %v1057 = vmul.f32 %v1038, %v1054
        %v1058 = vmul.f32 %v1041, %v1054
        %v1059 = vmul.f32 %v1044, %v1054
        %v1060 = vmul.f32 %v1047, %v1054
        %v1061 = vmul.f32 %v1050, %v1054
        %v1062 = vmul.f32 %v1053, %v1054
        %v1063 = vadd.f32 %v1055, 0.0078125
        %v1064 = vadd.f32 %v1056, 0.0078125
        %v1065 = vadd.f32 %v1057, 0.0078125
        %v1066 = vadd.f32 %v1058, 0.0078125
        %v1067 = vadd.f32 %v1059, 0.0078125
        %v1068 = vadd.f32 %v1060, 0.0078125
        %v1069 = vadd.f32 %v1061, 0.0078125
        %v1070 = vadd.f32 %v1062, 0.0078125
        %v1071 = vrsqrt.pop %v1063
        %v1072 = vrsqrt.pop %v1064
        %v1073 = vrsqrt.pop %v1065
        %v1074 = vrsqrt.pop %v1066
        %v1075 = vrsqrt.pop %v1067
        %v1076 = vrsqrt.pop %v1068
        %v1077 = vrsqrt.pop %v1069
        %v1078 = vrsqrt.pop %v1070
        %v1079 = vmul.f32 %v984, %v1071
        %v1080 = vmul.f32 %v989, %v1072
        %v1081 = vmul.f32 %v994, %v1073
        %v1082 = vmul.f32 %v999, %v1074
        %v1083 = vmul.f32 %v1004, %v1075
        %v1084 = vmul.f32 %v1009, %v1076
        %v1085 = vmul.f32 %v1014, %v1077
        %v1086 = vmul.f32 %v1019, %v1078
        %v1087 = vld [vmem:[%s6] sm:$0x1]
        %v1089 = vlaneseq
        %v1090 = vshrl.u32 %v1089, 7
        %v1091 = vsub.s32 0, %v1090
        %v1092 = vrot.slane %v1087, %v1091
        %v1094 = vmul.f32 %v1079, %v1092
        %v1095 = vmul.f32 %v1080, %v1092
        %v1096 = vmul.f32 %v1081, %v1092
        %v1097 = vmul.f32 %v1082, %v1092
        %v1098 = vmul.f32 %v1083, %v1092
        %v1099 = vmul.f32 %v1084, %v1092
        %v1100 = vmul.f32 %v1085, %v1092
        %v1101 = vmul.f32 %v1086, %v1092
        %v1102 = vpack.c.bf16 %v1095, %v1094
        %v1103 = vpack.c.bf16 %v1097, %v1096
        %v1104 = vpack.c.bf16 %v1099, %v1098
        %v1105 = vpack.c.bf16 %v1101, %v1100
        %s1106 = scalar_lea.vmem [#allocation2], 32
        %v1107 = vld [vmem:[%s1106] sm:$0xf]
        %v1108 = vld [vmem:[%s1106 + $0x4] sm:$0xf]
        %v1109 = vld [vmem:[%s1106 + $0x8] sm:$0xf]
        %v1110 = vld [vmem:[%s1106 + $0xc] sm:$0xf]
        %v1111 = vld [vmem:[%s1106 + $0x10] sm:$0xf]
        %v1112 = vld [vmem:[%s1106 + $0x14] sm:$0xf]
        %v1113 = vld [vmem:[%s1106 + $0x18] sm:$0xf]
        %v1114 = vld [vmem:[%s1106 + $0x1c] sm:$0xf]
        %s1115 = scalar_lea.vmem [#allocation4], 1
        %v1116 = vld [vmem:[%s1115] sm:$0x1]
        %v1118 = vlaneseq
        %v1119 = vshrl.u32 %v1118, 7
        %v1120 = vsub.s32 0, %v1119
        %v1121 = vrot.slane %v1116, %v1120
        %v1131 = vunpack.c.l.b16 %v1107
        %v1132 = vunpack.c.l.b16 %v1108
        %v1133 = vunpack.c.l.b16 %v1109
        %v1134 = vunpack.c.l.b16 %v1110
        %v1135 = vunpack.c.l.b16 %v1111
        %v1136 = vunpack.c.l.b16 %v1112
        %v1137 = vunpack.c.l.b16 %v1113
        %v1138 = vunpack.c.l.b16 %v1114
        %v1139 = vpack.c.b16 %v1132, %v1131
        %v1140 = vpack.c.b16 %v1134, %v1133
        %v1141 = vpack.c.b16 %v1136, %v1135
        %v1142 = vpack.c.b16 %v1138, %v1137
        %v1148 = vsel %vm475, %v1102, 0
        %v1151 = vsel %vm475, %v1103, 0
        %v1154 = vsel %vm475, %v1104, 0
        %v1157 = vsel %vm475, %v1105, 0
        %1159 = vmatprep.subr.bf16.mxu0 0
        %1160 = vmatpush1.bf16.msra.mxu0 %v1139
        %1161 = vmatprep.subr.bf16.mxu0 0
        %1162 = vmatpush1.bf16.msra.mxu0 %v1140
        %1163 = vmatprep.subr.bf16.mxu0 0
        %1164 = vmatpush1.bf16.msra.mxu0 %v1141
        %1165 = vmatprep.subr.bf16.mxu0 0
        %1166 = vmatpush1.bf16.msra.mxu0 %v1142
        %1167 = vmatprep.subr.bf16.mxu0 0
        %1168 = vmatpush1.bf16.msra.mxu0 0
        %1169 = vmatprep.subr.bf16.mxu0 0
        %1170 = vmatpush1.bf16.msra.mxu0 0
        %1171 = vmatprep.subr.bf16.mxu0 0
        %1172 = vmatpush1.bf16.msra.mxu0 0
        %1173 = vmatprep.subr.bf16.mxu0 0
        %1174 = vmatpush1.bf16.msra.mxu0 0
        %1175 = vmatprep.subr.bf16.mxu0 0
        %1176 = vmatpush1.bf16.msra.mxu0 0
        %1177 = vmatprep.subr.bf16.mxu0 0
        %1178 = vmatpush1.bf16.msra.mxu0 0
        %1179 = vmatprep.subr.bf16.mxu0 0
        %1180 = vmatpush1.bf16.msra.mxu0 0
        %1181 = vmatprep.subr.bf16.mxu0 0
        %1182 = vmatpush1.bf16.msra.mxu0 0
        %1183 = vmatprep.subr.bf16.mxu0 0
        %1184 = vmatpush1.bf16.msra.mxu0 0
        %1185 = vmatprep.subr.bf16.mxu0 0
        %1186 = vmatpush1.bf16.msra.mxu0 0
        %1187 = vmatprep.subr.bf16.mxu0 0
        %1188 = vmatpush1.bf16.msra.mxu0 0
        %1189 = vmatprep.subr.bf16.mxu0 0
        %1190 = vmatpush1.bf16.msra.mxu0 0
        %1191 = vmatprep.mubr.bf16.mxu0 0
        %1192 = vmatmul.mubr.bf16.gmra.mrb[0].mxu0 %v1148
        %v1193 = vpop.f32.mrb[0].mxu0
        %v1194 = vadd.f32 %v1121, %v1193
        %v1195 = vpop.f32.mrb[0].mxu0
        %v1196 = vpop.f32.mrb[0].mxu0
        %v1197 = vadd.f32 %v1121, %v1196
        %v1198 = vpop.f32.mrb[0].mxu0
        %1199 = vmatprep.mubr.bf16.mxu0 0
        %1200 = vmatmul.mubr.bf16.gmra.mrb[0].mxu0 %v1151
        %v1201 = vpop.f32.mrb[0].mxu0
        %v1202 = vadd.f32 %v1121, %v1201
        %v1203 = vpop.f32.mrb[0].mxu0
        %v1204 = vpop.f32.mrb[0].mxu0
        %v1205 = vadd.f32 %v1121, %v1204
        %v1206 = vpop.f32.mrb[0].mxu0
        %1207 = vmatprep.mubr.bf16.mxu0 0
        %1208 = vmatmul.mubr.bf16.gmra.mrb[0].mxu0 %v1154
        %v1209 = vpop.f32.mrb[0].mxu0
        %v1210 = vadd.f32 %v1121, %v1209
        %v1211 = vpop.f32.mrb[0].mxu0
        %v1212 = vpop.f32.mrb[0].mxu0
        %v1213 = vadd.f32 %v1121, %v1212
        %v1214 = vpop.f32.mrb[0].mxu0
        %1215 = vmatprep.mubr.bf16.mxu0 0
        %1216 = vmatmul.mubr.bf16.gmra.mrb[0].mxu0 %v1157
        %v1217 = vpop.f32.mrb[0].mxu0
        %v1218 = vadd.f32 %v1121, %v1217
        %v1219 = vpop.f32.mrb[0].mxu0
        %v1220 = vpop.f32.mrb[0].mxu0
        %v1221 = vadd.f32 %v1121, %v1220
        %v1222 = vpop.f32.mrb[0].mxu0
        %1223 = vdwg.mxu0
        %1232 = vrot.lane.b32.xlu0 %v1194, 96
        %v1233 = vpop.permute.xlu0 %1232
        %1234 = vrot.lane.b32.xlu0 %v1197, 96
        %v1235 = vpop.permute.xlu0 %1234
        %1236 = vrot.lane.b32.xlu0 %v1202, 96
        %v1237 = vpop.permute.xlu0 %1236
        %1238 = vrot.lane.b32.xlu0 %v1205, 96
        %v1239 = vpop.permute.xlu0 %1238
        %1240 = vrot.lane.b32.xlu0 %v1210, 96
        %v1241 = vpop.permute.xlu0 %1240
        %1242 = vrot.lane.b32.xlu0 %v1213, 96
        %v1243 = vpop.permute.xlu0 %1242
        %1244 = vrot.lane.b32.xlu0 %v1218, 96
        %v1245 = vpop.permute.xlu0 %1244
        %1246 = vrot.lane.b32.xlu0 %v1221, 96
        %v1247 = vpop.permute.xlu0 %1246
        %v1248 = vsel %vm577, %v1194, 0
        %v1250 = vsel %vm577, %v1197, 0
        %v1252 = vsel %vm577, %v1202, 0
        %v1254 = vsel %vm577, %v1205, 0
        %v1256 = vsel %vm577, %v1210, 0
        %v1258 = vsel %vm577, %v1213, 0
        %v1260 = vsel %vm577, %v1218, 0
        %v1262 = vsel %vm577, %v1221, 0
        %v1264 = vsel %vm577, %v1233, 0
        %v1266 = vsel %vm577, %v1235, 0
        %v1268 = vsel %vm577, %v1237, 0
        %v1270 = vsel %vm577, %v1239, 0
        %v1272 = vsel %vm577, %v1241, 0
        %v1274 = vsel %vm577, %v1243, 0
        %v1276 = vsel %vm577, %v1245, 0
        %v1278 = vsel %vm577, %v1247, 0
        %1280 = vmatprep.subr.mxu0 0.0
        %1281 = vmatpush1.xpose.msra.mxu0 %v1264
        %1282 = vmatprep.subr.mxu0 0.0
        %1283 = vmatpush1.xpose.msra.mxu0 %v1266
        %1284 = vmatprep.subr.mxu0 0.0
        %1285 = vmatpush1.xpose.msra.mxu0 %v1268
        %1286 = vmatprep.subr.mxu0 0.0
        %1287 = vmatpush1.xpose.msra.mxu0 %v1270
        %1288 = vmatprep.subr.mxu0 0.0
        %1289 = vmatpush1.xpose.msra.mxu0 %v1272
        %1290 = vmatprep.subr.mxu0 0.0
        %1291 = vmatpush1.xpose.msra.mxu0 %v1274
        %1292 = vmatprep.subr.mxu0 0.0
        %1293 = vmatpush1.xpose.msra.mxu0 %v1276
        %1294 = vmatprep.subr.mxu0 0.0
        %1295 = vmatpush1.xpose.msra.mxu0 %v1278
        %1296 = vmatprep.subr.mxu0 0.0
        %1297 = vmatpush1.xpose.msra.mxu0 0.0
        %1298 = vmatprep.subr.mxu0 0.0
        %1299 = vmatpush1.xpose.msra.mxu0 0.0
        %1300 = vmatprep.subr.mxu0 0.0
        %1301 = vmatpush1.xpose.msra.mxu0 0.0
        %1302 = vmatprep.subr.mxu0 0.0
        %1303 = vmatpush1.xpose.msra.mxu0 0.0
        %1304 = vmatprep.subr.mxu0 0.0
        %1305 = vmatpush1.xpose.msra.mxu0 0.0
        %1306 = vmatprep.subr.mxu0 0.0
        %1307 = vmatpush1.xpose.msra.mxu0 0.0
        %1308 = vmatprep.subr.mxu0 0.0
        %1309 = vmatpush1.xpose.msra.mxu0 0.0
        %1310 = vmatprep.subr.mxu0 0.0
        %1311 = vmatpush1.xpose.msra.mxu0 0.0
        %1312 = vmatprep.subr.mxu0 0.0
        %1313 = vmatpush1.xpose.msra.mxu0 0.0
        %1314 = vmatprep.subr.mxu0 0.0
        %1315 = vmatpush1.xpose.msra.mxu0 0.0
        %1316 = vmatprep.subr.mxu0 0.0
        %1317 = vmatpush1.xpose.msra.mxu0 0.0
        %1318 = vmatprep.subr.mxu0 0.0
        %1319 = vmatpush1.xpose.msra.mxu0 0.0
        %1320 = vmatprep.subr.mxu0 0.0
        %1321 = vmatpush1.xpose.msra.mxu0 0.0
        %1322 = vmatprep.subr.mxu0 0.0
        %1323 = vmatpush1.xpose.msra.mxu0 0.0
        %1324 = vmatprep.subr.mxu0 0.0
        %1325 = vmatpush1.xpose.msra.mxu0 0.0
        %1326 = vmatprep.subr.mxu0 0.0
        %1327 = vmatpush1.xpose.msra.mxu0 0.0
        %1328 = vmatprep.subr.mxu0 0.0
        %1329 = vmatpush1.xpose.msra.mxu0 0.0
        %1330 = vmatprep.subr.mxu0 0.0
        %1331 = vmatpush1.xpose.msra.mxu0 0.0
        %1332 = vmatprep.subr.mxu0 0.0
        %1333 = vmatpush1.xpose.msra.mxu0 0.0
        %1334 = vmatprep.subr.mxu0 0.0
        %1335 = vmatpush1.xpose.msra.mxu0 0.0
        %1336 = vmatprep.subr.mxu0 0.0
        %1337 = vmatpush1.xpose.msra.mxu0 0.0
        %1338 = vmatprep.subr.mxu0 0.0
        %1339 = vmatpush1.xpose.msra.mxu0 0.0
        %1340 = vmatprep.subr.mxu0 0.0
        %1341 = vmatpush1.xpose.msra.mxu0 0.0
        %1342 = vmatprep.subr.mxu0 0.0
        %1343 = vmatpush1.xpose.msra.mxu0 0.0
        %1344 = vmatprep.mubr.f32.mxu0 0.0
        %1345 = vmatmul.mubr.f32.gmra.mrb[0].mxu0 %v1248
        %v1346 = vpop.f32.mrb[0].mxu0
        %v1347 = vadd.f32 0.0, %v1346
        %v1348 = vpop.f32.mrb[0].mxu0
        %1349 = vmatprep.mubr.f32.mxu0 0.0
        %1350 = vmatmul.mubr.f32.gmra.mrb[0].mxu0 %v1250
        %v1351 = vpop.f32.mrb[0].mxu0
        %v1352 = vadd.f32 0.0, %v1351
        %v1353 = vpop.f32.mrb[0].mxu0
        %1354 = vmatprep.mubr.f32.mxu0 0.0
        %1355 = vmatmul.mubr.f32.gmra.mrb[0].mxu0 %v1252
        %v1356 = vpop.f32.mrb[0].mxu0
        %v1357 = vadd.f32 0.0, %v1356
        %v1358 = vpop.f32.mrb[0].mxu0
        %1359 = vmatprep.mubr.f32.mxu0 0.0
        %1360 = vmatmul.mubr.f32.gmra.mrb[0].mxu0 %v1254
        %v1361 = vpop.f32.mrb[0].mxu0
        %v1362 = vadd.f32 0.0, %v1361
        %v1363 = vpop.f32.mrb[0].mxu0
        %1364 = vmatprep.mubr.f32.mxu0 0.0
        %1365 = vmatmul.mubr.f32.gmra.mrb[0].mxu0 %v1256
        %v1366 = vpop.f32.mrb[0].mxu0
        %v1367 = vadd.f32 0.0, %v1366
        %v1368 = vpop.f32.mrb[0].mxu0
        %1369 = vmatprep.mubr.f32.mxu0 0.0
        %1370 = vmatmul.mubr.f32.gmra.mrb[0].mxu0 %v1258
        %v1371 = vpop.f32.mrb[0].mxu0
        %v1372 = vadd.f32 0.0, %v1371
        %v1373 = vpop.f32.mrb[0].mxu0
        %1374 = vmatprep.mubr.f32.mxu0 0.0
        %1375 = vmatmul.mubr.f32.gmra.mrb[0].mxu0 %v1260
        %v1376 = vpop.f32.mrb[0].mxu0
        %v1377 = vadd.f32 0.0, %v1376
        %v1378 = vpop.f32.mrb[0].mxu0
        %1379 = vmatprep.mubr.f32.mxu0 0.0
        %1380 = vmatmul.mubr.f32.gmra.mrb[0].mxu0 %v1262
        %v1381 = vpop.f32.mrb[0].mxu0
        %v1382 = vadd.f32 0.0, %v1381
        %v1383 = vpop.f32.mrb[0].mxu0
        %1384 = vdwg.mxu0
        %s1385 = scalar_lea.vmem [#allocation6], 64
        %v1386 = vld [vmem:[%s1385] sm:$0xff]
        %v1387 = vld [vmem:[%s1385 + $0x8] sm:$0xff]
        %v1388 = vld [vmem:[%s1385 + $0x10] sm:$0xff]
        %v1389 = vld [vmem:[%s1385 + $0x18] sm:$0xff]
        %v1390 = vld [vmem:[%s1385 + $0x20] sm:$0xff]
        %v1391 = vld [vmem:[%s1385 + $0x28] sm:$0xff]
        %v1392 = vld [vmem:[%s1385 + $0x30] sm:$0xff]
        %v1393 = vld [vmem:[%s1385 + $0x38] sm:$0xff]
        %v1394 = vmul.f32 %v1386, %v1347
        %v1395 = vmul.f32 %v1387, %v1352
        %v1396 = vmul.f32 %v1388, %v1357
        %v1397 = vmul.f32 %v1389, %v1362
        %v1398 = vmul.f32 %v1390, %v1367
        %v1399 = vmul.f32 %v1391, %v1372
        %v1400 = vmul.f32 %v1392, %v1377
        %v1401 = vmul.f32 %v1393, %v1382
        %1402 = vrot.lane.b32.xlu0 %v1194, 112
        %v1403 = vpop.permute.xlu0 %1402
        %1404 = vrot.lane.b32.xlu0 %v1197, 112
        %v1405 = vpop.permute.xlu0 %1404
        %1406 = vrot.lane.b32.xlu0 %v1202, 112
        %v1407 = vpop.permute.xlu0 %1406
        %1408 = vrot.lane.b32.xlu0 %v1205, 112
        %v1409 = vpop.permute.xlu0 %1408
        %1410 = vrot.lane.b32.xlu0 %v1210, 112
        %v1411 = vpop.permute.xlu0 %1410
        %1412 = vrot.lane.b32.xlu0 %v1213, 112
        %v1413 = vpop.permute.xlu0 %1412
        %1414 = vrot.lane.b32.xlu0 %v1218, 112
        %v1415 = vpop.permute.xlu0 %1414
        %1416 = vrot.lane.b32.xlu0 %v1221, 112
        %v1417 = vpop.permute.xlu0 %1416
        %v1427 = vsel %vm475, %v1394, 0
        %v1430 = vsel %vm475, %v1395, 0
        %v1433 = vsel %vm475, %v1396, 0
        %v1436 = vsel %vm475, %v1397, 0
        %v1439 = vsel %vm475, %v1398, 0
        %v1442 = vsel %vm475, %v1399, 0
        %v1445 = vsel %vm475, %v1400, 0
        %v1448 = vsel %vm475, %v1401, 0
        %1450 = vmatprep.subr.mxu0 0.0
        %1451 = vmatpush1.msra.mxu0 %v1403
        %1452 = vmatprep.subr.mxu0 0.0
        %1453 = vmatpush1.msra.mxu0 %v1405
        %1454 = vmatprep.subr.mxu0 0.0
        %1455 = vmatpush1.msra.mxu0 %v1407
        %1456 = vmatprep.subr.mxu0 0.0
        %1457 = vmatpush1.msra.mxu0 %v1409
        %1458 = vmatprep.subr.mxu0 0.0
        %1459 = vmatpush1.msra.mxu0 %v1411
        %1460 = vmatprep.subr.mxu0 0.0
        %1461 = vmatpush1.msra.mxu0 %v1413
        %1462 = vmatprep.subr.mxu0 0.0
        %1463 = vmatpush1.msra.mxu0 %v1415
        %1464 = vmatprep.subr.mxu0 0.0
        %1465 = vmatpush1.msra.mxu0 %v1417
        %1466 = vmatprep.subr.mxu0 0.0
        %1467 = vmatpush1.msra.mxu0 0.0
        %1468 = vmatprep.subr.mxu0 0.0
        %1469 = vmatpush1.msra.mxu0 0.0
        %1470 = vmatprep.subr.mxu0 0.0
        %1471 = vmatpush1.msra.mxu0 0.0
        %1472 = vmatprep.subr.mxu0 0.0
        %1473 = vmatpush1.msra.mxu0 0.0
        %1474 = vmatprep.subr.mxu0 0.0
        %1475 = vmatpush1.msra.mxu0 0.0
        %1476 = vmatprep.subr.mxu0 0.0
        %1477 = vmatpush1.msra.mxu0 0.0
        %1478 = vmatprep.subr.mxu0 0.0
        %1479 = vmatpush1.msra.mxu0 0.0
        %1480 = vmatprep.subr.mxu0 0.0
        %1481 = vmatpush1.msra.mxu0 0.0
        %1482 = vmatprep.subr.mxu0 0.0
        %1483 = vmatpush1.msra.mxu0 0.0
        %1484 = vmatprep.subr.mxu0 0.0
        %1485 = vmatpush1.msra.mxu0 0.0
        %1486 = vmatprep.subr.mxu0 0.0
        %1487 = vmatpush1.msra.mxu0 0.0
        %1488 = vmatprep.subr.mxu0 0.0
        %1489 = vmatpush1.msra.mxu0 0.0
        %1490 = vmatprep.subr.mxu0 0.0
        %1491 = vmatpush1.msra.mxu0 0.0
        %1492 = vmatprep.subr.mxu0 0.0
        %1493 = vmatpush1.msra.mxu0 0.0
        %1494 = vmatprep.subr.mxu0 0.0
        %1495 = vmatpush1.msra.mxu0 0.0
        %1496 = vmatprep.subr.mxu0 0.0
        %1497 = vmatpush1.msra.mxu0 0.0
        %1498 = vmatprep.subr.mxu0 0.0
        %1499 = vmatpush1.msra.mxu0 0.0
        %1500 = vmatprep.subr.mxu0 0.0
        %1501 = vmatpush1.msra.mxu0 0.0
        %1502 = vmatprep.subr.mxu0 0.0
        %1503 = vmatpush1.msra.mxu0 0.0
        %1504 = vmatprep.subr.mxu0 0.0
        %1505 = vmatpush1.msra.mxu0 0.0
        %1506 = vmatprep.subr.mxu0 0.0
        %1507 = vmatpush1.msra.mxu0 0.0
        %1508 = vmatprep.subr.mxu0 0.0
        %1509 = vmatpush1.msra.mxu0 0.0
        %1510 = vmatprep.subr.mxu0 0.0
        %1511 = vmatpush1.msra.mxu0 0.0
        %1512 = vmatprep.subr.mxu0 0.0
        %1513 = vmatpush1.msra.mxu0 0.0
        %1514 = vmatprep.mubr.f32.mxu0 0.0
        %1515 = vmatmul.mubr.f32.gmra.mrb[0].mxu0 %v1427
        %v1516 = vpop.f32.mrb[0].mxu0
        %v1517 = vadd.f32 0.0, %v1516
        %v1518 = vpop.f32.mrb[0].mxu0
        %1519 = vmatprep.mubr.f32.mxu0 0.0
        %1520 = vmatmul.mubr.f32.gmra.mrb[0].mxu0 %v1430
        %v1521 = vpop.f32.mrb[0].mxu0
        %v1522 = vadd.f32 0.0, %v1521
        %v1523 = vpop.f32.mrb[0].mxu0
        %1524 = vmatprep.mubr.f32.mxu0 0.0
        %1525 = vmatmul.mubr.f32.gmra.mrb[0].mxu0 %v1433
        %v1526 = vpop.f32.mrb[0].mxu0
        %v1527 = vadd.f32 0.0, %v1526
        %v1528 = vpop.f32.mrb[0].mxu0
        %1529 = vmatprep.mubr.f32.mxu0 0.0
        %1530 = vmatmul.mubr.f32.gmra.mrb[0].mxu0 %v1436
        %v1531 = vpop.f32.mrb[0].mxu0
        %v1532 = vadd.f32 0.0, %v1531
        %v1533 = vpop.f32.mrb[0].mxu0
        %1534 = vmatprep.mubr.f32.mxu0 0.0
        %1535 = vmatmul.mubr.f32.gmra.mrb[0].mxu0 %v1439
        %v1536 = vpop.f32.mrb[0].mxu0
        %v1537 = vadd.f32 0.0, %v1536
        %v1538 = vpop.f32.mrb[0].mxu0
        %1539 = vmatprep.mubr.f32.mxu0 0.0
        %1540 = vmatmul.mubr.f32.gmra.mrb[0].mxu0 %v1442
        %v1541 = vpop.f32.mrb[0].mxu0
        %v1542 = vadd.f32 0.0, %v1541
        %v1543 = vpop.f32.mrb[0].mxu0
        %1544 = vmatprep.mubr.f32.mxu0 0.0
        %1545 = vmatmul.mubr.f32.gmra.mrb[0].mxu0 %v1445
        %v1546 = vpop.f32.mrb[0].mxu0
        %v1547 = vadd.f32 0.0, %v1546
        %v1548 = vpop.f32.mrb[0].mxu0
        %1549 = vmatprep.mubr.f32.mxu0 0.0
        %1550 = vmatmul.mubr.f32.gmra.mrb[0].mxu0 %v1448
        %v1551 = vpop.f32.mrb[0].mxu0
        %v1552 = vadd.f32 0.0, %v1551
        %v1553 = vpop.f32.mrb[0].mxu0
        %1554 = vdwg.mxu0
        %s1555 = scalar_lea.vmem [#allocation7], 16
        %v1556 = vld [vmem:[%s1555] sm:$0xff]
        %v1557 = vld [vmem:[%s1555 + $0x8] sm:$0xff]
        %s1558 = scalar_lea.vmem [#allocation9], 1
        %v1559 = vld [vmem:[%s1558] sm:$0x1]
        %v1561 = vlaneseq
        %v1562 = vshrl.u32 %v1561, 7
        %v1563 = vsub.s32 0, %v1562
        %v1564 = vrot.slane %v1559, %v1563
        %v1567 = vsel %vm577, %v1517, 0
        %v1570 = vsel %vm577, %v1522, 0
        %v1573 = vsel %vm577, %v1527, 0
        %v1576 = vsel %vm577, %v1532, 0
        %v1579 = vsel %vm577, %v1537, 0
        %v1582 = vsel %vm577, %v1542, 0
        %v1585 = vsel %vm577, %v1547, 0
        %v1588 = vsel %vm577, %v1552, 0
        %1590 = vmatprep.subr.mxu0 0.0
        %1591 = vmatpush1.msra.mxu0 %v1556
        %1592 = vmatprep.subr.mxu0 0.0
        %1593 = vmatpush1.msra.mxu0 %v1557
        %1594 = vmatprep.subr.mxu0 0.0
        %1595 = vmatpush1.msra.mxu0 0.0
        %1596 = vmatprep.subr.mxu0 0.0
        %1597 = vmatpush1.msra.mxu0 0.0
        %1598 = vmatprep.subr.mxu0 0.0
        %1599 = vmatpush1.msra.mxu0 0.0
        %1600 = vmatprep.subr.mxu0 0.0
        %1601 = vmatpush1.msra.mxu0 0.0
        %1602 = vmatprep.subr.mxu0 0.0
        %1603 = vmatpush1.msra.mxu0 0.0
        %1604 = vmatprep.subr.mxu0 0.0
        %1605 = vmatpush1.msra.mxu0 0.0
        %1606 = vmatprep.subr.mxu0 0.0
        %1607 = vmatpush1.msra.mxu0 0.0
        %1608 = vmatprep.subr.mxu0 0.0
        %1609 = vmatpush1.msra.mxu0 0.0
        %1610 = vmatprep.subr.mxu0 0.0
        %1611 = vmatpush1.msra.mxu0 0.0
        %1612 = vmatprep.subr.mxu0 0.0
        %1613 = vmatpush1.msra.mxu0 0.0
        %1614 = vmatprep.subr.mxu0 0.0
        %1615 = vmatpush1.msra.mxu0 0.0
        %1616 = vmatprep.subr.mxu0 0.0
        %1617 = vmatpush1.msra.mxu0 0.0
        %1618 = vmatprep.subr.mxu0 0.0
        %1619 = vmatpush1.msra.mxu0 0.0
        %1620 = vmatprep.subr.mxu0 0.0
        %1621 = vmatpush1.msra.mxu0 0.0
        %1622 = vmatprep.subr.mxu0 0.0
        %1623 = vmatpush1.msra.mxu0 0.0
        %1624 = vmatprep.subr.mxu0 0.0
        %1625 = vmatpush1.msra.mxu0 0.0
        %1626 = vmatprep.subr.mxu0 0.0
        %1627 = vmatpush1.msra.mxu0 0.0
        %1628 = vmatprep.subr.mxu0 0.0
        %1629 = vmatpush1.msra.mxu0 0.0
        %1630 = vmatprep.subr.mxu0 0.0
        %1631 = vmatpush1.msra.mxu0 0.0
        %1632 = vmatprep.subr.mxu0 0.0
        %1633 = vmatpush1.msra.mxu0 0.0
        %1634 = vmatprep.subr.mxu0 0.0
        %1635 = vmatpush1.msra.mxu0 0.0
        %1636 = vmatprep.subr.mxu0 0.0
        %1637 = vmatpush1.msra.mxu0 0.0
        %1638 = vmatprep.subr.mxu0 0.0
        %1639 = vmatpush1.msra.mxu0 0.0
        %1640 = vmatprep.subr.mxu0 0.0
        %1641 = vmatpush1.msra.mxu0 0.0
        %1642 = vmatprep.subr.mxu0 0.0
        %1643 = vmatpush1.msra.mxu0 0.0
        %1644 = vmatprep.subr.mxu0 0.0
        %1645 = vmatpush1.msra.mxu0 0.0
        %1646 = vmatprep.subr.mxu0 0.0
        %1647 = vmatpush1.msra.mxu0 0.0
        %1648 = vmatprep.subr.mxu0 0.0
        %1649 = vmatpush1.msra.mxu0 0.0
        %1650 = vmatprep.subr.mxu0 0.0
        %1651 = vmatpush1.msra.mxu0 0.0
        %1652 = vmatprep.subr.mxu0 0.0
        %1653 = vmatpush1.msra.mxu0 0.0
        %1654 = vmatprep.mubr.f32.mxu0 0.0
        %1655 = vmatmul.mubr.f32.gmra.mrb[0].mxu0 %v1567
        %v1656 = vpop.f32.mrb[0].mxu0
        %v1657 = vadd.f32 %v1564, %v1656
        %v1658 = vpop.f32.mrb[0].mxu0
        %1659 = vmatprep.mubr.f32.mxu0 0.0
        %1660 = vmatmul.mubr.f32.gmra.mrb[0].mxu0 %v1570
        %v1661 = vpop.f32.mrb[0].mxu0
        %v1662 = vadd.f32 %v1564, %v1661
        %v1663 = vpop.f32.mrb[0].mxu0
        %1664 = vmatprep.mubr.f32.mxu0 0.0
        %1665 = vmatmul.mubr.f32.gmra.mrb[0].mxu0 %v1573
        %v1666 = vpop.f32.mrb[0].mxu0
        %v1667 = vadd.f32 %v1564, %v1666
        %v1668 = vpop.f32.mrb[0].mxu0
        %1669 = vmatprep.mubr.f32.mxu0 0.0
        %1670 = vmatmul.mubr.f32.gmra.mrb[0].mxu0 %v1576
        %v1671 = vpop.f32.mrb[0].mxu0
        %v1672 = vadd.f32 %v1564, %v1671
        %v1673 = vpop.f32.mrb[0].mxu0
        %1674 = vmatprep.mubr.f32.mxu0 0.0
        %1675 = vmatmul.mubr.f32.gmra.mrb[0].mxu0 %v1579
        %v1676 = vpop.f32.mrb[0].mxu0
        %v1677 = vadd.f32 %v1564, %v1676
        %v1678 = vpop.f32.mrb[0].mxu0
        %1679 = vmatprep.mubr.f32.mxu0 0.0
        %1680 = vmatmul.mubr.f32.gmra.mrb[0].mxu0 %v1582
        %v1681 = vpop.f32.mrb[0].mxu0
        %v1682 = vadd.f32 %v1564, %v1681
        %v1683 = vpop.f32.mrb[0].mxu0
        %1684 = vmatprep.mubr.f32.mxu0 0.0
        %1685 = vmatmul.mubr.f32.gmra.mrb[0].mxu0 %v1585
        %v1686 = vpop.f32.mrb[0].mxu0
        %v1687 = vadd.f32 %v1564, %v1686
        %v1688 = vpop.f32.mrb[0].mxu0
        %1689 = vmatprep.mubr.f32.mxu0 0.0
        %1690 = vmatmul.mubr.f32.gmra.mrb[0].mxu0 %v1588
        %v1691 = vpop.f32.mrb[0].mxu0
        %v1692 = vadd.f32 %v1564, %v1691
        %v1693 = vpop.f32.mrb[0].mxu0
        %1694 = vdwg.mxu0
        %v1695 = vmul.f32 %v1657, %v1657
        %v1696 = vmul.f32 %v1662, %v1662
        %v1697 = vmul.f32 %v1667, %v1667
        %v1698 = vmul.f32 %v1672, %v1672
        %v1699 = vmul.f32 %v1677, %v1677
        %v1700 = vmul.f32 %v1682, %v1682
        %v1701 = vmul.f32 %v1687, %v1687
        %v1702 = vmul.f32 %v1692, %v1692
        %v1703 = vsel %vm475, %v1695, 0.0
        %1704 = vadd.xlane.f32.xlu0 %v1703
        %v1705 = vpop.xlane.xlu0 %1704
        %v1706 = vsel %vm475, %v1696, 0.0
        %1707 = vadd.xlane.f32.xlu0 %v1706
        %v1708 = vpop.xlane.xlu0 %1707
        %v1709 = vsel %vm475, %v1697, 0.0
        %1710 = vadd.xlane.f32.xlu0 %v1709
        %v1711 = vpop.xlane.xlu0 %1710
        %v1712 = vsel %vm475, %v1698, 0.0
        %1713 = vadd.xlane.f32.xlu0 %v1712
        %v1714 = vpop.xlane.xlu0 %1713
        %v1715 = vsel %vm475, %v1699, 0.0
        %1716 = vadd.xlane.f32.xlu0 %v1715
        %v1717 = vpop.xlane.xlu0 %1716
        %v1718 = vsel %vm475, %v1700, 0.0
        %1719 = vadd.xlane.f32.xlu0 %v1718
        %v1720 = vpop.xlane.xlu0 %1719
        %v1721 = vsel %vm475, %v1701, 0.0
        %1722 = vadd.xlane.f32.xlu0 %v1721
        %v1723 = vpop.xlane.xlu0 %1722
        %v1724 = vsel %vm475, %v1702, 0.0
        %1725 = vadd.xlane.f32.xlu0 %v1724
        %v1726 = vpop.xlane.xlu0 %1725
        %v1727 = vmul.f32 %v1705, %v1054
        %v1728 = vmul.f32 %v1708, %v1054
        %v1729 = vmul.f32 %v1711, %v1054
        %v1730 = vmul.f32 %v1714, %v1054
        %v1731 = vmul.f32 %v1717, %v1054
        %v1732 = vmul.f32 %v1720, %v1054
        %v1733 = vmul.f32 %v1723, %v1054
        %v1734 = vmul.f32 %v1726, %v1054
        %v1735 = vadd.f32 %v1727, 0.0078125
        %v1736 = vadd.f32 %v1728, 0.0078125
        %v1737 = vadd.f32 %v1729, 0.0078125
        %v1738 = vadd.f32 %v1730, 0.0078125
        %v1739 = vadd.f32 %v1731, 0.0078125
        %v1740 = vadd.f32 %v1732, 0.0078125
        %v1741 = vadd.f32 %v1733, 0.0078125
        %v1742 = vadd.f32 %v1734, 0.0078125
        %v1743 = vrsqrt.pop %v1735
        %v1744 = vrsqrt.pop %v1736
        %v1745 = vrsqrt.pop %v1737
        %v1746 = vrsqrt.pop %v1738
        %v1747 = vrsqrt.pop %v1739
        %v1748 = vrsqrt.pop %v1740
        %v1749 = vrsqrt.pop %v1741
        %v1750 = vrsqrt.pop %v1742
        %v1751 = vmul.f32 %v1657, %v1743
        %v1752 = vmul.f32 %v1662, %v1744
        %v1753 = vmul.f32 %v1667, %v1745
        %v1754 = vmul.f32 %v1672, %v1746
        %v1755 = vmul.f32 %v1677, %v1747
        %v1756 = vmul.f32 %v1682, %v1748
        %v1757 = vmul.f32 %v1687, %v1749
        %v1758 = vmul.f32 %v1692, %v1750
        %s1759 = scalar_lea.vmem %s6, 1
        %v1760 = vld [vmem:[%s1759] sm:$0x1]
        %v1762 = vlaneseq
        %v1763 = vshrl.u32 %v1762, 7
        %v1764 = vsub.s32 0, %v1763
        %v1765 = vrot.slane %v1760, %v1764
        %v1767 = vmul.f32 %v1751, %v1765
        %v1768 = vmul.f32 %v1752, %v1765
        %v1769 = vmul.f32 %v1753, %v1765
        %v1770 = vmul.f32 %v1754, %v1765
        %v1771 = vmul.f32 %v1755, %v1765
        %v1772 = vmul.f32 %v1756, %v1765
        %v1773 = vmul.f32 %v1757, %v1765
        %v1774 = vmul.f32 %v1758, %v1765
        %v1775 = vpack.c.bf16 %v1768, %v1767
        %v1776 = vpack.c.bf16 %v1770, %v1769
        %v1777 = vpack.c.bf16 %v1772, %v1771
        %v1778 = vpack.c.bf16 %v1774, %v1773
        %v1779 = vunpack.c.l.bf16 %v1775
        %v1780 = vunpack.c.h.bf16 %v1775
        %v1781 = vunpack.c.l.bf16 %v1776
        %v1782 = vunpack.c.h.bf16 %v1776
        %v1783 = vunpack.c.l.bf16 %v1777
        %v1784 = vunpack.c.h.bf16 %v1777
        %v1785 = vunpack.c.l.bf16 %v1778
        %v1786 = vunpack.c.h.bf16 %v1778
        %v1787 = vsel %vm475, %v1779, 0.0
        %1788 = vadd.xlane.f32.xlu0 %v1787
        %v1789 = vpop.xlane.xlu0 %1788
        %v1790 = vsel %vm475, %v1780, 0.0
        %1791 = vadd.xlane.f32.xlu0 %v1790
        %v1792 = vpop.xlane.xlu0 %1791
        %v1793 = vsel %vm475, %v1781, 0.0
        %1794 = vadd.xlane.f32.xlu0 %v1793
        %v1795 = vpop.xlane.xlu0 %1794
        %v1796 = vsel %vm475, %v1782, 0.0
        %1797 = vadd.xlane.f32.xlu0 %v1796
        %v1798 = vpop.xlane.xlu0 %1797
        %v1799 = vsel %vm475, %v1783, 0.0
        %1800 = vadd.xlane.f32.xlu0 %v1799
        %v1801 = vpop.xlane.xlu0 %1800
        %v1802 = vsel %vm475, %v1784, 0.0
        %1803 = vadd.xlane.f32.xlu0 %v1802
        %v1804 = vpop.xlane.xlu0 %1803
        %v1805 = vsel %vm475, %v1785, 0.0
        %1806 = vadd.xlane.f32.xlu0 %v1805
        %v1807 = vpop.xlane.xlu0 %1806
        %v1808 = vsel %vm475, %v1786, 0.0
        %1809 = vadd.xlane.f32.xlu0 %v1808
        %v1810 = vpop.xlane.xlu0 %1809
        %v1811 = vmul.f32 %v1789, %v1054
        %v1812 = vmul.f32 %v1792, %v1054
        %v1813 = vmul.f32 %v1795, %v1054
        %v1814 = vmul.f32 %v1798, %v1054
        %v1815 = vmul.f32 %v1801, %v1054
        %v1816 = vmul.f32 %v1804, %v1054
        %v1817 = vmul.f32 %v1807, %v1054
        %v1818 = vmul.f32 %v1810, %v1054
        %v1819 = vsub.f32 %v1779, %v1811
        %v1820 = vsub.f32 %v1780, %v1812
        %v1821 = vsub.f32 %v1781, %v1813
        %v1822 = vsub.f32 %v1782, %v1814
        %v1823 = vsub.f32 %v1783, %v1815
        %v1824 = vsub.f32 %v1784, %v1816
        %v1825 = vsub.f32 %v1785, %v1817
        %v1826 = vsub.f32 %v1786, %v1818
        %v1827 = vmul.f32 %v1819, %v1819
        %v1828 = vmul.f32 %v1820, %v1820
        %v1829 = vmul.f32 %v1821, %v1821
        %v1830 = vmul.f32 %v1822, %v1822
        %v1831 = vmul.f32 %v1823, %v1823
        %v1832 = vmul.f32 %v1824, %v1824
        %v1833 = vmul.f32 %v1825, %v1825
        %v1834 = vmul.f32 %v1826, %v1826
        %v1835 = vsel %vm475, %v1827, 0.0
        %1836 = vadd.xlane.f32.xlu0 %v1835
        %v1837 = vpop.xlane.xlu0 %1836
        %v1838 = vsel %vm475, %v1828, 0.0
        %1839 = vadd.xlane.f32.xlu0 %v1838
        %v1840 = vpop.xlane.xlu0 %1839
        %v1841 = vsel %vm475, %v1829, 0.0
        %1842 = vadd.xlane.f32.xlu0 %v1841
        %v1843 = vpop.xlane.xlu0 %1842
        %v1844 = vsel %vm475, %v1830, 0.0
        %1845 = vadd.xlane.f32.xlu0 %v1844
        %v1846 = vpop.xlane.xlu0 %1845
        %v1847 = vsel %vm475, %v1831, 0.0
        %1848 = vadd.xlane.f32.xlu0 %v1847
        %v1849 = vpop.xlane.xlu0 %1848
        %v1850 = vsel %vm475, %v1832, 0.0
        %1851 = vadd.xlane.f32.xlu0 %v1850
        %v1852 = vpop.xlane.xlu0 %1851
        %v1853 = vsel %vm475, %v1833, 0.0
        %1854 = vadd.xlane.f32.xlu0 %v1853
        %v1855 = vpop.xlane.xlu0 %1854
        %v1856 = vsel %vm475, %v1834, 0.0
        %1857 = vadd.xlane.f32.xlu0 %v1856
        %v1858 = vpop.xlane.xlu0 %1857
        %v1859 = vmul.f32 %v1837, %v1054
        %v1860 = vmul.f32 %v1840, %v1054
        %v1861 = vmul.f32 %v1843, %v1054
        %v1862 = vmul.f32 %v1846, %v1054
        %v1863 = vmul.f32 %v1849, %v1054
        %v1864 = vmul.f32 %v1852, %v1054
        %v1865 = vmul.f32 %v1855, %v1054
        %v1866 = vmul.f32 %v1858, %v1054
        %v1867 = vadd.f32 %v1859, 1e-05
        %v1868 = vadd.f32 %v1860, 1e-05
        %v1869 = vadd.f32 %v1861, 1e-05
        %v1870 = vadd.f32 %v1862, 1e-05
        %v1871 = vadd.f32 %v1863, 1e-05
        %v1872 = vadd.f32 %v1864, 1e-05
        %v1873 = vadd.f32 %v1865, 1e-05
        %v1874 = vadd.f32 %v1866, 1e-05
        %v1875 = vrsqrt.pop %v1867
        %v1876 = vrsqrt.pop %v1868
        %v1877 = vrsqrt.pop %v1869
        %v1878 = vrsqrt.pop %v1870
        %v1879 = vrsqrt.pop %v1871
        %v1880 = vrsqrt.pop %v1872
        %v1881 = vrsqrt.pop %v1873
        %v1882 = vrsqrt.pop %v1874
        %v1883 = vmul.f32 %v1819, %v1875
        %v1884 = vmul.f32 %v1820, %v1876
        %v1885 = vmul.f32 %v1821, %v1877
        %v1886 = vmul.f32 %v1822, %v1878
        %v1887 = vmul.f32 %v1823, %v1879
        %v1888 = vmul.f32 %v1824, %v1880
        %v1889 = vmul.f32 %v1825, %v1881
        %v1890 = vmul.f32 %v1826, %v1882
        %v1891 = vld [vmem:[%s7] sm:$0x1]
        %v1893 = vlaneseq
        %v1894 = vshrl.u32 %v1893, 7
        %v1895 = vsub.s32 0, %v1894
        %v1896 = vrot.slane %v1891, %v1895
        %v1898 = vmul.f32 %v1883, %v1896
        %v1899 = vmul.f32 %v1884, %v1896
        %v1900 = vmul.f32 %v1885, %v1896
        %v1901 = vmul.f32 %v1886, %v1896
        %v1902 = vmul.f32 %v1887, %v1896
        %v1903 = vmul.f32 %v1888, %v1896
        %v1904 = vmul.f32 %v1889, %v1896
        %v1905 = vmul.f32 %v1890, %v1896
        %v1906 = vld [vmem:[%s8] sm:$0x1]
        %v1908 = vlaneseq
        %v1909 = vshrl.u32 %v1908, 7
        %v1910 = vsub.s32 0, %v1909
        %v1911 = vrot.slane %v1906, %v1910
        %v1913 = vadd.f32 %v1898, %v1911
        %v1914 = vadd.f32 %v1899, %v1911
        %v1915 = vadd.f32 %v1900, %v1911
        %v1916 = vadd.f32 %v1901, %v1911
        %v1917 = vadd.f32 %v1902, %v1911
        %v1918 = vadd.f32 %v1903, %v1911
        %v1919 = vadd.f32 %v1904, %v1911
        %v1920 = vadd.f32 %v1905, %v1911
        %1921 = vst.msk [vmem:[%s405] sm:$0xff] %vm475, %v1913
        %1922 = vst.msk [vmem:[%s405 + $0x8] sm:$0xff] %vm475, %v1914
        %1923 = vst.msk [vmem:[%s405 + $0x10] sm:$0xff] %vm475, %v1915
        %1924 = vst.msk [vmem:[%s405 + $0x18] sm:$0xff] %vm475, %v1916
        %1925 = vst.msk [vmem:[%s405 + $0x20] sm:$0xff] %vm475, %v1917
        %1926 = vst.msk [vmem:[%s405 + $0x28] sm:$0xff] %vm475, %v1918
        %1927 = vst.msk [vmem:[%s405 + $0x30] sm:$0xff] %vm475, %v1919
        %1928 = vst.msk [vmem:[%s405 + $0x38] sm:$0xff] %vm475, %v1920
        %s1929 = smul.u32 8, %s23
        %p1930 = scmp.lt.s32.totalorder %s1929, 15
        %s1931 = scalar_select %p1930, %s1929, 15
        %s1932 = smul.addr %s1931, 8
        %s1933 = scalar_lea.vmem %s9, %s1932
        // Predicated region
        $region77: #{_lambda_.2} parent=55 // pred_check
          %p1934 = pneg %p235
        $region78: #{_lambda_.2} parent=55 // pred_check_branch
          %1936 = sbr.rel (%p1934) target = $region80
        $region79: #{_lambda_.2} parent=55 // pred_region
          %s1937 = smul.u32 8, %s23
        $region80: #{_lambda_.2} parent=55 // pred_fallthru
          _
      $region56: #{_lambda_.2} parent=5 // pred_fallthru
        _
      %p1938 = scmp.le.s32.totalorder 2, %s18
      // Predicated region
      $region81: #{_lambda_.2} parent=5 // pred_check
        %p1939 = pneg %p1938
      $region82: #{_lambda_.2} parent=5 // pred_check_branch
        %1941 = sbr.rel (%p1939) target = $region84
      $region83: #{_lambda_.2} parent=5 // pred_region
        %s1942 = ssub.s32 %s18, 2
        // Predicated region
        $region85: #{_lambda_.2} parent=83 // pred_check
          %p1943 = pneg %p241
        $region86: #{_lambda_.2} parent=83 // pred_check_branch
          %1945 = sbr.rel (%p1943) target = $region88
        $region87: #{_lambda_.2} parent=83 // pred_region
          %s1946 = smul.u32 8, %s24
          %p1947 = scmp.lt.s32.totalorder %s1946, 15
          %s1948 = scalar_select %p1947, %s1946, 15
          %s1949 = smul.addr %s1948, 8
          %s1950 = scalar_lea.vmem %s9, %s1949
        $region88: #{_lambda_.2} parent=83 // pred_fallthru
          _
      $region84: #{_lambda_.2} parent=5 // pred_fallthru
        _
    $region6: #{_lambda_.2} parent=1 // loop_footer
      %s22 = sadd.s32 1, %s18
    $region7: #{_lambda_.2} parent=1 // loop_footer_branch
      %17 = sbr.rel target = $region3
    $region8: #{_lambda_.2} parent=1 // loop_exit
      _
    %1951 = vsyncpa [#allocation3], 1
    %s1952 = scalar_lea.sflag [#allocation3], 1
    %1953 = vsyncpa %s1952, 1
    %1954 = vsyncpa [#allocation5], 1
    %1955 = vsyncpa [#allocation8], 1

// kernel: _lambda_.3
$region0: #{_lambda_.3}
  #allocation0 [shape = 'u32[]', space=smem, size = 0x4, offset = 0x4, fixed_abs, tag = 'smem constant byte address 0x4 - core index']
  #allocation1 [shape = 'u32[144,128]{1,0:T(1,128)}', space=vmem, size = 0x12000, scoped, tag = 'internal scratch']
  %s0 = inlined_call_operand.vmem [shape: f32[128,64], index: 0, kind: input, shape index: {}]
  %s1 = inlined_call_operand.vmem [shape: bf16[64,8192], index: 1, kind: input, shape index: {}]
  %s2 = inlined_call_operand.vmem [shape: f32[1,8192], index: 2, kind: input, shape index: {}]
  %s3 = inlined_call_operand.hbm [shape: f32[128,8192], index: 3, kind: output, shape index: {}]
  %s4 = sld [smem:[#allocation0]]
  $region68: #{_lambda_.3} parent=0
    _
  %s6 = ssub.s32 1, %s4
  %s7 = scalar_select 0, %s6, %s4
  $region1: #{_lambda_.3} parent=0
    #allocation2 [shape = 'u8[524288]{0}', space=vmem, size = 0x80000, scoped, tag = 'input window, operand 1']
    #allocation3 [shape = 'u8[2097152]{0}', space=vmem, size = 0x200000, scoped, tag = 'output window, operand 0']
    #allocation4 [shape = 's32[2]{0}', space=sflag, size = 0x8, scoped, tag = 'scoped memory for _lambda_.3']
    %8 = vsyncpa [#allocation4], 0
    %s9 = scalar_lea.sflag [#allocation4], 1
    %10 = vsyncpa %s9, 0
    loop: start=0, step=1, limit=6
    $region2: #{_lambda_.3} parent=1 // loop_pre_header
      _
    $region3: #{_lambda_.3} parent=1 // loop_header
      %s12 = sphi 0, %s16
      %p13 = scmp.ge.s32.totalorder %s12, 6
      %s20 = sphi 0, %s20
      %s22 = sphi 0, %s20
      %s23 = sphi 0, %s22
      %s37 = sphi 0, %s23
      %s43 = sphi 0, %s45
      %s46 = sphi 0, %s43
      %s47 = sphi 0, %s46
      %s63 = sphi 0, %s47
      %s69 = sphi 0, %s71
      %s72 = sphi 0, %s69
      %s73 = sphi 0, %s72
      %s89 = sphi 0, %s73
      %s95 = sphi 0, %s97
      %s98 = sphi 0, %s95
      %s99 = sphi 0, %s98
      %s115 = sphi 0, %s99
    $region4: #{_lambda_.3} parent=1 // loop_header_branch
      %15 = sbr.rel (%p13) target = $region8
    $region5: #{_lambda_.3} parent=1 // loop_body
      %s17 = ssub.s32 %s12, 1
      %s18 = ssub.s32 %s12, 2
      %s19 = sadd.s32 %s12, 1
      %s21 = sadd.s32 %s20, 1
      %p24 = scmp.eq.s32.totalorder %s12, 3
      %p25 = scmp.ne.s32.totalorder %s20, %s22
      %p26 = scmp.eq.s32.totalorder %s12, 0
      %p27 = por %p25, %p26
      %p28 = scmp.ne.s32.totalorder %s20, %s22
      %p29 = scmp.eq.s32.totalorder %s17, 3
      %p30 = por %p28, %p29
      %p31 = scmp.ne.s32.totalorder %s22, %s23
      %p32 = scmp.eq.s32.totalorder %s17, 0
      %p33 = por %p31, %p32
      %p34 = scmp.ne.s32.totalorder %s22, %s23
      %p35 = scmp.eq.s32.totalorder %s18, 3
      %p36 = por %p34, %p35
      %p38 = scmp.ne.s32.totalorder %s23, %s37
      %p39 = scmp.eq.s32.totalorder %s18, 0
      %p40 = por %p38, %p39
      %s41 = ssub.s32 %s12, %s19
      %p42 = scmp.eq.s32.totalorder %s41, 0
      %s44 = sadd.s32 %s43, 1
      %s45 = scalar_select %p42, %s43, %s44
      %p48 = pneg %p42
      %p49 = scmp.eq.s32.totalorder %s12, 3
      %p50 = por %p48, %p49
      %p51 = scmp.ne.s32.totalorder %s43, %s46
      %p52 = scmp.eq.s32.totalorder %s12, 0
      %p53 = por %p51, %p52
      %p54 = scmp.ne.s32.totalorder %s43, %s46
      %p55 = scmp.eq.s32.totalorder %s17, 3
      %p56 = por %p54, %p55
      %p57 = scmp.ne.s32.totalorder %s46, %s47
      %p58 = scmp.eq.s32.totalorder %s17, 0
      %p59 = por %p57, %p58
      %p60 = scmp.ne.s32.totalorder %s46, %s47
      %p61 = scmp.eq.s32.totalorder %s18, 3
      %p62 = por %p60, %p61
      %p64 = scmp.ne.s32.totalorder %s47, %s63
      %p65 = scmp.eq.s32.totalorder %s18, 0
      %p66 = por %p64, %p65
      %s67 = ssub.s32 %s12, %s19
      %p68 = scmp.eq.s32.totalorder %s67, 0
      %s70 = sadd.s32 %s69, 1
      %s71 = scalar_select %p68, %s69, %s70
      %p74 = pneg %p68
      %p75 = scmp.eq.s32.totalorder %s12, 3
      %p76 = por %p74, %p75
      %p77 = scmp.ne.s32.totalorder %s69, %s72
      %p78 = scmp.eq.s32.totalorder %s12, 0
      %p79 = por %p77, %p78
      %p80 = scmp.ne.s32.totalorder %s69, %s72
      %p81 = scmp.eq.s32.totalorder %s17, 3
      %p82 = por %p80, %p81
      %p83 = scmp.ne.s32.totalorder %s72, %s73
      %p84 = scmp.eq.s32.totalorder %s17, 0
      %p85 = por %p83, %p84
      %p86 = scmp.ne.s32.totalorder %s72, %s73
      %p87 = scmp.eq.s32.totalorder %s18, 3
      %p88 = por %p86, %p87
      %p90 = scmp.ne.s32.totalorder %s73, %s89
      %p91 = scmp.eq.s32.totalorder %s18, 0
      %p92 = por %p90, %p91
      %s93 = ssub.s32 %s12, %s19
      %p94 = scmp.eq.s32.totalorder %s93, 0
      %s96 = sadd.s32 %s95, 1
      %s97 = scalar_select %p94, %s95, %s96
      %p100 = pneg %p94
      %p101 = scmp.eq.s32.totalorder %s12, 3
      %p102 = por %p100, %p101
      %p103 = scmp.ne.s32.totalorder %s95, %s98
      %p104 = scmp.eq.s32.totalorder %s12, 0
      %p105 = por %p103, %p104
      %p106 = scmp.ne.s32.totalorder %s95, %s98
      %p107 = scmp.eq.s32.totalorder %s17, 3
      %p108 = por %p106, %p107
      %p109 = scmp.ne.s32.totalorder %s98, %s99
      %p110 = scmp.eq.s32.totalorder %s17, 0
      %p111 = por %p109, %p110
      %p112 = scmp.ne.s32.totalorder %s98, %s99
      %p113 = scmp.eq.s32.totalorder %s18, 3
      %p114 = por %p112, %p113
      %p116 = scmp.ne.s32.totalorder %s99, %s115
      %p117 = scmp.eq.s32.totalorder %s18, 0
      %p118 = por %p116, %p117
      %p119 = scmp.le.s32.totalorder 1, %s12
      %p120 = scmp.lt.s32.totalorder %s12, 5
      %p121 = pnand %p119, %p120
      %p122 = pneg %p121
      // Predicated region
      $region9: #{_lambda_.3} parent=5 // pred_check
        _
      $region10: #{_lambda_.3} parent=5 // pred_check_branch
        %124 = sbr.rel (%p121) target = $region12
      $region11: #{_lambda_.3} parent=5 // pred_region
        %s125 = ssub.s32 %s12, 1
        // Predicated region
        $region13: #{_lambda_.3} parent=11 // pred_check
          %p126 = pneg %p33
        $region14: #{_lambda_.3} parent=11 // pred_check_branch
          %128 = sbr.rel (%p126) target = $region16
        $region15: #{_lambda_.3} parent=11 // pred_region
          _
        $region16: #{_lambda_.3} parent=11 // pred_fallthru
          _
      $region12: #{_lambda_.3} parent=5 // pred_fallthru
        _
      %p129 = scmp.lt.s32.totalorder %s12, 4
      // Predicated region
      $region17: #{_lambda_.3} parent=5 // pred_check
        %p130 = pneg %p129
      $region18: #{_lambda_.3} parent=5 // pred_check_branch
        %132 = sbr.rel (%p130) target = $region20
      $region19: #{_lambda_.3} parent=5 // pred_region
        // Predicated region
        $region21: #{_lambda_.3} parent=19 // pred_check
          %p133 = pneg %p53
        $region22: #{_lambda_.3} parent=19 // pred_check_branch
          %135 = sbr.rel (%p133) target = $region24
        $region23: #{_lambda_.3} parent=19 // pred_region
          %s136 = sand.u32 %s43, 1
          %s137 = sand.u32 %s43, 1
          %s138 = smul.addr %s137, 512
          %s139 = scalar_lea.vmem [#allocation2], %s138
          %s140 = smul.u32 16, %s12
          %s141 = smul.addr %s140, 4
          %s142 = scalar_lea.vmem %s1, %s141
          // Predicated region
          $region25: #{_lambda_.3} parent=23 // pred_check
            _
          $region26: #{_lambda_.3} parent=23 // pred_check_branch
            %144 = sbr.rel (0) target = $region28
          $region27: #{_lambda_.3} parent=23 // pred_region
            // Predicated region
            $region29: #{_lambda_.3} parent=27 // pred_check
              _
            $region30: #{_lambda_.3} parent=27 // pred_check_branch
              %146 = sbr.rel (0) target = $region32
            $region31: #{_lambda_.3} parent=27 // pred_region
              loop: start=0, step=1, limit=1
              $region33: #{_lambda_.3} parent=31 // loop_pre_header
                _
              $region34: #{_lambda_.3} parent=31 // loop_header
                %s148 = sphi 0, %s152
                %p149 = scmp.ge.s32.totalorder %s148, 1
                %s153 = sphi %s142, %s142
                %s154 = sphi %s139, %s139
              $region35: #{_lambda_.3} parent=31 // loop_header_branch
                %151 = sbr.rel (%p149) target = $region39
              $region36: #{_lambda_.3} parent=31 // loop_body
                %v155 = vld [vmem:[%s153] sm:$0xff]
                %156 = vst [vmem:[%s154] sm:$0xff] %v155
                %v157 = vld [vmem:[%s153 + $0x8] sm:$0xff]
                %158 = vst [vmem:[%s154 + $0x8] sm:$0xff] %v157
                %v159 = vld [vmem:[%s153 + $0x10] sm:$0xff]
                %160 = vst [vmem:[%s154 + $0x10] sm:$0xff] %v159
                %v161 = vld [vmem:[%s153 + $0x18] sm:$0xff]
                %162 = vst [vmem:[%s154 + $0x18] sm:$0xff] %v161
                %v163 = vld [vmem:[%s153 + $0x20] sm:$0xff]
                %164 = vst [vmem:[%s154 + $0x20] sm:$0xff] %v163
                %v165 = vld [vmem:[%s153 + $0x28] sm:$0xff]
                %166 = vst [vmem:[%s154 + $0x28] sm:$0xff] %v165
                %v167 = vld [vmem:[%s153 + $0x30] sm:$0xff]
                %168 = vst [vmem:[%s154 + $0x30] sm:$0xff] %v167
                %v169 = vld [vmem:[%s153 + $0x38] sm:$0xff]
                %170 = vst [vmem:[%s154 + $0x38] sm:$0xff] %v169
                %v171 = vld [vmem:[%s153 + $0x100] sm:$0xff]
                %172 = vst [vmem:[%s154 + $0x40] sm:$0xff] %v171
                %v173 = vld [vmem:[%s153 + $0x108] sm:$0xff]
                %174 = vst [vmem:[%s154 + $0x48] sm:$0xff] %v173
                %v175 = vld [vmem:[%s153 + $0x110] sm:$0xff]
                %176 = vst [vmem:[%s154 + $0x50] sm:$0xff] %v175
                %v177 = vld [vmem:[%s153 + $0x118] sm:$0xff]
                %178 = vst [vmem:[%s154 + $0x58] sm:$0xff] %v177
                %v179 = vld [vmem:[%s153 + $0x120] sm:$0xff]
                %180 = vst [vmem:[%s154 + $0x60] sm:$0xff] %v179
                %v181 = vld [vmem:[%s153 + $0x128] sm:$0xff]
                %182 = vst [vmem:[%s154 + $0x68] sm:$0xff] %v181
                %v183 = vld [vmem:[%s153 + $0x130] sm:$0xff]
                %184 = vst [vmem:[%s154 + $0x70] sm:$0xff] %v183
                %v185 = vld [vmem:[%s153 + $0x138] sm:$0xff]
                %186 = vst [vmem:[%s154 + $0x78] sm:$0xff] %v185
                %v187 = vld [vmem:[%s153 + $0x200] sm:$0xff]
                %188 = vst [vmem:[%s154 + $0x80] sm:$0xff] %v187
                %v189 = vld [vmem:[%s153 + $0x208] sm:$0xff]
                %190 = vst [vmem:[%s154 + $0x88] sm:$0xff] %v189
                %v191 = vld [vmem:[%s153 + $0x210] sm:$0xff]
                %192 = vst [vmem:[%s154 + $0x90] sm:$0xff] %v191
                %v193 = vld [vmem:[%s153 + $0x218] sm:$0xff]
                %194 = vst [vmem:[%s154 + $0x98] sm:$0xff] %v193
                %v195 = vld [vmem:[%s153 + $0x220] sm:$0xff]
                %196 = vst [vmem:[%s154 + $0xa0] sm:$0xff] %v195
                %v197 = vld [vmem:[%s153 + $0x228] sm:$0xff]
                %198 = vst [vmem:[%s154 + $0xa8] sm:$0xff] %v197
                %v199 = vld [vmem:[%s153 + $0x230] sm:$0xff]
                %200 = vst [vmem:[%s154 + $0xb0] sm:$0xff] %v199
                %v201 = vld [vmem:[%s153 + $0x238] sm:$0xff]
                %202 = vst [vmem:[%s154 + $0xb8] sm:$0xff] %v201
                %v203 = vld [vmem:[%s153 + $0x300] sm:$0xff]
                %204 = vst [vmem:[%s154 + $0xc0] sm:$0xff] %v203
                %v205 = vld [vmem:[%s153 + $0x308] sm:$0xff]
                %206 = vst [vmem:[%s154 + $0xc8] sm:$0xff] %v205
                %v207 = vld [vmem:[%s153 + $0x310] sm:$0xff]
                %208 = vst [vmem:[%s154 + $0xd0] sm:$0xff] %v207
                %v209 = vld [vmem:[%s153 + $0x318] sm:$0xff]
                %210 = vst [vmem:[%s154 + $0xd8] sm:$0xff] %v209
                %v211 = vld [vmem:[%s153 + $0x320] sm:$0xff]
                %212 = vst [vmem:[%s154 + $0xe0] sm:$0xff] %v211
                %v213 = vld [vmem:[%s153 + $0x328] sm:$0xff]
                %214 = vst [vmem:[%s154 + $0xe8] sm:$0xff] %v213
                %v215 = vld [vmem:[%s153 + $0x330] sm:$0xff]
                %216 = vst [vmem:[%s154 + $0xf0] sm:$0xff] %v215
                %v217 = vld [vmem:[%s153 + $0x338] sm:$0xff]
                %218 = vst [vmem:[%s154 + $0xf8] sm:$0xff] %v217
                %v219 = vld [vmem:[%s153 + $0x400] sm:$0xff]
                %220 = vst [vmem:[%s154 + $0x100] sm:$0xff] %v219
                %v221 = vld [vmem:[%s153 + $0x408] sm:$0xff]
                %222 = vst [vmem:[%s154 + $0x108] sm:$0xff] %v221
                %v223 = vld [vmem:[%s153 + $0x410] sm:$0xff]
                %224 = vst [vmem:[%s154 + $0x110] sm:$0xff] %v223
                %v225 = vld [vmem:[%s153 + $0x418] sm:$0xff]
                %226 = vst [vmem:[%s154 + $0x118] sm:$0xff] %v225
                %v227 = vld [vmem:[%s153 + $0x420] sm:$0xff]
                %228 = vst [vmem:[%s154 + $0x120] sm:$0xff] %v227
                %v229 = vld [vmem:[%s153 + $0x428] sm:$0xff]
                %230 = vst [vmem:[%s154 + $0x128] sm:$0xff] %v229
                %v231 = vld [vmem:[%s153 + $0x430] sm:$0xff]
                %232 = vst [vmem:[%s154 + $0x130] sm:$0xff] %v231
                %v233 = vld [vmem:[%s153 + $0x438] sm:$0xff]
                %234 = vst [vmem:[%s154 + $0x138] sm:$0xff] %v233
                %v235 = vld [vmem:[%s153 + $0x500] sm:$0xff]
                %236 = vst [vmem:[%s154 + $0x140] sm:$0xff] %v235
                %v237 = vld [vmem:[%s153 + $0x508] sm:$0xff]
                %238 = vst [vmem:[%s154 + $0x148] sm:$0xff] %v237
                %v239 = vld [vmem:[%s153 + $0x510] sm:$0xff]
                %240 = vst [vmem:[%s154 + $0x150] sm:$0xff] %v239
                %v241 = vld [vmem:[%s153 + $0x518] sm:$0xff]
                %242 = vst [vmem:[%s154 + $0x158] sm:$0xff] %v241
                %v243 = vld [vmem:[%s153 + $0x520] sm:$0xff]
                %244 = vst [vmem:[%s154 + $0x160] sm:$0xff] %v243
                %v245 = vld [vmem:[%s153 + $0x528] sm:$0xff]
                %246 = vst [vmem:[%s154 + $0x168] sm:$0xff] %v245
                %v247 = vld [vmem:[%s153 + $0x530] sm:$0xff]
                %248 = vst [vmem:[%s154 + $0x170] sm:$0xff] %v247
                %v249 = vld [vmem:[%s153 + $0x538] sm:$0xff]
                %250 = vst [vmem:[%s154 + $0x178] sm:$0xff] %v249
                %v251 = vld [vmem:[%s153 + $0x600] sm:$0xff]
                %252 = vst [vmem:[%s154 + $0x180] sm:$0xff] %v251
                %v253 = vld [vmem:[%s153 + $0x608] sm:$0xff]
                %254 = vst [vmem:[%s154 + $0x188] sm:$0xff] %v253
                %v255 = vld [vmem:[%s153 + $0x610] sm:$0xff]
                %256 = vst [vmem:[%s154 + $0x190] sm:$0xff] %v255
                %v257 = vld [vmem:[%s153 + $0x618] sm:$0xff]
                %258 = vst [vmem:[%s154 + $0x198] sm:$0xff] %v257
                %v259 = vld [vmem:[%s153 + $0x620] sm:$0xff]
                %260 = vst [vmem:[%s154 + $0x1a0] sm:$0xff] %v259
                %v261 = vld [vmem:[%s153 + $0x628] sm:$0xff]
                %262 = vst [vmem:[%s154 + $0x1a8] sm:$0xff] %v261
                %v263 = vld [vmem:[%s153 + $0x630] sm:$0xff]
                %264 = vst [vmem:[%s154 + $0x1b0] sm:$0xff] %v263
                %v265 = vld [vmem:[%s153 + $0x638] sm:$0xff]
                %266 = vst [vmem:[%s154 + $0x1b8] sm:$0xff] %v265
                %v267 = vld [vmem:[%s153 + $0x700] sm:$0xff]
                %268 = vst [vmem:[%s154 + $0x1c0] sm:$0xff] %v267
                %v269 = vld [vmem:[%s153 + $0x708] sm:$0xff]
                %270 = vst [vmem:[%s154 + $0x1c8] sm:$0xff] %v269
                %v271 = vld [vmem:[%s153 + $0x710] sm:$0xff]
                %272 = vst [vmem:[%s154 + $0x1d0] sm:$0xff] %v271
                %v273 = vld [vmem:[%s153 + $0x718] sm:$0xff]
                %274 = vst [vmem:[%s154 + $0x1d8] sm:$0xff] %v273
                %v275 = vld [vmem:[%s153 + $0x720] sm:$0xff]
                %276 = vst [vmem:[%s154 + $0x1e0] sm:$0xff] %v275
                %v277 = vld [vmem:[%s153 + $0x728] sm:$0xff]
                %278 = vst [vmem:[%s154 + $0x1e8] sm:$0xff] %v277
                %v279 = vld [vmem:[%s153 + $0x730] sm:$0xff]
                %280 = vst [vmem:[%s154 + $0x1f0] sm:$0xff] %v279
                %v281 = vld [vmem:[%s153 + $0x738] sm:$0xff]
                %282 = vst [vmem:[%s154 + $0x1f8] sm:$0xff] %v281
              $region37: #{_lambda_.3} parent=31 // loop_footer
                %s152 = sadd.s32 1, %s148
              $region38: #{_lambda_.3} parent=31 // loop_footer_branch
                %147 = sbr.rel target = $region34
              $region39: #{_lambda_.3} parent=31 // loop_exit
                _
            $region32: #{_lambda_.3} parent=27 // pred_fallthru
              _
            // Predicated region
            $region40: #{_lambda_.3} parent=27 // pred_check
              _
            $region41: #{_lambda_.3} parent=27 // pred_check_branch
              %284 = sbr.rel target = $region43
            $region42: #{_lambda_.3} parent=27 // pred_region
              _
            $region43: #{_lambda_.3} parent=27 // pred_fallthru
              _
          $region28: #{_lambda_.3} parent=23 // pred_fallthru
            _
          %285 = vnop
        $region24: #{_lambda_.3} parent=19 // pred_fallthru
          _
        // Predicated region
        $region44: #{_lambda_.3} parent=19 // pred_check
          %p286 = pneg %p79
        $region45: #{_lambda_.3} parent=19 // pred_check_branch
          %288 = sbr.rel (%p286) target = $region47
        $region46: #{_lambda_.3} parent=19 // pred_region
          %s289 = smul.u32 16, %s12
          %p290 = scmp.lt.s32.totalorder %s289, 63
          %s291 = scalar_select %p290, %s289, 63
          %s292 = scalar_lea.vmem %s2, %s291
          %s293 = smul.u32 16, %s12
        $region47: #{_lambda_.3} parent=19 // pred_fallthru
          _
      $region20: #{_lambda_.3} parent=5 // pred_fallthru
        _
      %p294 = scmp.le.s32.totalorder 1, %s12
      %p295 = scmp.lt.s32.totalorder %s12, 5
      %p296 = pnand %p294, %p295
      %p297 = pneg %p296
      // Predicated region
      $region48: #{_lambda_.3} parent=5 // pred_check
        _
      $region49: #{_lambda_.3} parent=5 // pred_check_branch
        %299 = sbr.rel (%p296) target = $region51
      $region50: #{_lambda_.3} parent=5 // pred_region
        %s300 = ssub.s32 %s12, 1
        %s301 = sand.u32 %s46, 1
        %s302 = sand.u32 %s46, 1
        %s303 = smul.addr %s302, 512
        %s304 = scalar_lea.vmem [#allocation2], %s303
        // Predicated region
        $region52: #{_lambda_.3} parent=50 // pred_check
          %p305 = pneg %p59
        $region53: #{_lambda_.3} parent=50 // pred_check_branch
          %307 = sbr.rel (%p305) target = $region55
        $region54: #{_lambda_.3} parent=50 // pred_region
          _
        $region55: #{_lambda_.3} parent=50 // pred_fallthru
          _
        %p308 = pneg %p33
        %p309 = pneg %p30
        %s310 = sand.u32 %s46, 1
        %s311 = sand.u32 %s46, 1
        %s312 = smul.addr %s311, 512
        %s313 = scalar_lea.vmem [#allocation2], %s312
        %p314 = pneg %p59
        %p315 = pneg %p56
        %s316 = smul.u32 16, %s17
        %p317 = scmp.lt.s32.totalorder %s316, 63
        %s318 = scalar_select %p317, %s316, 63
        %s319 = scalar_lea.vmem %s2, %s318
        %p320 = pneg %p85
        %p321 = pneg %p82
        %p322 = pneg %p111
        %p323 = pneg %p108
        %s324 = sand.u32 %s98, 1
        %s325 = scalar_lea.sflag [#allocation4], %s324
        %s326 = sand.u32 %s98, 1
        %s327 = smul.addr %s326, 2048
        %s328 = scalar_lea.vmem [#allocation3], %s327
        %s329 = smul.u32 16, %s17
        %s330 = smul.u32 16, %s17
        %p331 = scmp.lt.s32.totalorder %s330, 63
        %s332 = scalar_select %p331, %s330, 63
        %s333 = scalar_lea.vmem %s2, %s332
        %s334 = smul.u32 16, %s17
        %s335 = smul.u32 16, %s17
        %v337 = vld [vmem:[%s0] sm:$0xff]
        %v338 = vld [vmem:[%s0 + $0x8] sm:$0xff]
        %v339 = vld [vmem:[%s0 + $0x10] sm:$0xff]
        %v340 = vld [vmem:[%s0 + $0x18] sm:$0xff]
        %v341 = vld [vmem:[%s0 + $0x20] sm:$0xff]
        %v342 = vld [vmem:[%s0 + $0x28] sm:$0xff]
        %v343 = vld [vmem:[%s0 + $0x30] sm:$0xff]
        %v344 = vld [vmem:[%s0 + $0x38] sm:$0xff]
        %v345 = vld [vmem:[%s0 + $0x40] sm:$0xff]
        %v346 = vld [vmem:[%s0 + $0x48] sm:$0xff]
        %v347 = vld [vmem:[%s0 + $0x50] sm:$0xff]
        %v348 = vld [vmem:[%s0 + $0x58] sm:$0xff]
        %v349 = vld [vmem:[%s0 + $0x60] sm:$0xff]
        %v350 = vld [vmem:[%s0 + $0x68] sm:$0xff]
        %v351 = vld [vmem:[%s0 + $0x70] sm:$0xff]
        %v352 = vld [vmem:[%s0 + $0x78] sm:$0xff]
        %v353 = vpack.c.bf16 %v338, %v337
        %v354 = vpack.c.bf16 %v340, %v339
        %v355 = vpack.c.bf16 %v342, %v341
        %v356 = vpack.c.bf16 %v344, %v343
        %v357 = vpack.c.bf16 %v346, %v345
        %v358 = vpack.c.bf16 %v348, %v347
        %v359 = vpack.c.bf16 %v350, %v349
        %v360 = vpack.c.bf16 %v352, %v351
        %v361 = vld [vmem:[%s304] sm:$0xff]
        %v362 = vld [vmem:[%s304 + $0x8] sm:$0xff]
        %v363 = vld [vmem:[%s304 + $0x10] sm:$0xff]
        %v364 = vld [vmem:[%s304 + $0x18] sm:$0xff]
        %v365 = vld [vmem:[%s304 + $0x20] sm:$0xff]
        %v366 = vld [vmem:[%s304 + $0x28] sm:$0xff]
        %v367 = vld [vmem:[%s304 + $0x30] sm:$0xff]
        %v368 = vld [vmem:[%s304 + $0x38] sm:$0xff]
        %v369 = vld [vmem:[%s304 + $0x40] sm:$0xff]
        %v370 = vld [vmem:[%s304 + $0x48] sm:$0xff]
        %v371 = vld [vmem:[%s304 + $0x50] sm:$0xff]
        %v372 = vld [vmem:[%s304 + $0x58] sm:$0xff]
        %v373 = vld [vmem:[%s304 + $0x60] sm:$0xff]
        %v374 = vld [vmem:[%s304 + $0x68] sm:$0xff]
        %v375 = vld [vmem:[%s304 + $0x70] sm:$0xff]
        %v376 = vld [vmem:[%s304 + $0x78] sm:$0xff]
        %v377 = vld [vmem:[%s304 + $0x80] sm:$0xff]
        %v378 = vld [vmem:[%s304 + $0x88] sm:$0xff]
        %v379 = vld [vmem:[%s304 + $0x90] sm:$0xff]
        %v380 = vld [vmem:[%s304 + $0x98] sm:$0xff]
        %v381 = vld [vmem:[%s304 + $0xa0] sm:$0xff]
        %v382 = vld [vmem:[%s304 + $0xa8] sm:$0xff]
        %v383 = vld [vmem:[%s304 + $0xb0] sm:$0xff]
        %v384 = vld [vmem:[%s304 + $0xb8] sm:$0xff]
        %v385 = vld [vmem:[%s304 + $0xc0] sm:$0xff]
        %v386 = vld [vmem:[%s304 + $0xc8] sm:$0xff]
        %v387 = vld [vmem:[%s304 + $0xd0] sm:$0xff]
        %v388 = vld [vmem:[%s304 + $0xd8] sm:$0xff]
        %v389 = vld [vmem:[%s304 + $0xe0] sm:$0xff]
        %v390 = vld [vmem:[%s304 + $0xe8] sm:$0xff]
        %v391 = vld [vmem:[%s304 + $0xf0] sm:$0xff]
        %v392 = vld [vmem:[%s304 + $0xf8] sm:$0xff]
        %v393 = vld [vmem:[%s304 + $0x100] sm:$0xff]
        %v394 = vld [vmem:[%s304 + $0x108] sm:$0xff]
        %v395 = vld [vmem:[%s304 + $0x110] sm:$0xff]
        %v396 = vld [vmem:[%s304 + $0x118] sm:$0xff]
        %v397 = vld [vmem:[%s304 + $0x120] sm:$0xff]
        %v398 = vld [vmem:[%s304 + $0x128] sm:$0xff]
        %v399 = vld [vmem:[%s304 + $0x130] sm:$0xff]
        %v400 = vld [vmem:[%s304 + $0x138] sm:$0xff]
        %v401 = vld [vmem:[%s304 + $0x140] sm:$0xff]
        %v402 = vld [vmem:[%s304 + $0x148] sm:$0xff]
        %v403 = vld [vmem:[%s304 + $0x150] sm:$0xff]
        %v404 = vld [vmem:[%s304 + $0x158] sm:$0xff]
        %v405 = vld [vmem:[%s304 + $0x160] sm:$0xff]
        %v406 = vld [vmem:[%s304 + $0x168] sm:$0xff]
        %v407 = vld [vmem:[%s304 + $0x170] sm:$0xff]
        %v408 = vld [vmem:[%s304 + $0x178] sm:$0xff]
        %v409 = vld [vmem:[%s304 + $0x180] sm:$0xff]
        %v410 = vld [vmem:[%s304 + $0x188] sm:$0xff]
        %v411 = vld [vmem:[%s304 + $0x190] sm:$0xff]
        %v412 = vld [vmem:[%s304 + $0x198] sm:$0xff]
        %v413 = vld [vmem:[%s304 + $0x1a0] sm:$0xff]
        %v414 = vld [vmem:[%s304 + $0x1a8] sm:$0xff]
        %v415 = vld [vmem:[%s304 + $0x1b0] sm:$0xff]
        %v416 = vld [vmem:[%s304 + $0x1b8] sm:$0xff]
        %v417 = vld [vmem:[%s304 + $0x1c0] sm:$0xff]
        %v418 = vld [vmem:[%s304 + $0x1c8] sm:$0xff]
        %v419 = vld [vmem:[%s304 + $0x1d0] sm:$0xff]
        %v420 = vld [vmem:[%s304 + $0x1d8] sm:$0xff]
        %v421 = vld [vmem:[%s304 + $0x1e0] sm:$0xff]
        %v422 = vld [vmem:[%s304 + $0x1e8] sm:$0xff]
        %v423 = vld [vmem:[%s304 + $0x1f0] sm:$0xff]
        %v424 = vld [vmem:[%s304 + $0x1f8] sm:$0xff]
        %v425 = vld [vmem:[%s333] sm:$0xff]
        %v426 = vld [vmem:[%s333 + $0x8] sm:$0xff]
        %v429 = vlaneseq
        %v430 = vshrl.u32 %v429, 7
        %v431 = vsub.s32 0, %v430
        %v432 = vrot.slane %v425, %v431
        %v433 = vlaneseq
        %v434 = vshrl.u32 %v433, 7
        %v435 = vsub.s32 1, %v434
        %v436 = vrot.slane %v425, %v435
        %v437 = vlaneseq
        %v438 = vshrl.u32 %v437, 7
        %v439 = vsub.s32 2, %v438
        %v440 = vrot.slane %v425, %v439
        %v441 = vlaneseq
        %v442 = vshrl.u32 %v441, 7
        %v443 = vsub.s32 3, %v442
        %v444 = vrot.slane %v425, %v443
        %v445 = vlaneseq
        %v446 = vshrl.u32 %v445, 7
        %v447 = vsub.s32 4, %v446
        %v448 = vrot.slane %v425, %v447
        %v449 = vlaneseq
        %v450 = vshrl.u32 %v449, 7
        %v451 = vsub.s32 5, %v450
        %v452 = vrot.slane %v425, %v451
        %v453 = vlaneseq
        %v454 = vshrl.u32 %v453, 7
        %v455 = vsub.s32 6, %v454
        %v456 = vrot.slane %v425, %v455
        %v457 = vlaneseq
        %v458 = vshrl.u32 %v457, 7
        %v459 = vsub.s32 7, %v458
        %v460 = vrot.slane %v425, %v459
        %v461 = vlaneseq
        %v462 = vshrl.u32 %v461, 7
        %v463 = vsub.s32 0, %v462
        %v464 = vrot.slane %v426, %v463
        %v465 = vlaneseq
        %v466 = vshrl.u32 %v465, 7
        %v467 = vsub.s32 1, %v466
        %v468 = vrot.slane %v426, %v467
        %v469 = vlaneseq
        %v470 = vshrl.u32 %v469, 7
        %v471 = vsub.s32 2, %v470
        %v472 = vrot.slane %v426, %v471
        %v473 = vlaneseq
        %v474 = vshrl.u32 %v473, 7
        %v475 = vsub.s32 3, %v474
        %v476 = vrot.slane %v426, %v475
        %v477 = vlaneseq
        %v478 = vshrl.u32 %v477, 7
        %v479 = vsub.s32 4, %v478
        %v480 = vrot.slane %v426, %v479
        %v481 = vlaneseq
        %v482 = vshrl.u32 %v481, 7
        %v483 = vsub.s32 5, %v482
        %v484 = vrot.slane %v426, %v483
        %v485 = vlaneseq
        %v486 = vshrl.u32 %v485, 7
        %v487 = vsub.s32 6, %v486
        %v488 = vrot.slane %v426, %v487
        %v489 = vlaneseq
        %v490 = vshrl.u32 %v489, 7
        %v491 = vsub.s32 7, %v490
        %v492 = vrot.slane %v426, %v491
        %v573 = vunpack.c.l.b16 %v361
        %v574 = vunpack.c.h.b16 %v361
        %v575 = vunpack.c.l.b16 %v362
        %v576 = vunpack.c.h.b16 %v362
        %v577 = vunpack.c.l.b16 %v363
        %v578 = vunpack.c.h.b16 %v363
        %v579 = vunpack.c.l.b16 %v364
        %v580 = vunpack.c.h.b16 %v364
        %v581 = vunpack.c.l.b16 %v365
        %v582 = vunpack.c.h.b16 %v365
        %v583 = vunpack.c.l.b16 %v366
        %v584 = vunpack.c.h.b16 %v366
        %v585 = vunpack.c.l.b16 %v367
        %v586 = vunpack.c.h.b16 %v367
        %v587 = vunpack.c.l.b16 %v368
        %v588 = vunpack.c.h.b16 %v368
        %v589 = vunpack.c.l.b16 %v369
        %v590 = vunpack.c.h.b16 %v369
        %v591 = vunpack.c.l.b16 %v370
        %v592 = vunpack.c.h.b16 %v370
        %v593 = vunpack.c.l.b16 %v371
        %v594 = vunpack.c.h.b16 %v371
        %v595 = vunpack.c.l.b16 %v372
        %v596 = vunpack.c.h.b16 %v372
        %v597 = vunpack.c.l.b16 %v373
        %v598 = vunpack.c.h.b16 %v373
        %v599 = vunpack.c.l.b16 %v374
        %v600 = vunpack.c.h.b16 %v374
        %v601 = vunpack.c.l.b16 %v375
        %v602 = vunpack.c.h.b16 %v375
        %v603 = vunpack.c.l.b16 %v376
        %v604 = vunpack.c.h.b16 %v376
        %v605 = vunpack.c.l.b16 %v377
        %v606 = vunpack.c.h.b16 %v377
        %v607 = vunpack.c.l.b16 %v378
        %v608 = vunpack.c.h.b16 %v378
        %v609 = vunpack.c.l.b16 %v379
        %v610 = vunpack.c.h.b16 %v379
        %v611 = vunpack.c.l.b16 %v380
        %v612 = vunpack.c.h.b16 %v380
        %v613 = vunpack.c.l.b16 %v381
        %v614 = vunpack.c.h.b16 %v381
        %v615 = vunpack.c.l.b16 %v382
        %v616 = vunpack.c.h.b16 %v382
        %v617 = vunpack.c.l.b16 %v383
        %v618 = vunpack.c.h.b16 %v383
        %v619 = vunpack.c.l.b16 %v384
        %v620 = vunpack.c.h.b16 %v384
        %v621 = vunpack.c.l.b16 %v385
        %v622 = vunpack.c.h.b16 %v385
        %v623 = vunpack.c.l.b16 %v386
        %v624 = vunpack.c.h.b16 %v386
        %v625 = vunpack.c.l.b16 %v387
        %v626 = vunpack.c.h.b16 %v387
        %v627 = vunpack.c.l.b16 %v388
        %v628 = vunpack.c.h.b16 %v388
        %v629 = vunpack.c.l.b16 %v389
        %v630 = vunpack.c.h.b16 %v389
        %v631 = vunpack.c.l.b16 %v390
        %v632 = vunpack.c.h.b16 %v390
        %v633 = vunpack.c.l.b16 %v391
        %v634 = vunpack.c.h.b16 %v391
        %v635 = vunpack.c.l.b16 %v392
        %v636 = vunpack.c.h.b16 %v392
        %v637 = vunpack.c.l.b16 %v393
        %v638 = vunpack.c.h.b16 %v393
        %v639 = vunpack.c.l.b16 %v394
        %v640 = vunpack.c.h.b16 %v394
        %v641 = vunpack.c.l.b16 %v395
        %v642 = vunpack.c.h.b16 %v395
        %v643 = vunpack.c.l.b16 %v396
        %v644 = vunpack.c.h.b16 %v396
        %v645 = vunpack.c.l.b16 %v397
        %v646 = vunpack.c.h.b16 %v397
        %v647 = vunpack.c.l.b16 %v398
        %v648 = vunpack.c.h.b16 %v398
        %v649 = vunpack.c.l.b16 %v399
        %v650 = vunpack.c.h.b16 %v399
        %v651 = vunpack.c.l.b16 %v400
        %v652 = vunpack.c.h.b16 %v400
        %v653 = vunpack.c.l.b16 %v401
        %v654 = vunpack.c.h.b16 %v401
        %v655 = vunpack.c.l.b16 %v402
        %v656 = vunpack.c.h.b16 %v402
        %v657 = vunpack.c.l.b16 %v403
        %v658 = vunpack.c.h.b16 %v403
        %v659 = vunpack.c.l.b16 %v404
        %v660 = vunpack.c.h.b16 %v404
        %v661 = vunpack.c.l.b16 %v405
        %v662 = vunpack.c.h.b16 %v405
        %v663 = vunpack.c.l.b16 %v406
        %v664 = vunpack.c.h.b16 %v406
        %v665 = vunpack.c.l.b16 %v407
        %v666 = vunpack.c.h.b16 %v407
        %v667 = vunpack.c.l.b16 %v408
        %v668 = vunpack.c.h.b16 %v408
        %v669 = vunpack.c.l.b16 %v409
        %v670 = vunpack.c.h.b16 %v409
        %v671 = vunpack.c.l.b16 %v410
        %v672 = vunpack.c.h.b16 %v410
        %v673 = vunpack.c.l.b16 %v411
        %v674 = vunpack.c.h.b16 %v411
        %v675 = vunpack.c.l.b16 %v412
        %v676 = vunpack.c.h.b16 %v412
        %v677 = vunpack.c.l.b16 %v413
        %v678 = vunpack.c.h.b16 %v413
        %v679 = vunpack.c.l.b16 %v414
        %v680 = vunpack.c.h.b16 %v414
        %v681 = vunpack.c.l.b16 %v415
        %v682 = vunpack.c.h.b16 %v415
        %v683 = vunpack.c.l.b16 %v416
        %v684 = vunpack.c.h.b16 %v416
        %v685 = vunpack.c.l.b16 %v417
        %v686 = vunpack.c.h.b16 %v417
        %v687 = vunpack.c.l.b16 %v418
        %v688 = vunpack.c.h.b16 %v418
        %v689 = vunpack.c.l.b16 %v419
        %v690 = vunpack.c.h.b16 %v419
        %v691 = vunpack.c.l.b16 %v420
        %v692 = vunpack.c.h.b16 %v420
        %v693 = vunpack.c.l.b16 %v421
        %v694 = vunpack.c.h.b16 %v421
        %v695 = vunpack.c.l.b16 %v422
        %v696 = vunpack.c.h.b16 %v422
        %v697 = vunpack.c.l.b16 %v423
        %v698 = vunpack.c.h.b16 %v423
        %v699 = vunpack.c.l.b16 %v424
        %v700 = vunpack.c.h.b16 %v424
        %v701 = vpack.c.b16 %v589, %v573
        %v702 = vpack.c.b16 %v590, %v574
        %v703 = vpack.c.b16 %v591, %v575
        %v704 = vpack.c.b16 %v592, %v576
        %v705 = vpack.c.b16 %v593, %v577
        %v706 = vpack.c.b16 %v594, %v578
        %v707 = vpack.c.b16 %v595, %v579
        %v708 = vpack.c.b16 %v596, %v580
        %v709 = vpack.c.b16 %v597, %v581
        %v710 = vpack.c.b16 %v598, %v582
        %v711 = vpack.c.b16 %v599, %v583
        %v712 = vpack.c.b16 %v600, %v584
        %v713 = vpack.c.b16 %v601, %v585
        %v714 = vpack.c.b16 %v602, %v586
        %v715 = vpack.c.b16 %v603, %v587
        %v716 = vpack.c.b16 %v604, %v588
        %v717 = vpack.c.b16 %v621, %v605
        %v718 = vpack.c.b16 %v622, %v606
        %v719 = vpack.c.b16 %v623, %v607
        %v720 = vpack.c.b16 %v624, %v608
        %v721 = vpack.c.b16 %v625, %v609
        %v722 = vpack.c.b16 %v626, %v610
        %v723 = vpack.c.b16 %v627, %v611
        %v724 = vpack.c.b16 %v628, %v612
        %v725 = vpack.c.b16 %v629, %v613
        %v726 = vpack.c.b16 %v630, %v614
        %v727 = vpack.c.b16 %v631, %v615
        %v728 = vpack.c.b16 %v632, %v616
        %v729 = vpack.c.b16 %v633, %v617
        %v730 = vpack.c.b16 %v634, %v618
        %v731 = vpack.c.b16 %v635, %v619
        %v732 = vpack.c.b16 %v636, %v620
        %v733 = vpack.c.b16 %v653, %v637
        %v734 = vpack.c.b16 %v654, %v638
        %v735 = vpack.c.b16 %v655, %v639
        %v736 = vpack.c.b16 %v656, %v640
        %v737 = vpack.c.b16 %v657, %v641
        %v738 = vpack.c.b16 %v658, %v642
        %v739 = vpack.c.b16 %v659, %v643
        %v740 = vpack.c.b16 %v660, %v644
        %v741 = vpack.c.b16 %v661, %v645
        %v742 = vpack.c.b16 %v662, %v646
        %v743 = vpack.c.b16 %v663, %v647
        %v744 = vpack.c.b16 %v664, %v648
        %v745 = vpack.c.b16 %v665, %v649
        %v746 = vpack.c.b16 %v666, %v650
        %v747 = vpack.c.b16 %v667, %v651
        %v748 = vpack.c.b16 %v668, %v652
        %v749 = vpack.c.b16 %v685, %v669
        %v750 = vpack.c.b16 %v686, %v670
        %v751 = vpack.c.b16 %v687, %v671
        %v752 = vpack.c.b16 %v688, %v672
        %v753 = vpack.c.b16 %v689, %v673
        %v754 = vpack.c.b16 %v690, %v674
        %v755 = vpack.c.b16 %v691, %v675
        %v756 = vpack.c.b16 %v692, %v676
        %v757 = vpack.c.b16 %v693, %v677
        %v758 = vpack.c.b16 %v694, %v678
        %v759 = vpack.c.b16 %v695, %v679
        %v760 = vpack.c.b16 %v696, %v680
        %v761 = vpack.c.b16 %v697, %v681
        %v762 = vpack.c.b16 %v698, %v682
        %v763 = vpack.c.b16 %v699, %v683
        %v764 = vpack.c.b16 %v700, %v684
        %vm829 = vcmask 523264
        %v831 = vsel %vm829, %v353, 0
        %v834 = vsel %vm829, %v354, 0
        %v837 = vsel %vm829, %v355, 0
        %v840 = vsel %vm829, %v356, 0
        %v843 = vsel %vm829, %v357, 0
        %v846 = vsel %vm829, %v358, 0
        %v849 = vsel %vm829, %v359, 0
        %v852 = vsel %vm829, %v360, 0
        %854 = vmatprep.subr.bf16.mxu0 %v702
        %855 = vmatpush1.bf16.msra.mxu0 %v701
        %856 = vmatprep.subr.bf16.mxu0 %v718
        %857 = vmatpush1.bf16.msra.mxu0 %v717
        %858 = vmatprep.subr.bf16.mxu0 %v734
        %859 = vmatpush1.bf16.msra.mxu0 %v733
        %860 = vmatprep.subr.bf16.mxu0 %v750
        %861 = vmatpush1.bf16.msra.mxu0 %v749
        %862 = vmatprep.subr.bf16.mxu0 0
        %863 = vmatpush1.bf16.msra.mxu0 0
        %864 = vmatprep.subr.bf16.mxu0 0
        %865 = vmatpush1.bf16.msra.mxu0 0
        %866 = vmatprep.subr.bf16.mxu0 0
        %867 = vmatpush1.bf16.msra.mxu0 0
        %868 = vmatprep.subr.bf16.mxu0 0
        %869 = vmatpush1.bf16.msra.mxu0 0
        %870 = vmatprep.subr.bf16.mxu0 0
        %871 = vmatpush1.bf16.msra.mxu0 0
        %872 = vmatprep.subr.bf16.mxu0 0
        %873 = vmatpush1.bf16.msra.mxu0 0
        %874 = vmatprep.subr.bf16.mxu0 0
        %875 = vmatpush1.bf16.msra.mxu0 0
        %876 = vmatprep.subr.bf16.mxu0 0
        %877 = vmatpush1.bf16.msra.mxu0 0
        %878 = vmatprep.subr.bf16.mxu0 0
        %879 = vmatpush1.bf16.msra.mxu0 0
        %880 = vmatprep.subr.bf16.mxu0 0
        %881 = vmatpush1.bf16.msra.mxu0 0
        %882 = vmatprep.subr.bf16.mxu0 0
        %883 = vmatpush1.bf16.msra.mxu0 0
        %884 = vmatprep.subr.bf16.mxu0 0
        %885 = vmatpush1.bf16.msra.mxu0 0
        %886 = vmatprep.mubr.bf16.mxu0 0
        %887 = vmatmul.mubr.bf16.gmra.mrb[0].mxu0 %v831
        %v888 = vpop.f32.mrb[0].mxu0
        %v889 = vadd.f32 %v432, %v888
        %v890 = vpop.f32.mrb[0].mxu0
        %v891 = vadd.f32 %v436, %v890
        %v892 = vpop.f32.mrb[0].mxu0
        %v893 = vadd.f32 %v432, %v892
        %v894 = vpop.f32.mrb[0].mxu0
        %v895 = vadd.f32 %v436, %v894
        %896 = vmatprep.mubr.bf16.mxu0 0
        %897 = vmatmul.mubr.bf16.gmra.mrb[0].mxu0 %v834
        %v898 = vpop.f32.mrb[0].mxu0
        %v899 = vadd.f32 %v432, %v898
        %v900 = vpop.f32.mrb[0].mxu0
        %v901 = vadd.f32 %v436, %v900
        %v902 = vpop.f32.mrb[0].mxu0
        %v903 = vadd.f32 %v432, %v902
        %v904 = vpop.f32.mrb[0].mxu0
        %v905 = vadd.f32 %v436, %v904
        %906 = vmatprep.mubr.bf16.mxu0 0
        %907 = vmatmul.mubr.bf16.gmra.mrb[0].mxu0 %v837
        %v908 = vpop.f32.mrb[0].mxu0
        %v909 = vadd.f32 %v432, %v908
        %v910 = vpop.f32.mrb[0].mxu0
        %v911 = vadd.f32 %v436, %v910
        %v912 = vpop.f32.mrb[0].mxu0
        %v913 = vadd.f32 %v432, %v912
        %v914 = vpop.f32.mrb[0].mxu0
        %v915 = vadd.f32 %v436, %v914
        %916 = vmatprep.mubr.bf16.mxu0 0
        %917 = vmatmul.mubr.bf16.gmra.mrb[0].mxu0 %v840
        %v918 = vpop.f32.mrb[0].mxu0
        %v919 = vadd.f32 %v432, %v918
        %v920 = vpop.f32.mrb[0].mxu0
        %v921 = vadd.f32 %v436, %v920
        %v922 = vpop.f32.mrb[0].mxu0
        %v923 = vadd.f32 %v432, %v922
        %v924 = vpop.f32.mrb[0].mxu0
        %v925 = vadd.f32 %v436, %v924
        %926 = vmatprep.mubr.bf16.mxu0 0
        %927 = vmatmul.mubr.bf16.gmra.mrb[0].mxu0 %v843
        %v928 = vpop.f32.mrb[0].mxu0
        %v929 = vadd.f32 %v432, %v928
        %v930 = vpop.f32.mrb[0].mxu0
        %v931 = vadd.f32 %v436, %v930
        %v932 = vpop.f32.mrb[0].mxu0
        %v933 = vadd.f32 %v432, %v932
        %v934 = vpop.f32.mrb[0].mxu0
        %v935 = vadd.f32 %v436, %v934
        %936 = vmatprep.mubr.bf16.mxu0 0
        %937 = vmatmul.mubr.bf16.gmra.mrb[0].mxu0 %v846
        %v938 = vpop.f32.mrb[0].mxu0
        %v939 = vadd.f32 %v432, %v938
        %v940 = vpop.f32.mrb[0].mxu0
        %v941 = vadd.f32 %v436, %v940
        %v942 = vpop.f32.mrb[0].mxu0
        %v943 = vadd.f32 %v432, %v942
        %v944 = vpop.f32.mrb[0].mxu0
        %v945 = vadd.f32 %v436, %v944
        %946 = vmatprep.mubr.bf16.mxu0 0
        %947 = vmatmul.mubr.bf16.gmra.mrb[0].mxu0 %v849
        %v948 = vpop.f32.mrb[0].mxu0
        %v949 = vadd.f32 %v432, %v948
        %v950 = vpop.f32.mrb[0].mxu0
        %v951 = vadd.f32 %v436, %v950
        %v952 = vpop.f32.mrb[0].mxu0
        %v953 = vadd.f32 %v432, %v952
        %v954 = vpop.f32.mrb[0].mxu0
        %v955 = vadd.f32 %v436, %v954
        %956 = vmatprep.mubr.bf16.mxu0 0
        %957 = vmatmul.mubr.bf16.gmra.mrb[0].mxu0 %v852
        %v958 = vpop.f32.mrb[0].mxu0
        %v959 = vadd.f32 %v432, %v958
        %v960 = vpop.f32.mrb[0].mxu0
        %v961 = vadd.f32 %v436, %v960
        %v962 = vpop.f32.mrb[0].mxu0
        %v963 = vadd.f32 %v432, %v962
        %v964 = vpop.f32.mrb[0].mxu0
        %v965 = vadd.f32 %v436, %v964
        %966 = vdwg.mxu0
        %967 = vmatprep.subr.bf16.mxu0 %v704
        %968 = vmatpush1.bf16.msra.mxu0 %v703
        %969 = vmatprep.subr.bf16.mxu0 %v720
        %970 = vmatpush1.bf16.msra.mxu0 %v719
        %971 = vmatprep.subr.bf16.mxu0 %v736
        %972 = vmatpush1.bf16.msra.mxu0 %v735
        %973 = vmatprep.subr.bf16.mxu0 %v752
        %974 = vmatpush1.bf16.msra.mxu0 %v751
        %975 = vmatprep.subr.bf16.mxu0 0
        %976 = vmatpush1.bf16.msra.mxu0 0
        %977 = vmatprep.subr.bf16.mxu0 0
        %978 = vmatpush1.bf16.msra.mxu0 0
        %979 = vmatprep.subr.bf16.mxu0 0
        %980 = vmatpush1.bf16.msra.mxu0 0
        %981 = vmatprep.subr.bf16.mxu0 0
        %982 = vmatpush1.bf16.msra.mxu0 0
        %983 = vmatprep.subr.bf16.mxu0 0
        %984 = vmatpush1.bf16.msra.mxu0 0
        %985 = vmatprep.subr.bf16.mxu0 0
        %986 = vmatpush1.bf16.msra.mxu0 0
        %987 = vmatprep.subr.bf16.mxu0 0
        %988 = vmatpush1.bf16.msra.mxu0 0
        %989 = vmatprep.subr.bf16.mxu0 0
        %990 = vmatpush1.bf16.msra.mxu0 0
        %991 = vmatprep.subr.bf16.mxu0 0
        %992 = vmatpush1.bf16.msra.mxu0 0
        %993 = vmatprep.subr.bf16.mxu0 0
        %994 = vmatpush1.bf16.msra.mxu0 0
        %995 = vmatprep.subr.bf16.mxu0 0
        %996 = vmatpush1.bf16.msra.mxu0 0
        %997 = vmatprep.subr.bf16.mxu0 0
        %998 = vmatpush1.bf16.msra.mxu0 0
        %999 = vmatprep.mubr.bf16.mxu0 0
        %1000 = vmatmul.mubr.bf16.gmra.mrb[0].mxu0 %v831
        %v1001 = vpop.f32.mrb[0].mxu0
        %v1002 = vadd.f32 %v440, %v1001
        %v1003 = vpop.f32.mrb[0].mxu0
        %v1004 = vadd.f32 %v444, %v1003
        %v1005 = vpop.f32.mrb[0].mxu0
        %v1006 = vadd.f32 %v440, %v1005
        %v1007 = vpop.f32.mrb[0].mxu0
        %v1008 = vadd.f32 %v444, %v1007
        %1009 = vmatprep.mubr.bf16.mxu0 0
        %1010 = vmatmul.mubr.bf16.gmra.mrb[0].mxu0 %v834
        %v1011 = vpop.f32.mrb[0].mxu0
        %v1012 = vadd.f32 %v440, %v1011
        %v1013 = vpop.f32.mrb[0].mxu0
        %v1014 = vadd.f32 %v444, %v1013
        %v1015 = vpop.f32.mrb[0].mxu0
        %v1016 = vadd.f32 %v440, %v1015
        %v1017 = vpop.f32.mrb[0].mxu0
        %v1018 = vadd.f32 %v444, %v1017
        %1019 = vmatprep.mubr.bf16.mxu0 0
        %1020 = vmatmul.mubr.bf16.gmra.mrb[0].mxu0 %v837
        %v1021 = vpop.f32.mrb[0].mxu0
        %v1022 = vadd.f32 %v440, %v1021
        %v1023 = vpop.f32.mrb[0].mxu0
        %v1024 = vadd.f32 %v444, %v1023
        %v1025 = vpop.f32.mrb[0].mxu0
        %v1026 = vadd.f32 %v440, %v1025
        %v1027 = vpop.f32.mrb[0].mxu0
        %v1028 = vadd.f32 %v444, %v1027
        %1029 = vmatprep.mubr.bf16.mxu0 0
        %1030 = vmatmul.mubr.bf16.gmra.mrb[0].mxu0 %v840
        %v1031 = vpop.f32.mrb[0].mxu0
        %v1032 = vadd.f32 %v440, %v1031
        %v1033 = vpop.f32.mrb[0].mxu0
        %v1034 = vadd.f32 %v444, %v1033
        %v1035 = vpop.f32.mrb[0].mxu0
        %v1036 = vadd.f32 %v440, %v1035
        %v1037 = vpop.f32.mrb[0].mxu0
        %v1038 = vadd.f32 %v444, %v1037
        %1039 = vmatprep.mubr.bf16.mxu0 0
        %1040 = vmatmul.mubr.bf16.gmra.mrb[0].mxu0 %v843
        %v1041 = vpop.f32.mrb[0].mxu0
        %v1042 = vadd.f32 %v440, %v1041
        %v1043 = vpop.f32.mrb[0].mxu0
        %v1044 = vadd.f32 %v444, %v1043
        %v1045 = vpop.f32.mrb[0].mxu0
        %v1046 = vadd.f32 %v440, %v1045
        %v1047 = vpop.f32.mrb[0].mxu0
        %v1048 = vadd.f32 %v444, %v1047
        %1049 = vmatprep.mubr.bf16.mxu0 0
        %1050 = vmatmul.mubr.bf16.gmra.mrb[0].mxu0 %v846
        %v1051 = vpop.f32.mrb[0].mxu0
        %v1052 = vadd.f32 %v440, %v1051
        %v1053 = vpop.f32.mrb[0].mxu0
        %v1054 = vadd.f32 %v444, %v1053
        %v1055 = vpop.f32.mrb[0].mxu0
        %v1056 = vadd.f32 %v440, %v1055
        %v1057 = vpop.f32.mrb[0].mxu0
        %v1058 = vadd.f32 %v444, %v1057
        %1059 = vmatprep.mubr.bf16.mxu0 0
        %1060 = vmatmul.mubr.bf16.gmra.mrb[0].mxu0 %v849
        %v1061 = vpop.f32.mrb[0].mxu0
        %v1062 = vadd.f32 %v440, %v1061
        %v1063 = vpop.f32.mrb[0].mxu0
        %v1064 = vadd.f32 %v444, %v1063
        %v1065 = vpop.f32.mrb[0].mxu0
        %v1066 = vadd.f32 %v440, %v1065
        %v1067 = vpop.f32.mrb[0].mxu0
        %v1068 = vadd.f32 %v444, %v1067
        %1069 = vmatprep.mubr.bf16.mxu0 0
        %1070 = vmatmul.mubr.bf16.gmra.mrb[0].mxu0 %v852
        %v1071 = vpop.f32.mrb[0].mxu0
        %v1072 = vadd.f32 %v440, %v1071
        %v1073 = vpop.f32.mrb[0].mxu0
        %v1074 = vadd.f32 %v444, %v1073
        %v1075 = vpop.f32.mrb[0].mxu0
        %v1076 = vadd.f32 %v440, %v1075
        %v1077 = vpop.f32.mrb[0].mxu0
        %v1078 = vadd.f32 %v444, %v1077
        %1079 = vdwg.mxu0
        %1080 = vmatprep.subr.bf16.mxu0 %v706
        %1081 = vmatpush1.bf16.msra.mxu0 %v705
        %1082 = vmatprep.subr.bf16.mxu0 %v722
        %1083 = vmatpush1.bf16.msra.mxu0 %v721
        %1084 = vmatprep.subr.bf16.mxu0 %v738
        %1085 = vmatpush1.bf16.msra.mxu0 %v737
        %1086 = vmatprep.subr.bf16.mxu0 %v754
        %1087 = vmatpush1.bf16.msra.mxu0 %v753
        %1088 = vmatprep.subr.bf16.mxu0 0
        %1089 = vmatpush1.bf16.msra.mxu0 0
        %1090 = vmatprep.subr.bf16.mxu0 0
        %1091 = vmatpush1.bf16.msra.mxu0 0
        %1092 = vmatprep.subr.bf16.mxu0 0
        %1093 = vmatpush1.bf16.msra.mxu0 0
        %1094 = vmatprep.subr.bf16.mxu0 0
        %1095 = vmatpush1.bf16.msra.mxu0 0
        %1096 = vmatprep.subr.bf16.mxu0 0
        %1097 = vmatpush1.bf16.msra.mxu0 0
        %1098 = vmatprep.subr.bf16.mxu0 0
        %1099 = vmatpush1.bf16.msra.mxu0 0
        %1100 = vmatprep.subr.bf16.mxu0 0
        %1101 = vmatpush1.bf16.msra.mxu0 0
        %1102 = vmatprep.subr.bf16.mxu0 0
        %1103 = vmatpush1.bf16.msra.mxu0 0
        %1104 = vmatprep.subr.bf16.mxu0 0
        %1105 = vmatpush1.bf16.msra.mxu0 0
        %1106 = vmatprep.subr.bf16.mxu0 0
        %1107 = vmatpush1.bf16.msra.mxu0 0
        %1108 = vmatprep.subr.bf16.mxu0 0
        %1109 = vmatpush1.bf16.msra.mxu0 0
        %1110 = vmatprep.subr.bf16.mxu0 0
        %1111 = vmatpush1.bf16.msra.mxu0 0
        %1112 = vmatprep.mubr.bf16.mxu0 0
        %1113 = vmatmul.mubr.bf16.gmra.mrb[0].mxu0 %v831
        %v1114 = vpop.f32.mrb[0].mxu0
        %v1115 = vadd.f32 %v448, %v1114
        %v1116 = vpop.f32.mrb[0].mxu0
        %v1117 = vadd.f32 %v452, %v1116
        %v1118 = vpop.f32.mrb[0].mxu0
        %v1119 = vadd.f32 %v448, %v1118
        %v1120 = vpop.f32.mrb[0].mxu0
        %v1121 = vadd.f32 %v452, %v1120
        %1122 = vmatprep.mubr.bf16.mxu0 0
        %1123 = vmatmul.mubr.bf16.gmra.mrb[0].mxu0 %v834
        %v1124 = vpop.f32.mrb[0].mxu0
        %v1125 = vadd.f32 %v448, %v1124
        %v1126 = vpop.f32.mrb[0].mxu0
        %v1127 = vadd.f32 %v452, %v1126
        %v1128 = vpop.f32.mrb[0].mxu0
        %v1129 = vadd.f32 %v448, %v1128
        %v1130 = vpop.f32.mrb[0].mxu0
        %v1131 = vadd.f32 %v452, %v1130
        %1132 = vmatprep.mubr.bf16.mxu0 0
        %1133 = vmatmul.mubr.bf16.gmra.mrb[0].mxu0 %v837
        %v1134 = vpop.f32.mrb[0].mxu0
        %v1135 = vadd.f32 %v448, %v1134
        %v1136 = vpop.f32.mrb[0].mxu0
        %v1137 = vadd.f32 %v452, %v1136
        %v1138 = vpop.f32.mrb[0].mxu0
        %v1139 = vadd.f32 %v448, %v1138
        %v1140 = vpop.f32.mrb[0].mxu0
        %v1141 = vadd.f32 %v452, %v1140
        %1142 = vmatprep.mubr.bf16.mxu0 0
        %1143 = vmatmul.mubr.bf16.gmra.mrb[0].mxu0 %v840
        %v1144 = vpop.f32.mrb[0].mxu0
        %v1145 = vadd.f32 %v448, %v1144
        %v1146 = vpop.f32.mrb[0].mxu0
        %v1147 = vadd.f32 %v452, %v1146
        %v1148 = vpop.f32.mrb[0].mxu0
        %v1149 = vadd.f32 %v448, %v1148
        %v1150 = vpop.f32.mrb[0].mxu0
        %v1151 = vadd.f32 %v452, %v1150
        %1152 = vmatprep.mubr.bf16.mxu0 0
        %1153 = vmatmul.mubr.bf16.gmra.mrb[0].mxu0 %v843
        %v1154 = vpop.f32.mrb[0].mxu0
        %v1155 = vadd.f32 %v448, %v1154
        %v1156 = vpop.f32.mrb[0].mxu0
        %v1157 = vadd.f32 %v452, %v1156
        %v1158 = vpop.f32.mrb[0].mxu0
        %v1159 = vadd.f32 %v448, %v1158
        %v1160 = vpop.f32.mrb[0].mxu0
        %v1161 = vadd.f32 %v452, %v1160
        %1162 = vmatprep.mubr.bf16.mxu0 0
        %1163 = vmatmul.mubr.bf16.gmra.mrb[0].mxu0 %v846
        %v1164 = vpop.f32.mrb[0].mxu0
        %v1165 = vadd.f32 %v448, %v1164
        %v1166 = vpop.f32.mrb[0].mxu0
        %v1167 = vadd.f32 %v452, %v1166
        %v1168 = vpop.f32.mrb[0].mxu0
        %v1169 = vadd.f32 %v448, %v1168
        %v1170 = vpop.f32.mrb[0].mxu0
        %v1171 = vadd.f32 %v452, %v1170
        %1172 = vmatprep.mubr.bf16.mxu0 0
        %1173 = vmatmul.mubr.bf16.gmra.mrb[0].mxu0 %v849
        %v1174 = vpop.f32.mrb[0].mxu0
        %v1175 = vadd.f32 %v448, %v1174
        %v1176 = vpop.f32.mrb[0].mxu0
        %v1177 = vadd.f32 %v452, %v1176
        %v1178 = vpop.f32.mrb[0].mxu0
        %v1179 = vadd.f32 %v448, %v1178
        %v1180 = vpop.f32.mrb[0].mxu0
        %v1181 = vadd.f32 %v452, %v1180
        %1182 = vmatprep.mubr.bf16.mxu0 0
        %1183 = vmatmul.mubr.bf16.gmra.mrb[0].mxu0 %v852
        %v1184 = vpop.f32.mrb[0].mxu0
        %v1185 = vadd.f32 %v448, %v1184
        %v1186 = vpop.f32.mrb[0].mxu0
        %v1187 = vadd.f32 %v452, %v1186
        %v1188 = vpop.f32.mrb[0].mxu0
        %v1189 = vadd.f32 %v448, %v1188
        %v1190 = vpop.f32.mrb[0].mxu0
        %v1191 = vadd.f32 %v452, %v1190
        %1192 = vdwg.mxu0
        %1193 = vmatprep.subr.bf16.mxu0 %v708
        %1194 = vmatpush1.bf16.msra.mxu0 %v707
        %1195 = vmatprep.subr.bf16.mxu0 %v724
        %1196 = vmatpush1.bf16.msra.mxu0 %v723
        %1197 = vmatprep.subr.bf16.mxu0 %v740
        %1198 = vmatpush1.bf16.msra.mxu0 %v739
        %1199 = vmatprep.subr.bf16.mxu0 %v756
        %1200 = vmatpush1.bf16.msra.mxu0 %v755
        %1201 = vmatprep.subr.bf16.mxu0 0
        %1202 = vmatpush1.bf16.msra.mxu0 0
        %1203 = vmatprep.subr.bf16.mxu0 0
        %1204 = vmatpush1.bf16.msra.mxu0 0
        %1205 = vmatprep.subr.bf16.mxu0 0
        %1206 = vmatpush1.bf16.msra.mxu0 0
        %1207 = vmatprep.subr.bf16.mxu0 0
        %1208 = vmatpush1.bf16.msra.mxu0 0
        %1209 = vmatprep.subr.bf16.mxu0 0
        %1210 = vmatpush1.bf16.msra.mxu0 0
        %1211 = vmatprep.subr.bf16.mxu0 0
        %1212 = vmatpush1.bf16.msra.mxu0 0
        %1213 = vmatprep.subr.bf16.mxu0 0
        %1214 = vmatpush1.bf16.msra.mxu0 0
        %1215 = vmatprep.subr.bf16.mxu0 0
        %1216 = vmatpush1.bf16.msra.mxu0 0
        %1217 = vmatprep.subr.bf16.mxu0 0
        %1218 = vmatpush1.bf16.msra.mxu0 0
        %1219 = vmatprep.subr.bf16.mxu0 0
        %1220 = vmatpush1.bf16.msra.mxu0 0
        %1221 = vmatprep.subr.bf16.mxu0 0
        %1222 = vmatpush1.bf16.msra.mxu0 0
        %1223 = vmatprep.subr.bf16.mxu0 0
        %1224 = vmatpush1.bf16.msra.mxu0 0
        %1225 = vmatprep.mubr.bf16.mxu0 0
        %1226 = vmatmul.mubr.bf16.gmra.mrb[0].mxu0 %v831
        %v1227 = vpop.f32.mrb[0].mxu0
        %v1228 = vadd.f32 %v456, %v1227
        %v1229 = vpop.f32.mrb[0].mxu0
        %v1230 = vadd.f32 %v460, %v1229
        %v1231 = vpop.f32.mrb[0].mxu0
        %v1232 = vadd.f32 %v456, %v1231
        %v1233 = vpop.f32.mrb[0].mxu0
        %v1234 = vadd.f32 %v460, %v1233
        %1235 = vmatprep.mubr.bf16.mxu0 0
        %1236 = vmatmul.mubr.bf16.gmra.mrb[0].mxu0 %v834
        %v1237 = vpop.f32.mrb[0].mxu0
        %v1238 = vadd.f32 %v456, %v1237
        %v1239 = vpop.f32.mrb[0].mxu0
        %v1240 = vadd.f32 %v460, %v1239
        %v1241 = vpop.f32.mrb[0].mxu0
        %v1242 = vadd.f32 %v456, %v1241
        %v1243 = vpop.f32.mrb[0].mxu0
        %v1244 = vadd.f32 %v460, %v1243
        %1245 = vmatprep.mubr.bf16.mxu0 0
        %1246 = vmatmul.mubr.bf16.gmra.mrb[0].mxu0 %v837
        %v1247 = vpop.f32.mrb[0].mxu0
        %v1248 = vadd.f32 %v456, %v1247
        %v1249 = vpop.f32.mrb[0].mxu0
        %v1250 = vadd.f32 %v460, %v1249
        %v1251 = vpop.f32.mrb[0].mxu0
        %v1252 = vadd.f32 %v456, %v1251
        %v1253 = vpop.f32.mrb[0].mxu0
        %v1254 = vadd.f32 %v460, %v1253
        %1255 = vmatprep.mubr.bf16.mxu0 0
        %1256 = vmatmul.mubr.bf16.gmra.mrb[0].mxu0 %v840
        %v1257 = vpop.f32.mrb[0].mxu0
        %v1258 = vadd.f32 %v456, %v1257
        %v1259 = vpop.f32.mrb[0].mxu0
        %v1260 = vadd.f32 %v460, %v1259
        %v1261 = vpop.f32.mrb[0].mxu0
        %v1262 = vadd.f32 %v456, %v1261
        %v1263 = vpop.f32.mrb[0].mxu0
        %v1264 = vadd.f32 %v460, %v1263
        %1265 = vmatprep.mubr.bf16.mxu0 0
        %1266 = vmatmul.mubr.bf16.gmra.mrb[0].mxu0 %v843
        %v1267 = vpop.f32.mrb[0].mxu0
        %v1268 = vadd.f32 %v456, %v1267
        %v1269 = vpop.f32.mrb[0].mxu0
        %v1270 = vadd.f32 %v460, %v1269
        %v1271 = vpop.f32.mrb[0].mxu0
        %v1272 = vadd.f32 %v456, %v1271
        %v1273 = vpop.f32.mrb[0].mxu0
        %v1274 = vadd.f32 %v460, %v1273
        %1275 = vmatprep.mubr.bf16.mxu0 0
        %1276 = vmatmul.mubr.bf16.gmra.mrb[0].mxu0 %v846
        %v1277 = vpop.f32.mrb[0].mxu0
        %v1278 = vadd.f32 %v456, %v1277
        %v1279 = vpop.f32.mrb[0].mxu0
        %v1280 = vadd.f32 %v460, %v1279
        %v1281 = vpop.f32.mrb[0].mxu0
        %v1282 = vadd.f32 %v456, %v1281
        %v1283 = vpop.f32.mrb[0].mxu0
        %v1284 = vadd.f32 %v460, %v1283
        %1285 = vmatprep.mubr.bf16.mxu0 0
        %1286 = vmatmul.mubr.bf16.gmra.mrb[0].mxu0 %v849
        %v1287 = vpop.f32.mrb[0].mxu0
        %v1288 = vadd.f32 %v456, %v1287
        %v1289 = vpop.f32.mrb[0].mxu0
        %v1290 = vadd.f32 %v460, %v1289
        %v1291 = vpop.f32.mrb[0].mxu0
        %v1292 = vadd.f32 %v456, %v1291
        %v1293 = vpop.f32.mrb[0].mxu0
        %v1294 = vadd.f32 %v460, %v1293
        %1295 = vmatprep.mubr.bf16.mxu0 0
        %1296 = vmatmul.mubr.bf16.gmra.mrb[0].mxu0 %v852
        %v1297 = vpop.f32.mrb[0].mxu0
        %v1298 = vadd.f32 %v456, %v1297
        %v1299 = vpop.f32.mrb[0].mxu0
        %v1300 = vadd.f32 %v460, %v1299
        %v1301 = vpop.f32.mrb[0].mxu0
        %v1302 = vadd.f32 %v456, %v1301
        %v1303 = vpop.f32.mrb[0].mxu0
        %v1304 = vadd.f32 %v460, %v1303
        %1305 = vdwg.mxu0
        %1306 = vmatprep.subr.bf16.mxu0 %v710
        %1307 = vmatpush1.bf16.msra.mxu0 %v709
        %1308 = vmatprep.subr.bf16.mxu0 %v726
        %1309 = vmatpush1.bf16.msra.mxu0 %v725
        %1310 = vmatprep.subr.bf16.mxu0 %v742
        %1311 = vmatpush1.bf16.msra.mxu0 %v741
        %1312 = vmatprep.subr.bf16.mxu0 %v758
        %1313 = vmatpush1.bf16.msra.mxu0 %v757
        %1314 = vmatprep.subr.bf16.mxu0 0
        %1315 = vmatpush1.bf16.msra.mxu0 0
        %1316 = vmatprep.subr.bf16.mxu0 0
        %1317 = vmatpush1.bf16.msra.mxu0 0
        %1318 = vmatprep.subr.bf16.mxu0 0
        %1319 = vmatpush1.bf16.msra.mxu0 0
        %1320 = vmatprep.subr.bf16.mxu0 0
        %1321 = vmatpush1.bf16.msra.mxu0 0
        %1322 = vmatprep.subr.bf16.mxu0 0
        %1323 = vmatpush1.bf16.msra.mxu0 0
        %1324 = vmatprep.subr.bf16.mxu0 0
        %1325 = vmatpush1.bf16.msra.mxu0 0
        %1326 = vmatprep.subr.bf16.mxu0 0
        %1327 = vmatpush1.bf16.msra.mxu0 0
        %1328 = vmatprep.subr.bf16.mxu0 0
        %1329 = vmatpush1.bf16.msra.mxu0 0
        %1330 = vmatprep.subr.bf16.mxu0 0
        %1331 = vmatpush1.bf16.msra.mxu0 0
        %1332 = vmatprep.subr.bf16.mxu0 0
        %1333 = vmatpush1.bf16.msra.mxu0 0
        %1334 = vmatprep.subr.bf16.mxu0 0
        %1335 = vmatpush1.bf16.msra.mxu0 0
        %1336 = vmatprep.subr.bf16.mxu0 0
        %1337 = vmatpush1.bf16.msra.mxu0 0
        %1338 = vmatprep.mubr.bf16.mxu0 0
        %1339 = vmatmul.mubr.bf16.gmra.mrb[0].mxu0 %v831
        %v1340 = vpop.f32.mrb[0].mxu0
        %v1341 = vadd.f32 %v464, %v1340
        %v1342 = vpop.f32.mrb[0].mxu0
        %v1343 = vadd.f32 %v468, %v1342
        %v1344 = vpop.f32.mrb[0].mxu0
        %v1345 = vadd.f32 %v464, %v1344
        %v1346 = vpop.f32.mrb[0].mxu0
        %v1347 = vadd.f32 %v468, %v1346
        %1348 = vmatprep.mubr.bf16.mxu0 0
        %1349 = vmatmul.mubr.bf16.gmra.mrb[0].mxu0 %v834
        %v1350 = vpop.f32.mrb[0].mxu0
        %v1351 = vadd.f32 %v464, %v1350
        %v1352 = vpop.f32.mrb[0].mxu0
        %v1353 = vadd.f32 %v468, %v1352
        %v1354 = vpop.f32.mrb[0].mxu0
        %v1355 = vadd.f32 %v464, %v1354
        %v1356 = vpop.f32.mrb[0].mxu0
        %v1357 = vadd.f32 %v468, %v1356
        %1358 = vmatprep.mubr.bf16.mxu0 0
        %1359 = vmatmul.mubr.bf16.gmra.mrb[0].mxu0 %v837
        %v1360 = vpop.f32.mrb[0].mxu0
        %v1361 = vadd.f32 %v464, %v1360
        %v1362 = vpop.f32.mrb[0].mxu0
        %v1363 = vadd.f32 %v468, %v1362
        %v1364 = vpop.f32.mrb[0].mxu0
        %v1365 = vadd.f32 %v464, %v1364
        %v1366 = vpop.f32.mrb[0].mxu0
        %v1367 = vadd.f32 %v468, %v1366
        %1368 = vmatprep.mubr.bf16.mxu0 0
        %1369 = vmatmul.mubr.bf16.gmra.mrb[0].mxu0 %v840
        %v1370 = vpop.f32.mrb[0].mxu0
        %v1371 = vadd.f32 %v464, %v1370
        %v1372 = vpop.f32.mrb[0].mxu0
        %v1373 = vadd.f32 %v468, %v1372
        %v1374 = vpop.f32.mrb[0].mxu0
        %v1375 = vadd.f32 %v464, %v1374
        %v1376 = vpop.f32.mrb[0].mxu0
        %v1377 = vadd.f32 %v468, %v1376
        %1378 = vmatprep.mubr.bf16.mxu0 0
        %1379 = vmatmul.mubr.bf16.gmra.mrb[0].mxu0 %v843
        %v1380 = vpop.f32.mrb[0].mxu0
        %v1381 = vadd.f32 %v464, %v1380
        %v1382 = vpop.f32.mrb[0].mxu0
        %v1383 = vadd.f32 %v468, %v1382
        %v1384 = vpop.f32.mrb[0].mxu0
        %v1385 = vadd.f32 %v464, %v1384
        %v1386 = vpop.f32.mrb[0].mxu0
        %v1387 = vadd.f32 %v468, %v1386
        %1388 = vmatprep.mubr.bf16.mxu0 0
        %1389 = vmatmul.mubr.bf16.gmra.mrb[0].mxu0 %v846
        %v1390 = vpop.f32.mrb[0].mxu0
        %v1391 = vadd.f32 %v464, %v1390
        %v1392 = vpop.f32.mrb[0].mxu0
        %v1393 = vadd.f32 %v468, %v1392
        %v1394 = vpop.f32.mrb[0].mxu0
        %v1395 = vadd.f32 %v464, %v1394
        %v1396 = vpop.f32.mrb[0].mxu0
        %v1397 = vadd.f32 %v468, %v1396
        %1398 = vmatprep.mubr.bf16.mxu0 0
        %1399 = vmatmul.mubr.bf16.gmra.mrb[0].mxu0 %v849
        %v1400 = vpop.f32.mrb[0].mxu0
        %v1401 = vadd.f32 %v464, %v1400
        %v1402 = vpop.f32.mrb[0].mxu0
        %v1403 = vadd.f32 %v468, %v1402
        %v1404 = vpop.f32.mrb[0].mxu0
        %v1405 = vadd.f32 %v464, %v1404
        %v1406 = vpop.f32.mrb[0].mxu0
        %v1407 = vadd.f32 %v468, %v1406
        %1408 = vmatprep.mubr.bf16.mxu0 0
        %1409 = vmatmul.mubr.bf16.gmra.mrb[0].mxu0 %v852
        %v1410 = vpop.f32.mrb[0].mxu0
        %v1411 = vadd.f32 %v464, %v1410
        %v1412 = vpop.f32.mrb[0].mxu0
        %v1413 = vadd.f32 %v468, %v1412
        %v1414 = vpop.f32.mrb[0].mxu0
        %v1415 = vadd.f32 %v464, %v1414
        %v1416 = vpop.f32.mrb[0].mxu0
        %v1417 = vadd.f32 %v468, %v1416
        %1418 = vdwg.mxu0
        %1419 = vmatprep.subr.bf16.mxu0 %v712
        %1420 = vmatpush1.bf16.msra.mxu0 %v711
        %1421 = vmatprep.subr.bf16.mxu0 %v728
        %1422 = vmatpush1.bf16.msra.mxu0 %v727
        %1423 = vmatprep.subr.bf16.mxu0 %v744
        %1424 = vmatpush1.bf16.msra.mxu0 %v743
        %1425 = vmatprep.subr.bf16.mxu0 %v760
        %1426 = vmatpush1.bf16.msra.mxu0 %v759
        %1427 = vmatprep.subr.bf16.mxu0 0
        %1428 = vmatpush1.bf16.msra.mxu0 0
        %1429 = vmatprep.subr.bf16.mxu0 0
        %1430 = vmatpush1.bf16.msra.mxu0 0
        %1431 = vmatprep.subr.bf16.mxu0 0
        %1432 = vmatpush1.bf16.msra.mxu0 0
        %1433 = vmatprep.subr.bf16.mxu0 0
        %1434 = vmatpush1.bf16.msra.mxu0 0
        %1435 = vmatprep.subr.bf16.mxu0 0
        %1436 = vmatpush1.bf16.msra.mxu0 0
        %1437 = vmatprep.subr.bf16.mxu0 0
        %1438 = vmatpush1.bf16.msra.mxu0 0
        %1439 = vmatprep.subr.bf16.mxu0 0
        %1440 = vmatpush1.bf16.msra.mxu0 0
        %1441 = vmatprep.subr.bf16.mxu0 0
        %1442 = vmatpush1.bf16.msra.mxu0 0
        %1443 = vmatprep.subr.bf16.mxu0 0
        %1444 = vmatpush1.bf16.msra.mxu0 0
        %1445 = vmatprep.subr.bf16.mxu0 0
        %1446 = vmatpush1.bf16.msra.mxu0 0
        %1447 = vmatprep.subr.bf16.mxu0 0
        %1448 = vmatpush1.bf16.msra.mxu0 0
        %1449 = vmatprep.subr.bf16.mxu0 0
        %1450 = vmatpush1.bf16.msra.mxu0 0
        %1451 = vmatprep.mubr.bf16.mxu0 0
        %1452 = vmatmul.mubr.bf16.gmra.mrb[0].mxu0 %v831
        %v1453 = vpop.f32.mrb[0].mxu0
        %v1454 = vadd.f32 %v472, %v1453
        %v1455 = vpop.f32.mrb[0].mxu0
        %v1456 = vadd.f32 %v476, %v1455
        %v1457 = vpop.f32.mrb[0].mxu0
        %v1458 = vadd.f32 %v472, %v1457
        %v1459 = vpop.f32.mrb[0].mxu0
        %v1460 = vadd.f32 %v476, %v1459
        %1461 = vmatprep.mubr.bf16.mxu0 0
        %1462 = vmatmul.mubr.bf16.gmra.mrb[0].mxu0 %v834
        %v1463 = vpop.f32.mrb[0].mxu0
        %v1464 = vadd.f32 %v472, %v1463
        %v1465 = vpop.f32.mrb[0].mxu0
        %v1466 = vadd.f32 %v476, %v1465
        %v1467 = vpop.f32.mrb[0].mxu0
        %v1468 = vadd.f32 %v472, %v1467
        %v1469 = vpop.f32.mrb[0].mxu0
        %v1470 = vadd.f32 %v476, %v1469
        %1471 = vmatprep.mubr.bf16.mxu0 0
        %1472 = vmatmul.mubr.bf16.gmra.mrb[0].mxu0 %v837
        %v1473 = vpop.f32.mrb[0].mxu0
        %v1474 = vadd.f32 %v472, %v1473
        %v1475 = vpop.f32.mrb[0].mxu0
        %v1476 = vadd.f32 %v476, %v1475
        %v1477 = vpop.f32.mrb[0].mxu0
        %v1478 = vadd.f32 %v472, %v1477
        %v1479 = vpop.f32.mrb[0].mxu0
        %v1480 = vadd.f32 %v476, %v1479
        %1481 = vmatprep.mubr.bf16.mxu0 0
        %1482 = vmatmul.mubr.bf16.gmra.mrb[0].mxu0 %v840
        %v1483 = vpop.f32.mrb[0].mxu0
        %v1484 = vadd.f32 %v472, %v1483
        %v1485 = vpop.f32.mrb[0].mxu0
        %v1486 = vadd.f32 %v476, %v1485
        %v1487 = vpop.f32.mrb[0].mxu0
        %v1488 = vadd.f32 %v472, %v1487
        %v1489 = vpop.f32.mrb[0].mxu0
        %v1490 = vadd.f32 %v476, %v1489
        %1491 = vmatprep.mubr.bf16.mxu0 0
        %1492 = vmatmul.mubr.bf16.gmra.mrb[0].mxu0 %v843
        %v1493 = vpop.f32.mrb[0].mxu0
        %v1494 = vadd.f32 %v472, %v1493
        %v1495 = vpop.f32.mrb[0].mxu0
        %v1496 = vadd.f32 %v476, %v1495
        %v1497 = vpop.f32.mrb[0].mxu0
        %v1498 = vadd.f32 %v472, %v1497
        %v1499 = vpop.f32.mrb[0].mxu0
        %v1500 = vadd.f32 %v476, %v1499
        %1501 = vmatprep.mubr.bf16.mxu0 0
        %1502 = vmatmul.mubr.bf16.gmra.mrb[0].mxu0 %v846
        %v1503 = vpop.f32.mrb[0].mxu0
        %v1504 = vadd.f32 %v472, %v1503
        %v1505 = vpop.f32.mrb[0].mxu0
        %v1506 = vadd.f32 %v476, %v1505
        %v1507 = vpop.f32.mrb[0].mxu0
        %v1508 = vadd.f32 %v472, %v1507
        %v1509 = vpop.f32.mrb[0].mxu0
        %v1510 = vadd.f32 %v476, %v1509
        %1511 = vmatprep.mubr.bf16.mxu0 0
        %1512 = vmatmul.mubr.bf16.gmra.mrb[0].mxu0 %v849
        %v1513 = vpop.f32.mrb[0].mxu0
        %v1514 = vadd.f32 %v472, %v1513
        %v1515 = vpop.f32.mrb[0].mxu0
        %v1516 = vadd.f32 %v476, %v1515
        %v1517 = vpop.f32.mrb[0].mxu0
        %v1518 = vadd.f32 %v472, %v1517
        %v1519 = vpop.f32.mrb[0].mxu0
        %v1520 = vadd.f32 %v476, %v1519
        %1521 = vmatprep.mubr.bf16.mxu0 0
        %1522 = vmatmul.mubr.bf16.gmra.mrb[0].mxu0 %v852
        %v1523 = vpop.f32.mrb[0].mxu0
        %v1524 = vadd.f32 %v472, %v1523
        %v1525 = vpop.f32.mrb[0].mxu0
        %v1526 = vadd.f32 %v476, %v1525
        %v1527 = vpop.f32.mrb[0].mxu0
        %v1528 = vadd.f32 %v472, %v1527
        %v1529 = vpop.f32.mrb[0].mxu0
        %v1530 = vadd.f32 %v476, %v1529
        %1531 = vdwg.mxu0
        %1532 = vmatprep.subr.bf16.mxu0 %v714
        %1533 = vmatpush1.bf16.msra.mxu0 %v713
        %1534 = vmatprep.subr.bf16.mxu0 %v730
        %1535 = vmatpush1.bf16.msra.mxu0 %v729
        %1536 = vmatprep.subr.bf16.mxu0 %v746
        %1537 = vmatpush1.bf16.msra.mxu0 %v745
        %1538 = vmatprep.subr.bf16.mxu0 %v762
        %1539 = vmatpush1.bf16.msra.mxu0 %v761
        %1540 = vmatprep.subr.bf16.mxu0 0
        %1541 = vmatpush1.bf16.msra.mxu0 0
        %1542 = vmatprep.subr.bf16.mxu0 0
        %1543 = vmatpush1.bf16.msra.mxu0 0
        %1544 = vmatprep.subr.bf16.mxu0 0
        %1545 = vmatpush1.bf16.msra.mxu0 0
        %1546 = vmatprep.subr.bf16.mxu0 0
        %1547 = vmatpush1.bf16.msra.mxu0 0
        %1548 = vmatprep.subr.bf16.mxu0 0
        %1549 = vmatpush1.bf16.msra.mxu0 0
        %1550 = vmatprep.subr.bf16.mxu0 0
        %1551 = vmatpush1.bf16.msra.mxu0 0
        %1552 = vmatprep.subr.bf16.mxu0 0
        %1553 = vmatpush1.bf16.msra.mxu0 0
        %1554 = vmatprep.subr.bf16.mxu0 0
        %1555 = vmatpush1.bf16.msra.mxu0 0
        %1556 = vmatprep.subr.bf16.mxu0 0
        %1557 = vmatpush1.bf16.msra.mxu0 0
        %1558 = vmatprep.subr.bf16.mxu0 0
        %1559 = vmatpush1.bf16.msra.mxu0 0
        %1560 = vmatprep.subr.bf16.mxu0 0
        %1561 = vmatpush1.bf16.msra.mxu0 0
        %1562 = vmatprep.subr.bf16.mxu0 0
        %1563 = vmatpush1.bf16.msra.mxu0 0
        %1564 = vmatprep.mubr.bf16.mxu0 0
        %1565 = vmatmul.mubr.bf16.gmra.mrb[0].mxu0 %v831
        %v1566 = vpop.f32.mrb[0].mxu0
        %v1567 = vadd.f32 %v480, %v1566
        %v1568 = vpop.f32.mrb[0].mxu0
        %v1569 = vadd.f32 %v484, %v1568
        %v1570 = vpop.f32.mrb[0].mxu0
        %v1571 = vadd.f32 %v480, %v1570
        %v1572 = vpop.f32.mrb[0].mxu0
        %v1573 = vadd.f32 %v484, %v1572
        %1574 = vmatprep.mubr.bf16.mxu0 0
        %1575 = vmatmul.mubr.bf16.gmra.mrb[0].mxu0 %v834
        %v1576 = vpop.f32.mrb[0].mxu0
        %v1577 = vadd.f32 %v480, %v1576
        %v1578 = vpop.f32.mrb[0].mxu0
        %v1579 = vadd.f32 %v484, %v1578
        %v1580 = vpop.f32.mrb[0].mxu0
        %v1581 = vadd.f32 %v480, %v1580
        %v1582 = vpop.f32.mrb[0].mxu0
        %v1583 = vadd.f32 %v484, %v1582
        %1584 = vmatprep.mubr.bf16.mxu0 0
        %1585 = vmatmul.mubr.bf16.gmra.mrb[0].mxu0 %v837
        %v1586 = vpop.f32.mrb[0].mxu0
        %v1587 = vadd.f32 %v480, %v1586
        %v1588 = vpop.f32.mrb[0].mxu0
        %v1589 = vadd.f32 %v484, %v1588
        %v1590 = vpop.f32.mrb[0].mxu0
        %v1591 = vadd.f32 %v480, %v1590
        %v1592 = vpop.f32.mrb[0].mxu0
        %v1593 = vadd.f32 %v484, %v1592
        %1594 = vmatprep.mubr.bf16.mxu0 0
        %1595 = vmatmul.mubr.bf16.gmra.mrb[0].mxu0 %v840
        %v1596 = vpop.f32.mrb[0].mxu0
        %v1597 = vadd.f32 %v480, %v1596
        %v1598 = vpop.f32.mrb[0].mxu0
        %v1599 = vadd.f32 %v484, %v1598
        %v1600 = vpop.f32.mrb[0].mxu0
        %v1601 = vadd.f32 %v480, %v1600
        %v1602 = vpop.f32.mrb[0].mxu0
        %v1603 = vadd.f32 %v484, %v1602
        %1604 = vmatprep.mubr.bf16.mxu0 0
        %1605 = vmatmul.mubr.bf16.gmra.mrb[0].mxu0 %v843
        %v1606 = vpop.f32.mrb[0].mxu0
        %v1607 = vadd.f32 %v480, %v1606
        %v1608 = vpop.f32.mrb[0].mxu0
        %v1609 = vadd.f32 %v484, %v1608
        %v1610 = vpop.f32.mrb[0].mxu0
        %v1611 = vadd.f32 %v480, %v1610
        %v1612 = vpop.f32.mrb[0].mxu0
        %v1613 = vadd.f32 %v484, %v1612
        %1614 = vmatprep.mubr.bf16.mxu0 0
        %1615 = vmatmul.mubr.bf16.gmra.mrb[0].mxu0 %v846
        %v1616 = vpop.f32.mrb[0].mxu0
        %v1617 = vadd.f32 %v480, %v1616
        %v1618 = vpop.f32.mrb[0].mxu0
        %v1619 = vadd.f32 %v484, %v1618
        %v1620 = vpop.f32.mrb[0].mxu0
        %v1621 = vadd.f32 %v480, %v1620
        %v1622 = vpop.f32.mrb[0].mxu0
        %v1623 = vadd.f32 %v484, %v1622
        %1624 = vmatprep.mubr.bf16.mxu0 0
        %1625 = vmatmul.mubr.bf16.gmra.mrb[0].mxu0 %v849
        %v1626 = vpop.f32.mrb[0].mxu0
        %v1627 = vadd.f32 %v480, %v1626
        %v1628 = vpop.f32.mrb[0].mxu0
        %v1629 = vadd.f32 %v484, %v1628
        %v1630 = vpop.f32.mrb[0].mxu0
        %v1631 = vadd.f32 %v480, %v1630
        %v1632 = vpop.f32.mrb[0].mxu0
        %v1633 = vadd.f32 %v484, %v1632
        %1634 = vmatprep.mubr.bf16.mxu0 0
        %1635 = vmatmul.mubr.bf16.gmra.mrb[0].mxu0 %v852
        %v1636 = vpop.f32.mrb[0].mxu0
        %v1637 = vadd.f32 %v480, %v1636
        %v1638 = vpop.f32.mrb[0].mxu0
        %v1639 = vadd.f32 %v484, %v1638
        %v1640 = vpop.f32.mrb[0].mxu0
        %v1641 = vadd.f32 %v480, %v1640
        %v1642 = vpop.f32.mrb[0].mxu0
        %v1643 = vadd.f32 %v484, %v1642
        %1644 = vdwg.mxu0
        %1645 = vmatprep.subr.bf16.mxu0 %v716
        %1646 = vmatpush1.bf16.msra.mxu0 %v715
        %1647 = vmatprep.subr.bf16.mxu0 %v732
        %1648 = vmatpush1.bf16.msra.mxu0 %v731
        %1649 = vmatprep.subr.bf16.mxu0 %v748
        %1650 = vmatpush1.bf16.msra.mxu0 %v747
        %1651 = vmatprep.subr.bf16.mxu0 %v764
        %1652 = vmatpush1.bf16.msra.mxu0 %v763
        %1653 = vmatprep.subr.bf16.mxu0 0
        %1654 = vmatpush1.bf16.msra.mxu0 0
        %1655 = vmatprep.subr.bf16.mxu0 0
        %1656 = vmatpush1.bf16.msra.mxu0 0
        %1657 = vmatprep.subr.bf16.mxu0 0
        %1658 = vmatpush1.bf16.msra.mxu0 0
        %1659 = vmatprep.subr.bf16.mxu0 0
        %1660 = vmatpush1.bf16.msra.mxu0 0
        %1661 = vmatprep.subr.bf16.mxu0 0
        %1662 = vmatpush1.bf16.msra.mxu0 0
        %1663 = vmatprep.subr.bf16.mxu0 0
        %1664 = vmatpush1.bf16.msra.mxu0 0
        %1665 = vmatprep.subr.bf16.mxu0 0
        %1666 = vmatpush1.bf16.msra.mxu0 0
        %1667 = vmatprep.subr.bf16.mxu0 0
        %1668 = vmatpush1.bf16.msra.mxu0 0
        %1669 = vmatprep.subr.bf16.mxu0 0
        %1670 = vmatpush1.bf16.msra.mxu0 0
        %1671 = vmatprep.subr.bf16.mxu0 0
        %1672 = vmatpush1.bf16.msra.mxu0 0
        %1673 = vmatprep.subr.bf16.mxu0 0
        %1674 = vmatpush1.bf16.msra.mxu0 0
        %1675 = vmatprep.subr.bf16.mxu0 0
        %1676 = vmatpush1.bf16.msra.mxu0 0
        %1677 = vmatprep.mubr.bf16.mxu0 0
        %1678 = vmatmul.mubr.bf16.gmra.mrb[0].mxu0 %v831
        %v1679 = vpop.f32.mrb[0].mxu0
        %v1680 = vadd.f32 %v488, %v1679
        %v1681 = vpop.f32.mrb[0].mxu0
        %v1682 = vadd.f32 %v492, %v1681
        %v1683 = vpop.f32.mrb[0].mxu0
        %v1684 = vadd.f32 %v488, %v1683
        %v1685 = vpop.f32.mrb[0].mxu0
        %v1686 = vadd.f32 %v492, %v1685
        %1687 = vmatprep.mubr.bf16.mxu0 0
        %1688 = vmatmul.mubr.bf16.gmra.mrb[0].mxu0 %v834
        %v1689 = vpop.f32.mrb[0].mxu0
        %v1690 = vadd.f32 %v488, %v1689
        %v1691 = vpop.f32.mrb[0].mxu0
        %v1692 = vadd.f32 %v492, %v1691
        %v1693 = vpop.f32.mrb[0].mxu0
        %v1694 = vadd.f32 %v488, %v1693
        %v1695 = vpop.f32.mrb[0].mxu0
        %v1696 = vadd.f32 %v492, %v1695
        %1697 = vmatprep.mubr.bf16.mxu0 0
        %1698 = vmatmul.mubr.bf16.gmra.mrb[0].mxu0 %v837
        %v1699 = vpop.f32.mrb[0].mxu0
        %v1700 = vadd.f32 %v488, %v1699
        %v1701 = vpop.f32.mrb[0].mxu0
        %v1702 = vadd.f32 %v492, %v1701
        %v1703 = vpop.f32.mrb[0].mxu0
        %v1704 = vadd.f32 %v488, %v1703
        %v1705 = vpop.f32.mrb[0].mxu0
        %v1706 = vadd.f32 %v492, %v1705
        %1707 = vmatprep.mubr.bf16.mxu0 0
        %1708 = vmatmul.mubr.bf16.gmra.mrb[0].mxu0 %v840
        %v1709 = vpop.f32.mrb[0].mxu0
        %v1710 = vadd.f32 %v488, %v1709
        %v1711 = vpop.f32.mrb[0].mxu0
        %v1712 = vadd.f32 %v492, %v1711
        %v1713 = vpop.f32.mrb[0].mxu0
        %v1714 = vadd.f32 %v488, %v1713
        %v1715 = vpop.f32.mrb[0].mxu0
        %v1716 = vadd.f32 %v492, %v1715
        %1717 = vmatprep.mubr.bf16.mxu0 0
        %1718 = vmatmul.mubr.bf16.gmra.mrb[0].mxu0 %v843
        %v1719 = vpop.f32.mrb[0].mxu0
        %v1720 = vadd.f32 %v488, %v1719
        %v1721 = vpop.f32.mrb[0].mxu0
        %v1722 = vadd.f32 %v492, %v1721
        %v1723 = vpop.f32.mrb[0].mxu0
        %v1724 = vadd.f32 %v488, %v1723
        %v1725 = vpop.f32.mrb[0].mxu0
        %v1726 = vadd.f32 %v492, %v1725
        %1727 = vmatprep.mubr.bf16.mxu0 0
        %1728 = vmatmul.mubr.bf16.gmra.mrb[0].mxu0 %v846
        %v1729 = vpop.f32.mrb[0].mxu0
        %v1730 = vadd.f32 %v488, %v1729
        %v1731 = vpop.f32.mrb[0].mxu0
        %v1732 = vadd.f32 %v492, %v1731
        %v1733 = vpop.f32.mrb[0].mxu0
        %v1734 = vadd.f32 %v488, %v1733
        %v1735 = vpop.f32.mrb[0].mxu0
        %v1736 = vadd.f32 %v492, %v1735
        %1737 = vmatprep.mubr.bf16.mxu0 0
        %1738 = vmatmul.mubr.bf16.gmra.mrb[0].mxu0 %v849
        %v1739 = vpop.f32.mrb[0].mxu0
        %v1740 = vadd.f32 %v488, %v1739
        %v1741 = vpop.f32.mrb[0].mxu0
        %v1742 = vadd.f32 %v492, %v1741
        %v1743 = vpop.f32.mrb[0].mxu0
        %v1744 = vadd.f32 %v488, %v1743
        %v1745 = vpop.f32.mrb[0].mxu0
        %v1746 = vadd.f32 %v492, %v1745
        %1747 = vmatprep.mubr.bf16.mxu0 0
        %1748 = vmatmul.mubr.bf16.gmra.mrb[0].mxu0 %v852
        %v1749 = vpop.f32.mrb[0].mxu0
        %v1750 = vadd.f32 %v488, %v1749
        %v1751 = vpop.f32.mrb[0].mxu0
        %v1752 = vadd.f32 %v492, %v1751
        %v1753 = vpop.f32.mrb[0].mxu0
        %v1754 = vadd.f32 %v488, %v1753
        %v1755 = vpop.f32.mrb[0].mxu0
        %v1756 = vadd.f32 %v492, %v1755
        %1757 = vdwg.mxu0
        %1758 = vst [vmem:[%s328] sm:$0xff] %v889
        %1759 = vst [vmem:[%s328 + $0x8] sm:$0xff] %v891
        %1760 = vst [vmem:[%s328 + $0x10] sm:$0xff] %v1002
        %1761 = vst [vmem:[%s328 + $0x18] sm:$0xff] %v1004
        %1762 = vst [vmem:[%s328 + $0x20] sm:$0xff] %v1115
        %1763 = vst [vmem:[%s328 + $0x28] sm:$0xff] %v1117
        %1764 = vst [vmem:[%s328 + $0x30] sm:$0xff] %v1228
        %1765 = vst [vmem:[%s328 + $0x38] sm:$0xff] %v1230
        %1766 = vst [vmem:[%s328 + $0x40] sm:$0xff] %v1341
        %1767 = vst [vmem:[%s328 + $0x48] sm:$0xff] %v1343
        %1768 = vst [vmem:[%s328 + $0x50] sm:$0xff] %v1454
        %1769 = vst [vmem:[%s328 + $0x58] sm:$0xff] %v1456
        %1770 = vst [vmem:[%s328 + $0x60] sm:$0xff] %v1567
        %1771 = vst [vmem:[%s328 + $0x68] sm:$0xff] %v1569
        %1772 = vst [vmem:[%s328 + $0x70] sm:$0xff] %v1680
        %1773 = vst [vmem:[%s328 + $0x78] sm:$0xff] %v1682
        %1774 = vst [vmem:[%s328 + $0x80] sm:$0xff] %v893
        %1775 = vst [vmem:[%s328 + $0x88] sm:$0xff] %v895
        %1776 = vst [vmem:[%s328 + $0x90] sm:$0xff] %v1006
        %1777 = vst [vmem:[%s328 + $0x98] sm:$0xff] %v1008
        %1778 = vst [vmem:[%s328 + $0xa0] sm:$0xff] %v1119
        %1779 = vst [vmem:[%s328 + $0xa8] sm:$0xff] %v1121
        %1780 = vst [vmem:[%s328 + $0xb0] sm:$0xff] %v1232
        %1781 = vst [vmem:[%s328 + $0xb8] sm:$0xff] %v1234
        %1782 = vst [vmem:[%s328 + $0xc0] sm:$0xff] %v1345
        %1783 = vst [vmem:[%s328 + $0xc8] sm:$0xff] %v1347
        %1784 = vst [vmem:[%s328 + $0xd0] sm:$0xff] %v1458
        %1785 = vst [vmem:[%s328 + $0xd8] sm:$0xff] %v1460
        %1786 = vst [vmem:[%s328 + $0xe0] sm:$0xff] %v1571
        %1787 = vst [vmem:[%s328 + $0xe8] sm:$0xff] %v1573
        %1788 = vst [vmem:[%s328 + $0xf0] sm:$0xff] %v1684
        %1789 = vst [vmem:[%s328 + $0xf8] sm:$0xff] %v1686
        %1790 = vst [vmem:[%s328 + $0x100] sm:$0xff] %v899
        %1791 = vst [vmem:[%s328 + $0x108] sm:$0xff] %v901
        %1792 = vst [vmem:[%s328 + $0x110] sm:$0xff] %v1012
        %1793 = vst [vmem:[%s328 + $0x118] sm:$0xff] %v1014
        %1794 = vst [vmem:[%s328 + $0x120] sm:$0xff] %v1125
        %1795 = vst [vmem:[%s328 + $0x128] sm:$0xff] %v1127
        %1796 = vst [vmem:[%s328 + $0x130] sm:$0xff] %v1238
        %1797 = vst [vmem:[%s328 + $0x138] sm:$0xff] %v1240
        %1798 = vst [vmem:[%s328 + $0x140] sm:$0xff] %v1351
        %1799 = vst [vmem:[%s328 + $0x148] sm:$0xff] %v1353
        %1800 = vst [vmem:[%s328 + $0x150] sm:$0xff] %v1464
        %1801 = vst [vmem:[%s328 + $0x158] sm:$0xff] %v1466
        %1802 = vst [vmem:[%s328 + $0x160] sm:$0xff] %v1577
        %1803 = vst [vmem:[%s328 + $0x168] sm:$0xff] %v1579
        %1804 = vst [vmem:[%s328 + $0x170] sm:$0xff] %v1690
        %1805 = vst [vmem:[%s328 + $0x178] sm:$0xff] %v1692
        %1806 = vst [vmem:[%s328 + $0x180] sm:$0xff] %v903
        %1807 = vst [vmem:[%s328 + $0x188] sm:$0xff] %v905
        %1808 = vst [vmem:[%s328 + $0x190] sm:$0xff] %v1016
        %1809 = vst [vmem:[%s328 + $0x198] sm:$0xff] %v1018
        %1810 = vst [vmem:[%s328 + $0x1a0] sm:$0xff] %v1129
        %1811 = vst [vmem:[%s328 + $0x1a8] sm:$0xff] %v1131
        %1812 = vst [vmem:[%s328 + $0x1b0] sm:$0xff] %v1242
        %1813 = vst [vmem:[%s328 + $0x1b8] sm:$0xff] %v1244
        %1814 = vst [vmem:[%s328 + $0x1c0] sm:$0xff] %v1355
        %1815 = vst [vmem:[%s328 + $0x1c8] sm:$0xff] %v1357
        %1816 = vst [vmem:[%s328 + $0x1d0] sm:$0xff] %v1468
        %1817 = vst [vmem:[%s328 + $0x1d8] sm:$0xff] %v1470
        %1818 = vst [vmem:[%s328 + $0x1e0] sm:$0xff] %v1581
        %1819 = vst [vmem:[%s328 + $0x1e8] sm:$0xff] %v1583
        %1820 = vst [vmem:[%s328 + $0x1f0] sm:$0xff] %v1694
        %1821 = vst [vmem:[%s328 + $0x1f8] sm:$0xff] %v1696
        %1822 = vst [vmem:[%s328 + $0x200] sm:$0xff] %v909
        %1823 = vst [vmem:[%s328 + $0x208] sm:$0xff] %v911
        %1824 = vst [vmem:[%s328 + $0x210] sm:$0xff] %v1022
        %1825 = vst [vmem:[%s328 + $0x218] sm:$0xff] %v1024
        %1826 = vst [vmem:[%s328 + $0x220] sm:$0xff] %v1135
        %1827 = vst [vmem:[%s328 + $0x228] sm:$0xff] %v1137
        %1828 = vst [vmem:[%s328 + $0x230] sm:$0xff] %v1248
        %1829 = vst [vmem:[%s328 + $0x238] sm:$0xff] %v1250
        %1830 = vst [vmem:[%s328 + $0x240] sm:$0xff] %v1361
        %1831 = vst [vmem:[%s328 + $0x248] sm:$0xff] %v1363
        %1832 = vst [vmem:[%s328 + $0x250] sm:$0xff] %v1474
        %1833 = vst [vmem:[%s328 + $0x258] sm:$0xff] %v1476
        %1834 = vst [vmem:[%s328 + $0x260] sm:$0xff] %v1587
        %1835 = vst [vmem:[%s328 + $0x268] sm:$0xff] %v1589
        %1836 = vst [vmem:[%s328 + $0x270] sm:$0xff] %v1700
        %1837 = vst [vmem:[%s328 + $0x278] sm:$0xff] %v1702
        %1838 = vst [vmem:[%s328 + $0x280] sm:$0xff] %v913
        %1839 = vst [vmem:[%s328 + $0x288] sm:$0xff] %v915
        %1840 = vst [vmem:[%s328 + $0x290] sm:$0xff] %v1026
        %1841 = vst [vmem:[%s328 + $0x298] sm:$0xff] %v1028
        %1842 = vst [vmem:[%s328 + $0x2a0] sm:$0xff] %v1139
        %1843 = vst [vmem:[%s328 + $0x2a8] sm:$0xff] %v1141
        %1844 = vst [vmem:[%s328 + $0x2b0] sm:$0xff] %v1252
        %1845 = vst [vmem:[%s328 + $0x2b8] sm:$0xff] %v1254
        %1846 = vst [vmem:[%s328 + $0x2c0] sm:$0xff] %v1365
        %1847 = vst [vmem:[%s328 + $0x2c8] sm:$0xff] %v1367
        %1848 = vst [vmem:[%s328 + $0x2d0] sm:$0xff] %v1478
        %1849 = vst [vmem:[%s328 + $0x2d8] sm:$0xff] %v1480
        %1850 = vst [vmem:[%s328 + $0x2e0] sm:$0xff] %v1591
        %1851 = vst [vmem:[%s328 + $0x2e8] sm:$0xff] %v1593
        %1852 = vst [vmem:[%s328 + $0x2f0] sm:$0xff] %v1704
        %1853 = vst [vmem:[%s328 + $0x2f8] sm:$0xff] %v1706
        %1854 = vst [vmem:[%s328 + $0x300] sm:$0xff] %v919
        %1855 = vst [vmem:[%s328 + $0x308] sm:$0xff] %v921
        %1856 = vst [vmem:[%s328 + $0x310] sm:$0xff] %v1032
        %1857 = vst [vmem:[%s328 + $0x318] sm:$0xff] %v1034
        %1858 = vst [vmem:[%s328 + $0x320] sm:$0xff] %v1145
        %1859 = vst [vmem:[%s328 + $0x328] sm:$0xff] %v1147
        %1860 = vst [vmem:[%s328 + $0x330] sm:$0xff] %v1258
        %1861 = vst [vmem:[%s328 + $0x338] sm:$0xff] %v1260
        %1862 = vst [vmem:[%s328 + $0x340] sm:$0xff] %v1371
        %1863 = vst [vmem:[%s328 + $0x348] sm:$0xff] %v1373
        %1864 = vst [vmem:[%s328 + $0x350] sm:$0xff] %v1484
        %1865 = vst [vmem:[%s328 + $0x358] sm:$0xff] %v1486
        %1866 = vst [vmem:[%s328 + $0x360] sm:$0xff] %v1597
        %1867 = vst [vmem:[%s328 + $0x368] sm:$0xff] %v1599
        %1868 = vst [vmem:[%s328 + $0x370] sm:$0xff] %v1710
        %1869 = vst [vmem:[%s328 + $0x378] sm:$0xff] %v1712
        %1870 = vst [vmem:[%s328 + $0x380] sm:$0xff] %v923
        %1871 = vst [vmem:[%s328 + $0x388] sm:$0xff] %v925
        %1872 = vst [vmem:[%s328 + $0x390] sm:$0xff] %v1036
        %1873 = vst [vmem:[%s328 + $0x398] sm:$0xff] %v1038
        %1874 = vst [vmem:[%s328 + $0x3a0] sm:$0xff] %v1149
        %1875 = vst [vmem:[%s328 + $0x3a8] sm:$0xff] %v1151
        %1876 = vst [vmem:[%s328 + $0x3b0] sm:$0xff] %v1262
        %1877 = vst [vmem:[%s328 + $0x3b8] sm:$0xff] %v1264
        %1878 = vst [vmem:[%s328 + $0x3c0] sm:$0xff] %v1375
        %1879 = vst [vmem:[%s328 + $0x3c8] sm:$0xff] %v1377
        %1880 = vst [vmem:[%s328 + $0x3d0] sm:$0xff] %v1488
        %1881 = vst [vmem:[%s328 + $0x3d8] sm:$0xff] %v1490
        %1882 = vst [vmem:[%s328 + $0x3e0] sm:$0xff] %v1601
        %1883 = vst [vmem:[%s328 + $0x3e8] sm:$0xff] %v1603
        %1884 = vst [vmem:[%s328 + $0x3f0] sm:$0xff] %v1714
        %1885 = vst [vmem:[%s328 + $0x3f8] sm:$0xff] %v1716
        %1886 = vst [vmem:[%s328 + $0x400] sm:$0xff] %v929
        %1887 = vst [vmem:[%s328 + $0x408] sm:$0xff] %v931
        %1888 = vst [vmem:[%s328 + $0x410] sm:$0xff] %v1042
        %1889 = vst [vmem:[%s328 + $0x418] sm:$0xff] %v1044
        %1890 = vst [vmem:[%s328 + $0x420] sm:$0xff] %v1155
        %1891 = vst [vmem:[%s328 + $0x428] sm:$0xff] %v1157
        %1892 = vst [vmem:[%s328 + $0x430] sm:$0xff] %v1268
        %1893 = vst [vmem:[%s328 + $0x438] sm:$0xff] %v1270
        %1894 = vst [vmem:[%s328 + $0x440] sm:$0xff] %v1381
        %1895 = vst [vmem:[%s328 + $0x448] sm:$0xff] %v1383
        %1896 = vst [vmem:[%s328 + $0x450] sm:$0xff] %v1494
        %1897 = vst [vmem:[%s328 + $0x458] sm:$0xff] %v1496
        %1898 = vst [vmem:[%s328 + $0x460] sm:$0xff] %v1607
        %1899 = vst [vmem:[%s328 + $0x468] sm:$0xff] %v1609
        %1900 = vst [vmem:[%s328 + $0x470] sm:$0xff] %v1720
        %1901 = vst [vmem:[%s328 + $0x478] sm:$0xff] %v1722
        %1902 = vst [vmem:[%s328 + $0x480] sm:$0xff] %v933
        %1903 = vst [vmem:[%s328 + $0x488] sm:$0xff] %v935
        %1904 = vst [vmem:[%s328 + $0x490] sm:$0xff] %v1046
        %1905 = vst [vmem:[%s328 + $0x498] sm:$0xff] %v1048
        %1906 = vst [vmem:[%s328 + $0x4a0] sm:$0xff] %v1159
        %1907 = vst [vmem:[%s328 + $0x4a8] sm:$0xff] %v1161
        %1908 = vst [vmem:[%s328 + $0x4b0] sm:$0xff] %v1272
        %1909 = vst [vmem:[%s328 + $0x4b8] sm:$0xff] %v1274
        %1910 = vst [vmem:[%s328 + $0x4c0] sm:$0xff] %v1385
        %1911 = vst [vmem:[%s328 + $0x4c8] sm:$0xff] %v1387
        %1912 = vst [vmem:[%s328 + $0x4d0] sm:$0xff] %v1498
        %1913 = vst [vmem:[%s328 + $0x4d8] sm:$0xff] %v1500
        %1914 = vst [vmem:[%s328 + $0x4e0] sm:$0xff] %v1611
        %1915 = vst [vmem:[%s328 + $0x4e8] sm:$0xff] %v1613
        %1916 = vst [vmem:[%s328 + $0x4f0] sm:$0xff] %v1724
        %1917 = vst [vmem:[%s328 + $0x4f8] sm:$0xff] %v1726
        %1918 = vst [vmem:[%s328 + $0x500] sm:$0xff] %v939
        %1919 = vst [vmem:[%s328 + $0x508] sm:$0xff] %v941
        %1920 = vst [vmem:[%s328 + $0x510] sm:$0xff] %v1052
        %1921 = vst [vmem:[%s328 + $0x518] sm:$0xff] %v1054
        %1922 = vst [vmem:[%s328 + $0x520] sm:$0xff] %v1165
        %1923 = vst [vmem:[%s328 + $0x528] sm:$0xff] %v1167
        %1924 = vst [vmem:[%s328 + $0x530] sm:$0xff] %v1278
        %1925 = vst [vmem:[%s328 + $0x538] sm:$0xff] %v1280
        %1926 = vst [vmem:[%s328 + $0x540] sm:$0xff] %v1391
        %1927 = vst [vmem:[%s328 + $0x548] sm:$0xff] %v1393
        %1928 = vst [vmem:[%s328 + $0x550] sm:$0xff] %v1504
        %1929 = vst [vmem:[%s328 + $0x558] sm:$0xff] %v1506
        %1930 = vst [vmem:[%s328 + $0x560] sm:$0xff] %v1617
        %1931 = vst [vmem:[%s328 + $0x568] sm:$0xff] %v1619
        %1932 = vst [vmem:[%s328 + $0x570] sm:$0xff] %v1730
        %1933 = vst [vmem:[%s328 + $0x578] sm:$0xff] %v1732
        %1934 = vst [vmem:[%s328 + $0x580] sm:$0xff] %v943
        %1935 = vst [vmem:[%s328 + $0x588] sm:$0xff] %v945
        %1936 = vst [vmem:[%s328 + $0x590] sm:$0xff] %v1056
        %1937 = vst [vmem:[%s328 + $0x598] sm:$0xff] %v1058
        %1938 = vst [vmem:[%s328 + $0x5a0] sm:$0xff] %v1169
        %1939 = vst [vmem:[%s328 + $0x5a8] sm:$0xff] %v1171
        %1940 = vst [vmem:[%s328 + $0x5b0] sm:$0xff] %v1282
        %1941 = vst [vmem:[%s328 + $0x5b8] sm:$0xff] %v1284
        %1942 = vst [vmem:[%s328 + $0x5c0] sm:$0xff] %v1395
        %1943 = vst [vmem:[%s328 + $0x5c8] sm:$0xff] %v1397
        %1944 = vst [vmem:[%s328 + $0x5d0] sm:$0xff] %v1508
        %1945 = vst [vmem:[%s328 + $0x5d8] sm:$0xff] %v1510
        %1946 = vst [vmem:[%s328 + $0x5e0] sm:$0xff] %v1621
        %1947 = vst [vmem:[%s328 + $0x5e8] sm:$0xff] %v1623
        %1948 = vst [vmem:[%s328 + $0x5f0] sm:$0xff] %v1734
        %1949 = vst [vmem:[%s328 + $0x5f8] sm:$0xff] %v1736
        %1950 = vst [vmem:[%s328 + $0x600] sm:$0xff] %v949
        %1951 = vst [vmem:[%s328 + $0x608] sm:$0xff] %v951
        %1952 = vst [vmem:[%s328 + $0x610] sm:$0xff] %v1062
        %1953 = vst [vmem:[%s328 + $0x618] sm:$0xff] %v1064
        %1954 = vst [vmem:[%s328 + $0x620] sm:$0xff] %v1175
        %1955 = vst [vmem:[%s328 + $0x628] sm:$0xff] %v1177
        %1956 = vst [vmem:[%s328 + $0x630] sm:$0xff] %v1288
        %1957 = vst [vmem:[%s328 + $0x638] sm:$0xff] %v1290
        %1958 = vst [vmem:[%s328 + $0x640] sm:$0xff] %v1401
        %1959 = vst [vmem:[%s328 + $0x648] sm:$0xff] %v1403
        %1960 = vst [vmem:[%s328 + $0x650] sm:$0xff] %v1514
        %1961 = vst [vmem:[%s328 + $0x658] sm:$0xff] %v1516
        %1962 = vst [vmem:[%s328 + $0x660] sm:$0xff] %v1627
        %1963 = vst [vmem:[%s328 + $0x668] sm:$0xff] %v1629
        %1964 = vst [vmem:[%s328 + $0x670] sm:$0xff] %v1740
        %1965 = vst [vmem:[%s328 + $0x678] sm:$0xff] %v1742
        %1966 = vst [vmem:[%s328 + $0x680] sm:$0xff] %v953
        %1967 = vst [vmem:[%s328 + $0x688] sm:$0xff] %v955
        %1968 = vst [vmem:[%s328 + $0x690] sm:$0xff] %v1066
        %1969 = vst [vmem:[%s328 + $0x698] sm:$0xff] %v1068
        %1970 = vst [vmem:[%s328 + $0x6a0] sm:$0xff] %v1179
        %1971 = vst [vmem:[%s328 + $0x6a8] sm:$0xff] %v1181
        %1972 = vst [vmem:[%s328 + $0x6b0] sm:$0xff] %v1292
        %1973 = vst [vmem:[%s328 + $0x6b8] sm:$0xff] %v1294
        %1974 = vst [vmem:[%s328 + $0x6c0] sm:$0xff] %v1405
        %1975 = vst [vmem:[%s328 + $0x6c8] sm:$0xff] %v1407
        %1976 = vst [vmem:[%s328 + $0x6d0] sm:$0xff] %v1518
        %1977 = vst [vmem:[%s328 + $0x6d8] sm:$0xff] %v1520
        %1978 = vst [vmem:[%s328 + $0x6e0] sm:$0xff] %v1631
        %1979 = vst [vmem:[%s328 + $0x6e8] sm:$0xff] %v1633
        %1980 = vst [vmem:[%s328 + $0x6f0] sm:$0xff] %v1744
        %1981 = vst [vmem:[%s328 + $0x6f8] sm:$0xff] %v1746
        %1982 = vst [vmem:[%s328 + $0x700] sm:$0xff] %v959
        %1983 = vst [vmem:[%s328 + $0x708] sm:$0xff] %v961
        %1984 = vst [vmem:[%s328 + $0x710] sm:$0xff] %v1072
        %1985 = vst [vmem:[%s328 + $0x718] sm:$0xff] %v1074
        %1986 = vst [vmem:[%s328 + $0x720] sm:$0xff] %v1185
        %1987 = vst [vmem:[%s328 + $0x728] sm:$0xff] %v1187
        %1988 = vst [vmem:[%s328 + $0x730] sm:$0xff] %v1298
        %1989 = vst [vmem:[%s328 + $0x738] sm:$0xff] %v1300
        %1990 = vst [vmem:[%s328 + $0x740] sm:$0xff] %v1411
        %1991 = vst [vmem:[%s328 + $0x748] sm:$0xff] %v1413
        %1992 = vst [vmem:[%s328 + $0x750] sm:$0xff] %v1524
        %1993 = vst [vmem:[%s328 + $0x758] sm:$0xff] %v1526
        %1994 = vst [vmem:[%s328 + $0x760] sm:$0xff] %v1637
        %1995 = vst [vmem:[%s328 + $0x768] sm:$0xff] %v1639
        %1996 = vst [vmem:[%s328 + $0x770] sm:$0xff] %v1750
        %1997 = vst [vmem:[%s328 + $0x778] sm:$0xff] %v1752
        %1998 = vst [vmem:[%s328 + $0x780] sm:$0xff] %v963
        %1999 = vst [vmem:[%s328 + $0x788] sm:$0xff] %v965
        %2000 = vst [vmem:[%s328 + $0x790] sm:$0xff] %v1076
        %2001 = vst [vmem:[%s328 + $0x798] sm:$0xff] %v1078
        %2002 = vst [vmem:[%s328 + $0x7a0] sm:$0xff] %v1189
        %2003 = vst [vmem:[%s328 + $0x7a8] sm:$0xff] %v1191
        %2004 = vst [vmem:[%s328 + $0x7b0] sm:$0xff] %v1302
        %2005 = vst [vmem:[%s328 + $0x7b8] sm:$0xff] %v1304
        %2006 = vst [vmem:[%s328 + $0x7c0] sm:$0xff] %v1415
        %2007 = vst [vmem:[%s328 + $0x7c8] sm:$0xff] %v1417
        %2008 = vst [vmem:[%s328 + $0x7d0] sm:$0xff] %v1528
        %2009 = vst [vmem:[%s328 + $0x7d8] sm:$0xff] %v1530
        %2010 = vst [vmem:[%s328 + $0x7e0] sm:$0xff] %v1641
        %2011 = vst [vmem:[%s328 + $0x7e8] sm:$0xff] %v1643
        %2012 = vst [vmem:[%s328 + $0x7f0] sm:$0xff] %v1754
        %2013 = vst [vmem:[%s328 + $0x7f8] sm:$0xff] %v1756
        %s2014 = sand.u32 %s98, 1
        %s2015 = scalar_lea.sflag [#allocation4], %s2014
        %s2016 = sand.u32 %s98, 1
        %s2017 = smul.addr %s2016, 2048
        %s2018 = scalar_lea.vmem [#allocation3], %s2017
        // Predicated region
        $region56: #{_lambda_.3} parent=50 // pred_check
          %p2019 = pneg %p108
        $region57: #{_lambda_.3} parent=50 // pred_check_branch
          %2021 = sbr.rel (%p2019) target = $region59
        $region58: #{_lambda_.3} parent=50 // pred_region
          %s2022 = smul.u32 16, %s17
          %s2024 = ssub.s32 32768, 32768
          %2025 = vsyncadd %s2015, %s2024
          %s2026 = smul.addr %s2022, 128
          %s2027 = scalar_lea.hbm %s3, %s2026
          %s2028 = sshll.u32 %s2018, 4
          %s2029 = int_to_ptr.vmem [resolvable:$true] %s2028
          %2034 = dma.vmem_to_hbm [thread:$0]  %s2029, 32768, %s2027, %s2015, 2048, 8192, 128
        $region59: #{_lambda_.3} parent=50 // pred_fallthru
          _
      $region51: #{_lambda_.3} parent=5 // pred_fallthru
        _
      %p2035 = scmp.le.s32.totalorder 2, %s12
      // Predicated region
      $region60: #{_lambda_.3} parent=5 // pred_check
        %p2036 = pneg %p2035
      $region61: #{_lambda_.3} parent=5 // pred_check_branch
        %2038 = sbr.rel (%p2036) target = $region63
      $region62: #{_lambda_.3} parent=5 // pred_region
        %s2039 = ssub.s32 %s12, 2
        // Predicated region
        $region64: #{_lambda_.3} parent=62 // pred_check
          %p2040 = pneg %p114
        $region65: #{_lambda_.3} parent=62 // pred_check_branch
          %2042 = sbr.rel (%p2040) target = $region67
        $region66: #{_lambda_.3} parent=62 // pred_region
          %s2043 = sand.u32 %s99, 1
          %s2044 = scalar_lea.sflag [#allocation4], %s2043
          %s2045 = sand.u32 %s99, 1
          %s2046 = smul.addr %s2045, 2048
          %s2047 = scalar_lea.vmem [#allocation3], %s2046
          %2048 = dma.done %s2044, 32768
        $region67: #{_lambda_.3} parent=62 // pred_fallthru
          _
      $region63: #{_lambda_.3} parent=5 // pred_fallthru
        _
    $region6: #{_lambda_.3} parent=1 // loop_footer
      %s16 = sadd.s32 1, %s12
    $region7: #{_lambda_.3} parent=1 // loop_footer_branch
      %11 = sbr.rel target = $region3
    $region8: #{_lambda_.3} parent=1 // loop_exit
      _
    %2049 = vsyncpa [#allocation4], 1
    %s2050 = scalar_lea.sflag [#allocation4], 1
    %2051 = vsyncpa %s2050, 1

</llo_original>
